<compile_context>
chip_gen: v6e
topology: v6e:2x2x1
jax: 0.10.0
libtpu: 0.0.40
codegen_flags: <defaults>
</compile_context>

<pallas_src>
import jax
import jax.numpy as jnp
from jax.experimental import pallas as pl
from jax.experimental.pallas import tpu as pltpu

TILE_B = 128  # batch rows per grid step


def _discriminator_kernel(z_ref,
                          w1_ref, b1_ref,
                          w2_ref, b2_ref,
                          w3_ref, b3_ref,
                          w4_ref, b4_ref,
                          w5_ref, b5_ref,
                          out_ref):
    """One batch tile of the whole MLP: 5 MXU matmuls (bf16 in, f32 acc) + f32 VPU/EUP."""
    # Cast activations to bf16 only at the dot inputs; keep elementwise math in f32.
    h = z_ref[...].astype(jnp.bfloat16)
    for w_ref, b_ref in ((w1_ref, b1_ref), (w2_ref, b2_ref),
                         (w3_ref, b3_ref), (w4_ref, b4_ref)):
        y = jnp.dot(h, w_ref[...], preferred_element_type=jnp.float32) + b_ref[...]
        h = jnp.maximum(y, 0.0).astype(jnp.bfloat16)

    logits = jnp.dot(h, w5_ref[...], preferred_element_type=jnp.float32) + b5_ref[...]
    # Sigmoid in f32 (numerically safe: exp(-x) overflow -> 0 -> sigmoid -> 1 is exact).
    out_ref[...] = 1.0 / (1.0 + jnp.exp(-logits))


def discriminator_forward(z, params, *, tile_b=TILE_B):
    """params: list of (W, b) with W shaped (in_features, out_features), f32.

    Weights are cast to bf16 for the kernel (halves HBM/VMEM weight traffic);
    accumulation and all elementwise math stay f32.
    """
    z = z.astype(jnp.float32)
    B, z_dim = z.shape
    num_tiles = pl.cdiv(B, tile_b)
    B_pad = num_tiles * tile_b
    if B_pad != B:
        z = jnp.pad(z, ((0, B_pad - B), (0, 0)))

    flat_args = [z]
    in_specs = [pl.BlockSpec((tile_b, z_dim), lambda i: (i, 0))]
    for w, b in params:
        w_bf16 = w.astype(jnp.bfloat16)
        b_2d = b.reshape(1, -1).astype(jnp.float32)  # (1, out) broadcasts over batch
        flat_args.append(w_bf16)
        flat_args.append(b_2d)
        # Constant block index -> weights/biases stay resident in VMEM across the grid.
        in_specs.append(pl.BlockSpec(w_bf16.shape, lambda i: (0, 0)))
        in_specs.append(pl.BlockSpec(b_2d.shape, lambda i: (0, 0)))

    out = pl.pallas_call(
        _discriminator_kernel,
        out_shape=jax.ShapeDtypeStruct((B_pad, 1), jnp.float32),
        grid=(num_tiles,),
        in_specs=in_specs,
        out_specs=pl.BlockSpec((tile_b, 1), lambda i: (i, 0)),
        compiler_params=pltpu.CompilerParams(
            dimension_semantics=("parallel",),   # v7x: shard batch over both TCs
            vmem_limit_bytes=32 << 20,
        ),
    )(*flat_args)
    return out[:B]


def init_discriminator_params(key, z_dim=32, s=1):
    """Kaiming-normal init matching PyTorch kaiming_normal_ (fan_in, gain=sqrt(2)); zero bias."""
    h = 512 // s
    dims = [(z_dim, h), (h, h), (h, h), (h, h), (h, 1)]
    params = []
    for (fan_in, fan_out) in dims:
        key, wk = jax.random.split(key)
        std = (2.0 / fan_in) ** 0.5
        w = std * jax.random.normal(wk, (fan_in, fan_out), dtype=jnp.float32)
        b = jnp.zeros((fan_out,), dtype=jnp.float32)
        params.append((w, b))
    return params


def reference_forward(z, params):
    """Pure-JAX f32 reference for sanity checking."""
    h = z
    for i, (w, b) in enumerate(params):
        h = h @ w + b
        if i < len(params) - 1:
            h = jnp.maximum(h, 0.0)
    return jax.nn.sigmoid(h)


if __name__ == "__main__":
    key = jax.random.PRNGKey(0)
    z_dim = 32
    batch = 8

    params = init_discriminator_params(key, z_dim=z_dim, s=1)
    key, zk = jax.random.split(key)
    z = jax.random.normal(zk, (batch, z_dim), dtype=jnp.float32)

    out = discriminator_forward(z, params)
    out = jax.block_until_ready(out)

    ref = reference_forward(z, params)
    assert out.shape == (batch, 1), out.shape
    # bf16 matmul inputs (f32 accumulation) vs pure-f32 reference: loosened tolerance.
    assert jnp.allclose(out, ref, atol=2e-2, rtol=2e-2), (out, ref)

    print("KERNEL_OK")
</pallas_src>

<mosaic_0001>
module attributes {stable_mosaic.version = 11 : i64} {
  func.func @_discriminator_kernel(%arg0: i32, %arg1: memref<128x32xf32, #tpu.memory_space<vmem>>, %arg2: memref<32x512xbf16, #tpu.memory_space<vmem>>, %arg3: memref<1x512xf32, #tpu.memory_space<vmem>>, %arg4: memref<512x512xbf16, #tpu.memory_space<vmem>>, %arg5: memref<1x512xf32, #tpu.memory_space<vmem>>, %arg6: memref<512x512xbf16, #tpu.memory_space<vmem>>, %arg7: memref<1x512xf32, #tpu.memory_space<vmem>>, %arg8: memref<512x512xbf16, #tpu.memory_space<vmem>>, %arg9: memref<1x512xf32, #tpu.memory_space<vmem>>, %arg10: memref<512x1xbf16, #tpu.memory_space<vmem>>, %arg11: memref<1x1xf32, #tpu.memory_space<vmem>>, %arg12: memref<128x1xf32, #tpu.memory_space<vmem>>) attributes {dimension_semantics = [#tpu.dimension_semantics<parallel>], iteration_bounds = array<i64: 1>, scalar_prefetch = 0 : i64, scratch_operands = 0 : i64, tpu.core_type = #tpu.core_type<tc>, window_params = [{transform_indices = @transform_0, window_bounds = array<i64: 128, 32>}, {pipeline_mode = #tpu.pipeline_mode<synchronous>, transform_indices = @transform_1, window_bounds = array<i64: 32, 512>}, {pipeline_mode = #tpu.pipeline_mode<synchronous>, transform_indices = @transform_2, window_bounds = array<i64: 1, 512>}, {pipeline_mode = #tpu.pipeline_mode<synchronous>, transform_indices = @transform_3, window_bounds = array<i64: 512, 512>}, {pipeline_mode = #tpu.pipeline_mode<synchronous>, transform_indices = @transform_4, window_bounds = array<i64: 1, 512>}, {pipeline_mode = #tpu.pipeline_mode<synchronous>, transform_indices = @transform_5, window_bounds = array<i64: 512, 512>}, {pipeline_mode = #tpu.pipeline_mode<synchronous>, transform_indices = @transform_6, window_bounds = array<i64: 1, 512>}, {pipeline_mode = #tpu.pipeline_mode<synchronous>, transform_indices = @transform_7, window_bounds = array<i64: 512, 512>}, {pipeline_mode = #tpu.pipeline_mode<synchronous>, transform_indices = @transform_8, window_bounds = array<i64: 1, 512>}, {pipeline_mode = #tpu.pipeline_mode<synchronous>, transform_indices = @transform_9, window_bounds = array<i64: 512, 1>}, {pipeline_mode = #tpu.pipeline_mode<synchronous>, transform_indices = @transform_10, window_bounds = array<i64: 1, 1>}, {transform_indices = @transform_11, window_bounds = array<i64: 128, 1>}]} {
    %c0 = arith.constant 0 : index
    %c0_0 = arith.constant 0 : index
    %0 = vector.load %arg1[%c0, %c0_0] : memref<128x32xf32, #tpu.memory_space<vmem>>, vector<128x32xf32>
    %1 = arith.truncf %0 : vector<128x32xf32> to vector<128x32xbf16>
    %c0_1 = arith.constant 0 : index
    %c0_2 = arith.constant 0 : index
    %2 = vector.load %arg2[%c0_1, %c0_2] : memref<32x512xbf16, #tpu.memory_space<vmem>>, vector<32x512xbf16>
    %cst = arith.constant dense<0.000000e+00> : vector<128x512xf32>
    %3 = tpu.matmul %1, %2, %cst {dimension_numbers = #tpu.dot_dimension_numbers<[1], [0], [0], [1], [0, 0, 1, 1], [], []>} : vector<128x32xbf16>, vector<32x512xbf16>, vector<128x512xf32> -> vector<128x512xf32>
    %c0_3 = arith.constant 0 : index
    %c0_4 = arith.constant 0 : index
    %4 = vector.load %arg3[%c0_3, %c0_4] : memref<1x512xf32, #tpu.memory_space<vmem>>, vector<1x512xf32>
    %5 = vector.broadcast %4 : vector<1x512xf32> to vector<128x512xf32>
    %6 = arith.addf %3, %5 : vector<128x512xf32>
    %cst_5 = arith.constant 0.000000e+00 : f32
    %7 = vector.broadcast %cst_5 : f32 to vector<128x512xf32>
    %8 = arith.maximumf %6, %7 : vector<128x512xf32>
    %9 = arith.truncf %8 : vector<128x512xf32> to vector<128x512xbf16>
    %c0_6 = arith.constant 0 : index
    %c0_7 = arith.constant 0 : index
    %10 = vector.load %arg4[%c0_6, %c0_7] : memref<512x512xbf16, #tpu.memory_space<vmem>>, vector<512x512xbf16>
    %cst_8 = arith.constant dense<0.000000e+00> : vector<128x512xf32>
    %11 = tpu.matmul %9, %10, %cst_8 {dimension_numbers = #tpu.dot_dimension_numbers<[1], [0], [0], [1], [0, 0, 1, 1], [], []>} : vector<128x512xbf16>, vector<512x512xbf16>, vector<128x512xf32> -> vector<128x512xf32>
    %c0_9 = arith.constant 0 : index
    %c0_10 = arith.constant 0 : index
    %12 = vector.load %arg5[%c0_9, %c0_10] : memref<1x512xf32, #tpu.memory_space<vmem>>, vector<1x512xf32>
    %13 = vector.broadcast %12 : vector<1x512xf32> to vector<128x512xf32>
    %14 = arith.addf %11, %13 : vector<128x512xf32>
    %cst_11 = arith.constant 0.000000e+00 : f32
    %15 = vector.broadcast %cst_11 : f32 to vector<128x512xf32>
    %16 = arith.maximumf %14, %15 : vector<128x512xf32>
    %17 = arith.truncf %16 : vector<128x512xf32> to vector<128x512xbf16>
    %c0_12 = arith.constant 0 : index
    %c0_13 = arith.constant 0 : index
    %18 = vector.load %arg6[%c0_12, %c0_13] : memref<512x512xbf16, #tpu.memory_space<vmem>>, vector<512x512xbf16>
    %cst_14 = arith.constant dense<0.000000e+00> : vector<128x512xf32>
    %19 = tpu.matmul %17, %18, %cst_14 {dimension_numbers = #tpu.dot_dimension_numbers<[1], [0], [0], [1], [0, 0, 1, 1], [], []>} : vector<128x512xbf16>, vector<512x512xbf16>, vector<128x512xf32> -> vector<128x512xf32>
    %c0_15 = arith.constant 0 : index
    %c0_16 = arith.constant 0 : index
    %20 = vector.load %arg7[%c0_15, %c0_16] : memref<1x512xf32, #tpu.memory_space<vmem>>, vector<1x512xf32>
    %21 = vector.broadcast %20 : vector<1x512xf32> to vector<128x512xf32>
    %22 = arith.addf %19, %21 : vector<128x512xf32>
    %cst_17 = arith.constant 0.000000e+00 : f32
    %23 = vector.broadcast %cst_17 : f32 to vector<128x512xf32>
    %24 = arith.maximumf %22, %23 : vector<128x512xf32>
    %25 = arith.truncf %24 : vector<128x512xf32> to vector<128x512xbf16>
    %c0_18 = arith.constant 0 : index
    %c0_19 = arith.constant 0 : index
    %26 = vector.load %arg8[%c0_18, %c0_19] : memref<512x512xbf16, #tpu.memory_space<vmem>>, vector<512x512xbf16>
    %cst_20 = arith.constant dense<0.000000e+00> : vector<128x512xf32>
    %27 = tpu.matmul %25, %26, %cst_20 {dimension_numbers = #tpu.dot_dimension_numbers<[1], [0], [0], [1], [0, 0, 1, 1], [], []>} : vector<128x512xbf16>, vector<512x512xbf16>, vector<128x512xf32> -> vector<128x512xf32>
    %c0_21 = arith.constant 0 : index
    %c0_22 = arith.constant 0 : index
    %28 = vector.load %arg9[%c0_21, %c0_22] : memref<1x512xf32, #tpu.memory_space<vmem>>, vector<1x512xf32>
    %29 = vector.broadcast %28 : vector<1x512xf32> to vector<128x512xf32>
    %30 = arith.addf %27, %29 : vector<128x512xf32>
    %cst_23 = arith.constant 0.000000e+00 : f32
    %31 = vector.broadcast %cst_23 : f32 to vector<128x512xf32>
    %32 = arith.maximumf %30, %31 : vector<128x512xf32>
    %33 = arith.truncf %32 : vector<128x512xf32> to vector<128x512xbf16>
    %c0_24 = arith.constant 0 : index
    %c0_25 = arith.constant 0 : index
    %34 = vector.load %arg10[%c0_24, %c0_25] : memref<512x1xbf16, #tpu.memory_space<vmem>>, vector<512x1xbf16>
    %cst_26 = arith.constant dense<0.000000e+00> : vector<128x1xf32>
    %35 = tpu.matmul %33, %34, %cst_26 {dimension_numbers = #tpu.dot_dimension_numbers<[1], [0], [0], [1], [0, 0, 1, 1], [], []>} : vector<128x512xbf16>, vector<512x1xbf16>, vector<128x1xf32> -> vector<128x1xf32>
    %c0_27 = arith.constant 0 : index
    %c0_28 = arith.constant 0 : index
    %36 = vector.load %arg11[%c0_27, %c0_28] : memref<1x1xf32, #tpu.memory_space<vmem>>, vector<1x1xf32>
    %37 = vector.broadcast %36 : vector<1x1xf32> to vector<128x1xf32>
    %38 = arith.addf %35, %37 : vector<128x1xf32>
    %cst_29 = arith.constant 0.000000e+00 : f32
    %39 = vector.broadcast %cst_29 : f32 to vector<128x1xf32>
    %40 = arith.subf %39, %38 : vector<128x1xf32>
    %41 = math.exp %40 : vector<128x1xf32>
    %cst_30 = arith.constant 1.000000e+00 : f32
    %42 = vector.broadcast %cst_30 : f32 to vector<128x1xf32>
    %43 = arith.addf %42, %41 : vector<128x1xf32>
    %cst_31 = arith.constant 1.000000e+00 : f32
    %44 = vector.broadcast %cst_31 : f32 to vector<128x1xf32>
    %45 = arith.divf %44, %43 : vector<128x1xf32>
    %c0_32 = arith.constant 0 : index
    %c0_33 = arith.constant 0 : index
    %46 = vector.load %arg12[%c0_32, %c0_33] : memref<128x1xf32, #tpu.memory_space<vmem>>, vector<128x1xf32>
    tpu.vector_store %arg12[%c0_32, %c0_33], %45 {strides = array<i32>} : memref<128x1xf32, #tpu.memory_space<vmem>>, vector<128x1xf32>,
    return
  }
  func.func @transform_0(%arg0: i32) -> (i32, i32) {
    %c0_i32 = arith.constant 0 : i32
    %c0_i32_0 = arith.constant 0 : i32
    return %arg0, %c0_i32 : i32, i32
  }
  func.func @transform_1(%arg0: i32) -> (i32, i32) {
    %c0_i32 = arith.constant 0 : i32
    %c0_i32_0 = arith.constant 0 : i32
    %c0_i32_1 = arith.constant 0 : i32
    return %c0_i32, %c0_i32_0 : i32, i32
  }
  func.func @transform_2(%arg0: i32) -> (i32, i32) {
    %c0_i32 = arith.constant 0 : i32
    %c0_i32_0 = arith.constant 0 : i32
    %c0_i32_1 = arith.constant 0 : i32
    return %c0_i32, %c0_i32_0 : i32, i32
  }
  func.func @transform_3(%arg0: i32) -> (i32, i32) {
    %c0_i32 = arith.constant 0 : i32
    %c0_i32_0 = arith.constant 0 : i32
    %c0_i32_1 = arith.constant 0 : i32
    return %c0_i32, %c0_i32_0 : i32, i32
  }
  func.func @transform_4(%arg0: i32) -> (i32, i32) {
    %c0_i32 = arith.constant 0 : i32
    %c0_i32_0 = arith.constant 0 : i32
    %c0_i32_1 = arith.constant 0 : i32
    return %c0_i32, %c0_i32_0 : i32, i32
  }
  func.func @transform_5(%arg0: i32) -> (i32, i32) {
    %c0_i32 = arith.constant 0 : i32
    %c0_i32_0 = arith.constant 0 : i32
    %c0_i32_1 = arith.constant 0 : i32
    return %c0_i32, %c0_i32_0 : i32, i32
  }
  func.func @transform_6(%arg0: i32) -> (i32, i32) {
    %c0_i32 = arith.constant 0 : i32
    %c0_i32_0 = arith.constant 0 : i32
    %c0_i32_1 = arith.constant 0 : i32
    return %c0_i32, %c0_i32_0 : i32, i32
  }
  func.func @transform_7(%arg0: i32) -> (i32, i32) {
    %c0_i32 = arith.constant 0 : i32
    %c0_i32_0 = arith.constant 0 : i32
    %c0_i32_1 = arith.constant 0 : i32
    return %c0_i32, %c0_i32_0 : i32, i32
  }
  func.func @transform_8(%arg0: i32) -> (i32, i32) {
    %c0_i32 = arith.constant 0 : i32
    %c0_i32_0 = arith.constant 0 : i32
    %c0_i32_1 = arith.constant 0 : i32
    return %c0_i32, %c0_i32_0 : i32, i32
  }
  func.func @transform_9(%arg0: i32) -> (i32, i32) {
    %c0_i32 = arith.constant 0 : i32
    %c0_i32_0 = arith.constant 0 : i32
    %c0_i32_1 = arith.constant 0 : i32
    return %c0_i32, %c0_i32_0 : i32, i32
  }
  func.func @transform_10(%arg0: i32) -> (i32, i32) {
    %c0_i32 = arith.constant 0 : i32
    %c0_i32_0 = arith.constant 0 : i32
    %c0_i32_1 = arith.constant 0 : i32
    return %c0_i32, %c0_i32_0 : i32, i32
  }
  func.func @transform_11(%arg0: i32) -> (i32, i32) {
    %c0_i32 = arith.constant 0 : i32
    %c0_i32_0 = arith.constant 0 : i32
    return %arg0, %c0_i32 : i32, i32
  }
}

</mosaic_0001>

<llo_original>
// kernel: tpu_custom_call.1
$region0: #{tpu_custom_call.1}
  #allocation0 [shape = 'u32[]', space=smem, size = 0x4, offset = 0x4, fixed_abs, tag = 'smem constant byte address 0x4 - core index']
  #allocation1 [shape = 'u32[144,128]{1,0:T(1,128)}', space=vmem, size = 0x12000, scoped, tag = 'internal scratch']
  #allocation2 [shape = 'f32[1,1]{1,0:T(1,128)S(1)}', space=vmem, size = 0x200, scoped, tag = 'scoped memory for tpu_custom_call.1']
  %s0 = inlined_call_operand.vmem [shape: f32[128,32], index: 0, kind: input, shape index: {}]
  %s1 = inlined_call_operand.vmem [shape: bf16[32,512], index: 1, kind: input, shape index: {}]
  %s2 = inlined_call_operand.vmem [shape: f32[1,512], index: 2, kind: input, shape index: {}]
  %s3 = inlined_call_operand.hbm [shape: bf16[512,512], index: 3, kind: input, shape index: {}]
  %s4 = inlined_call_operand.vmem [shape: f32[1,512], index: 4, kind: input, shape index: {}]
  %s5 = inlined_call_operand.hbm [shape: bf16[512,512], index: 5, kind: input, shape index: {}]
  %s6 = inlined_call_operand.vmem [shape: f32[1,512], index: 6, kind: input, shape index: {}]
  %s7 = inlined_call_operand.hbm [shape: bf16[512,512], index: 7, kind: input, shape index: {}]
  %s8 = inlined_call_operand.vmem [shape: f32[1,512], index: 8, kind: input, shape index: {}]
  %s9 = inlined_call_operand.vmem [shape: bf16[512,1], index: 9, kind: input, shape index: {}]
  %s10 = inlined_call_operand.<no memory space> [shape: f32[1,1], index: 10, kind: input, shape index: {}]
  %s11 = inlined_call_operand.vmem [shape: f32[128,1], index: 11, kind: output, shape index: {}]
  %s12 = sld [smem:[#allocation0]]
  $region66: #{tpu_custom_call.1} parent=0
    _
  %s14 = ssub.s32 1, %s12
  %s15 = scalar_select 0, %s14, %s12
  %v16 = vstv %s10
  %17 = vst [vmem:[#allocation2] sm:$0x1] %v16
  $region1: #{tpu_custom_call.1} parent=0
    #allocation3 [shape = 'u8[524288]{0}', space=vmem, size = 0x80000, scoped, tag = 'input window, operand 3, single buffered']
    #allocation4 [shape = 's32[1]{0}', space=sflag, size = 0x4, scoped, tag = 'scoped memory for tpu_custom_call.1']
    #allocation5 [shape = 'u8[524288]{0}', space=vmem, size = 0x80000, scoped, tag = 'input window, operand 5, single buffered']
    #allocation6 [shape = 's32[1]{0}', space=sflag, size = 0x4, scoped, tag = 'scoped memory for tpu_custom_call.1']
    #allocation7 [shape = 'u8[524288]{0}', space=vmem, size = 0x80000, scoped, tag = 'input window, operand 7, single buffered']
    %18 = vsyncpa [#allocation4], 0
    %19 = vsyncpa [#allocation6], 0
    // Predicated region
    $region2: #{tpu_custom_call.1} parent=1 // pred_check
      _
    $region3: #{tpu_custom_call.1} parent=1 // pred_check_branch
      %21 = sbr.rel (0) target = $region5
    $region4: #{tpu_custom_call.1} parent=1 // pred_region
      _
    $region5: #{tpu_custom_call.1} parent=1 // pred_fallthru
      _
    // Predicated region
    $region6: #{tpu_custom_call.1} parent=1 // pred_check
      _
    $region7: #{tpu_custom_call.1} parent=1 // pred_check_branch
      %23 = sbr.rel (0) target = $region9
    $region8: #{tpu_custom_call.1} parent=1 // pred_region
      _
    $region9: #{tpu_custom_call.1} parent=1 // pred_fallthru
      _
    // Predicated region
    $region10: #{tpu_custom_call.1} parent=1 // pred_check
      _
    $region11: #{tpu_custom_call.1} parent=1 // pred_check_branch
      %25 = sbr.rel (0) target = $region13
    $region12: #{tpu_custom_call.1} parent=1 // pred_region
      _
    $region13: #{tpu_custom_call.1} parent=1 // pred_fallthru
      _
    // Predicated region
    $region14: #{tpu_custom_call.1} parent=1 // pred_check
      _
    $region15: #{tpu_custom_call.1} parent=1 // pred_check_branch
      %27 = sbr.rel (0) target = $region17
    $region16: #{tpu_custom_call.1} parent=1 // pred_region
      %s29 = ssub.s32 16384, 16384
      %30 = vsyncadd [#allocation4], %s29
      %s31 = sshll.u32 [#allocation3], 4
      %s32 = int_to_ptr.vmem [resolvable:$true] %s31
      %37 = dma.hbm_to_vmem [thread:$0]  %s3, 16384, %s32, [#allocation4], 256, 256, 16
    $region17: #{tpu_custom_call.1} parent=1 // pred_fallthru
      _
    // Predicated region
    $region18: #{tpu_custom_call.1} parent=1 // pred_check
      _
    $region19: #{tpu_custom_call.1} parent=1 // pred_check_branch
      %39 = sbr.rel (0) target = $region21
    $region20: #{tpu_custom_call.1} parent=1 // pred_region
      _
    $region21: #{tpu_custom_call.1} parent=1 // pred_fallthru
      _
    // Predicated region
    $region22: #{tpu_custom_call.1} parent=1 // pred_check
      _
    $region23: #{tpu_custom_call.1} parent=1 // pred_check_branch
      %41 = sbr.rel (0) target = $region25
    $region24: #{tpu_custom_call.1} parent=1 // pred_region
      %s43 = ssub.s32 16384, 16384
      %44 = vsyncadd [#allocation6], %s43
      %s45 = sshll.u32 [#allocation5], 4
      %s46 = int_to_ptr.vmem [resolvable:$true] %s45
      %51 = dma.hbm_to_vmem [thread:$0]  %s5, 16384, %s46, [#allocation6], 256, 256, 16
    $region25: #{tpu_custom_call.1} parent=1 // pred_fallthru
      _
    // Predicated region
    $region26: #{tpu_custom_call.1} parent=1 // pred_check
      _
    $region27: #{tpu_custom_call.1} parent=1 // pred_check_branch
      %53 = sbr.rel (0) target = $region29
    $region28: #{tpu_custom_call.1} parent=1 // pred_region
      _
    $region29: #{tpu_custom_call.1} parent=1 // pred_fallthru
      _
    // Predicated region
    $region30: #{tpu_custom_call.1} parent=1 // pred_check
      _
    $region31: #{tpu_custom_call.1} parent=1 // pred_check_branch
      %55 = sbr.rel (0) target = $region33
    $region32: #{tpu_custom_call.1} parent=1 // pred_region
      %s57 = ssub.s32 16384, 16384
      %58 = vsyncadd [#allocation6], %s57
      %s59 = sshll.u32 [#allocation7], 4
      %s60 = int_to_ptr.vmem [resolvable:$true] %s59
      %65 = dma.hbm_to_vmem [thread:$0]  %s7, 16384, %s60, [#allocation6], 256, 256, 16
    $region33: #{tpu_custom_call.1} parent=1 // pred_fallthru
      _
    // Predicated region
    $region34: #{tpu_custom_call.1} parent=1 // pred_check
      _
    $region35: #{tpu_custom_call.1} parent=1 // pred_check_branch
      %67 = sbr.rel (0) target = $region37
    $region36: #{tpu_custom_call.1} parent=1 // pred_region
      _
    $region37: #{tpu_custom_call.1} parent=1 // pred_fallthru
      _
    // Predicated region
    $region38: #{tpu_custom_call.1} parent=1 // pred_check
      _
    $region39: #{tpu_custom_call.1} parent=1 // pred_check_branch
      %69 = sbr.rel (0) target = $region41
    $region40: #{tpu_custom_call.1} parent=1 // pred_region
      _
    $region41: #{tpu_custom_call.1} parent=1 // pred_fallthru
      _
    // Predicated region
    $region42: #{tpu_custom_call.1} parent=1 // pred_check
      _
    $region43: #{tpu_custom_call.1} parent=1 // pred_check_branch
      %71 = sbr.rel (0) target = $region45
    $region44: #{tpu_custom_call.1} parent=1 // pred_region
      _
    $region45: #{tpu_custom_call.1} parent=1 // pred_fallthru
      _
    // Predicated region
    $region46: #{tpu_custom_call.1} parent=1 // pred_check
      _
    $region47: #{tpu_custom_call.1} parent=1 // pred_check_branch
      %73 = sbr.rel (0) target = $region49
    $region48: #{tpu_custom_call.1} parent=1 // pred_region
      %74 = dma.done [#allocation4], 16384
    $region49: #{tpu_custom_call.1} parent=1 // pred_fallthru
      _
    // Predicated region
    $region50: #{tpu_custom_call.1} parent=1 // pred_check
      _
    $region51: #{tpu_custom_call.1} parent=1 // pred_check_branch
      %76 = sbr.rel (0) target = $region53
    $region52: #{tpu_custom_call.1} parent=1 // pred_region
      %77 = dma.done [#allocation6], 16384
    $region53: #{tpu_custom_call.1} parent=1 // pred_fallthru
      _
    // Predicated region
    $region54: #{tpu_custom_call.1} parent=1 // pred_check
      _
    $region55: #{tpu_custom_call.1} parent=1 // pred_check_branch
      %79 = sbr.rel (0) target = $region57
    $region56: #{tpu_custom_call.1} parent=1 // pred_region
      %80 = dma.done [#allocation6], 16384
    $region57: #{tpu_custom_call.1} parent=1 // pred_fallthru
      _
    %v82 = vld [vmem:[%s0] sm:$0xff]
    %v83 = vld [vmem:[%s0 + $0x8] sm:$0xff]
    %v84 = vld [vmem:[%s0 + $0x10] sm:$0xff]
    %v85 = vld [vmem:[%s0 + $0x18] sm:$0xff]
    %v86 = vld [vmem:[%s0 + $0x20] sm:$0xff]
    %v87 = vld [vmem:[%s0 + $0x28] sm:$0xff]
    %v88 = vld [vmem:[%s0 + $0x30] sm:$0xff]
    %v89 = vld [vmem:[%s0 + $0x38] sm:$0xff]
    %v90 = vld [vmem:[%s0 + $0x40] sm:$0xff]
    %v91 = vld [vmem:[%s0 + $0x48] sm:$0xff]
    %v92 = vld [vmem:[%s0 + $0x50] sm:$0xff]
    %v93 = vld [vmem:[%s0 + $0x58] sm:$0xff]
    %v94 = vld [vmem:[%s0 + $0x60] sm:$0xff]
    %v95 = vld [vmem:[%s0 + $0x68] sm:$0xff]
    %v96 = vld [vmem:[%s0 + $0x70] sm:$0xff]
    %v97 = vld [vmem:[%s0 + $0x78] sm:$0xff]
    %v98 = vpack.c.bf16 %v83, %v82
    %v99 = vpack.c.bf16 %v85, %v84
    %v100 = vpack.c.bf16 %v87, %v86
    %v101 = vpack.c.bf16 %v89, %v88
    %v102 = vpack.c.bf16 %v91, %v90
    %v103 = vpack.c.bf16 %v93, %v92
    %v104 = vpack.c.bf16 %v95, %v94
    %v105 = vpack.c.bf16 %v97, %v96
    %v106 = vld [vmem:[%s1] sm:$0xff]
    %v107 = vld [vmem:[%s1 + $0x8] sm:$0xff]
    %v108 = vld [vmem:[%s1 + $0x10] sm:$0xff]
    %v109 = vld [vmem:[%s1 + $0x18] sm:$0xff]
    %v110 = vld [vmem:[%s1 + $0x20] sm:$0xff]
    %v111 = vld [vmem:[%s1 + $0x28] sm:$0xff]
    %v112 = vld [vmem:[%s1 + $0x30] sm:$0xff]
    %v113 = vld [vmem:[%s1 + $0x38] sm:$0xff]
    %v114 = vld [vmem:[%s2] sm:$0xf]
    %v116 = vlaneseq
    %v117 = vshrl.u32 %v116, 7
    %v118 = vsub.s32 0, %v117
    %v119 = vrot.slane %v114, %v118
    %v120 = vlaneseq
    %v121 = vshrl.u32 %v120, 7
    %v122 = vsub.s32 1, %v121
    %v123 = vrot.slane %v114, %v122
    %v124 = vlaneseq
    %v125 = vshrl.u32 %v124, 7
    %v126 = vsub.s32 2, %v125
    %v127 = vrot.slane %v114, %v126
    %v128 = vlaneseq
    %v129 = vshrl.u32 %v128, 7
    %v130 = vsub.s32 3, %v129
    %v131 = vrot.slane %v114, %v130
    %v144 = vunpack.c.l.b16 %v106
    %v145 = vunpack.c.h.b16 %v106
    %v146 = vunpack.c.l.b16 %v107
    %v147 = vunpack.c.h.b16 %v107
    %v148 = vunpack.c.l.b16 %v108
    %v149 = vunpack.c.h.b16 %v108
    %v150 = vunpack.c.l.b16 %v109
    %v151 = vunpack.c.h.b16 %v109
    %v152 = vunpack.c.l.b16 %v110
    %v153 = vunpack.c.h.b16 %v110
    %v154 = vunpack.c.l.b16 %v111
    %v155 = vunpack.c.h.b16 %v111
    %v156 = vunpack.c.l.b16 %v112
    %v157 = vunpack.c.h.b16 %v112
    %v158 = vunpack.c.l.b16 %v113
    %v159 = vunpack.c.h.b16 %v113
    %v160 = vpack.c.b16 %v148, %v144
    %v161 = vpack.c.b16 %v149, %v145
    %v162 = vpack.c.b16 %v150, %v146
    %v163 = vpack.c.b16 %v151, %v147
    %v164 = vpack.c.b16 %v156, %v152
    %v165 = vpack.c.b16 %v157, %v153
    %v166 = vpack.c.b16 %v158, %v154
    %v167 = vpack.c.b16 %v159, %v155
    %vm176 = vcmask 261120
    %v178 = vsel %vm176, %v98, 0
    %v181 = vsel %vm176, %v99, 0
    %v184 = vsel %vm176, %v100, 0
    %v187 = vsel %vm176, %v101, 0
    %v190 = vsel %vm176, %v102, 0
    %v193 = vsel %vm176, %v103, 0
    %v196 = vsel %vm176, %v104, 0
    %v199 = vsel %vm176, %v105, 0
    %201 = vmatprep.subr.bf16.mxu0 0
    %202 = vmatpush1.bf16.msra.mxu0 0
    %203 = vmatprep.subr.bf16.mxu0 0
    %204 = vmatpush1.bf16.msra.mxu0 0
    %205 = vmatprep.subr.bf16.mxu0 0
    %206 = vmatpush1.bf16.msra.mxu0 0
    %207 = vmatprep.subr.bf16.mxu0 0
    %208 = vmatpush1.bf16.msra.mxu0 0
    %209 = vmatprep.subr.bf16.mxu0 0
    %210 = vmatpush1.bf16.msra.mxu0 0
    %211 = vmatprep.subr.bf16.mxu0 0
    %212 = vmatpush1.bf16.msra.mxu0 0
    %213 = vmatprep.subr.bf16.mxu0 %v165
    %214 = vmatpush1.bf16.msra.mxu0 %v164
    %215 = vmatprep.subr.bf16.mxu0 %v161
    %216 = vmatpush1.bf16.msra.mxu0 %v160
    %217 = vmatprep.subr.bf16.mxu0 0
    %218 = vmatpush2.bf16.msra.mxu0 0
    %219 = vmatprep.subr.bf16.mxu0 0
    %220 = vmatpush2.bf16.msra.mxu0 0
    %221 = vmatprep.subr.bf16.mxu0 0
    %222 = vmatpush2.bf16.msra.mxu0 0
    %223 = vmatprep.subr.bf16.mxu0 0
    %224 = vmatpush2.bf16.msra.mxu0 0
    %225 = vmatprep.subr.bf16.mxu0 0
    %226 = vmatpush2.bf16.msra.mxu0 0
    %227 = vmatprep.subr.bf16.mxu0 0
    %228 = vmatpush2.bf16.msra.mxu0 0
    %229 = vmatprep.subr.bf16.mxu0 0
    %230 = vmatpush2.bf16.msra.mxu0 0
    %231 = vmatprep.subr.bf16.mxu0 0
    %232 = vmatpush2.bf16.msra.mxu0 0
    %233 = vmatprep.mubr.bf16.mxu0 0
    %234 = vmatmul.mubr.bf16.gmra.mxu0 %v178
    %v235 = vpop.f32.mrf.mxu0
    %v236 = vadd.f32 %v119, %v235
    %v237 = vpop.f32.mrf.mxu0
    %v238 = vadd.f32 %v123, %v237
    %v239 = vpop.f32.mrf.mxu0
    %v240 = vadd.f32 %v119, %v239
    %v241 = vpop.f32.mrf.mxu0
    %v242 = vadd.f32 %v123, %v241
    %243 = vmatprep.mubr.bf16.mxu0 0
    %244 = vmatmul.mubr.bf16.gmra.mxu0 %v181
    %v245 = vpop.f32.mrf.mxu0
    %v246 = vadd.f32 %v119, %v245
    %v247 = vpop.f32.mrf.mxu0
    %v248 = vadd.f32 %v123, %v247
    %v249 = vpop.f32.mrf.mxu0
    %v250 = vadd.f32 %v119, %v249
    %v251 = vpop.f32.mrf.mxu0
    %v252 = vadd.f32 %v123, %v251
    %253 = vmatprep.mubr.bf16.mxu0 0
    %254 = vmatmul.mubr.bf16.gmra.mxu0 %v184
    %v255 = vpop.f32.mrf.mxu0
    %v256 = vadd.f32 %v119, %v255
    %v257 = vpop.f32.mrf.mxu0
    %v258 = vadd.f32 %v123, %v257
    %v259 = vpop.f32.mrf.mxu0
    %v260 = vadd.f32 %v119, %v259
    %v261 = vpop.f32.mrf.mxu0
    %v262 = vadd.f32 %v123, %v261
    %263 = vmatprep.mubr.bf16.mxu0 0
    %264 = vmatmul.mubr.bf16.gmra.mxu0 %v187
    %v265 = vpop.f32.mrf.mxu0
    %v266 = vadd.f32 %v119, %v265
    %v267 = vpop.f32.mrf.mxu0
    %v268 = vadd.f32 %v123, %v267
    %v269 = vpop.f32.mrf.mxu0
    %v270 = vadd.f32 %v119, %v269
    %v271 = vpop.f32.mrf.mxu0
    %v272 = vadd.f32 %v123, %v271
    %273 = vmatprep.mubr.bf16.mxu0 0
    %274 = vmatmul.mubr.bf16.gmra.mxu0 %v190
    %v275 = vpop.f32.mrf.mxu0
    %v276 = vadd.f32 %v119, %v275
    %v277 = vpop.f32.mrf.mxu0
    %v278 = vadd.f32 %v123, %v277
    %v279 = vpop.f32.mrf.mxu0
    %v280 = vadd.f32 %v119, %v279
    %v281 = vpop.f32.mrf.mxu0
    %v282 = vadd.f32 %v123, %v281
    %283 = vmatprep.mubr.bf16.mxu0 0
    %284 = vmatmul.mubr.bf16.gmra.mxu0 %v193
    %v285 = vpop.f32.mrf.mxu0
    %v286 = vadd.f32 %v119, %v285
    %v287 = vpop.f32.mrf.mxu0
    %v288 = vadd.f32 %v123, %v287
    %v289 = vpop.f32.mrf.mxu0
    %v290 = vadd.f32 %v119, %v289
    %v291 = vpop.f32.mrf.mxu0
    %v292 = vadd.f32 %v123, %v291
    %293 = vmatprep.mubr.bf16.mxu0 0
    %294 = vmatmul.mubr.bf16.gmra.mxu0 %v196
    %v295 = vpop.f32.mrf.mxu0
    %v296 = vadd.f32 %v119, %v295
    %v297 = vpop.f32.mrf.mxu0
    %v298 = vadd.f32 %v123, %v297
    %v299 = vpop.f32.mrf.mxu0
    %v300 = vadd.f32 %v119, %v299
    %v301 = vpop.f32.mrf.mxu0
    %v302 = vadd.f32 %v123, %v301
    %303 = vmatprep.mubr.bf16.mxu0 0
    %304 = vmatmul.mubr.bf16.gmra.mxu0 %v199
    %v305 = vpop.f32.mrf.mxu0
    %v306 = vadd.f32 %v119, %v305
    %v307 = vpop.f32.mrf.mxu0
    %v308 = vadd.f32 %v123, %v307
    %v309 = vpop.f32.mrf.mxu0
    %v310 = vadd.f32 %v119, %v309
    %v311 = vpop.f32.mrf.mxu0
    %v312 = vadd.f32 %v123, %v311
    %313 = vdwg.mxu0
    %314 = vmatprep.subr.bf16.mxu0 0
    %315 = vmatpush1.bf16.msra.mxu0 0
    %316 = vmatprep.subr.bf16.mxu0 0
    %317 = vmatpush1.bf16.msra.mxu0 0
    %318 = vmatprep.subr.bf16.mxu0 0
    %319 = vmatpush1.bf16.msra.mxu0 0
    %320 = vmatprep.subr.bf16.mxu0 0
    %321 = vmatpush1.bf16.msra.mxu0 0
    %322 = vmatprep.subr.bf16.mxu0 0
    %323 = vmatpush1.bf16.msra.mxu0 0
    %324 = vmatprep.subr.bf16.mxu0 0
    %325 = vmatpush1.bf16.msra.mxu0 0
    %326 = vmatprep.subr.bf16.mxu0 %v167
    %327 = vmatpush1.bf16.msra.mxu0 %v166
    %328 = vmatprep.subr.bf16.mxu0 %v163
    %329 = vmatpush1.bf16.msra.mxu0 %v162
    %330 = vmatprep.subr.bf16.mxu0 0
    %331 = vmatpush2.bf16.msra.mxu0 0
    %332 = vmatprep.subr.bf16.mxu0 0
    %333 = vmatpush2.bf16.msra.mxu0 0
    %334 = vmatprep.subr.bf16.mxu0 0
    %335 = vmatpush2.bf16.msra.mxu0 0
    %336 = vmatprep.subr.bf16.mxu0 0
    %337 = vmatpush2.bf16.msra.mxu0 0
    %338 = vmatprep.subr.bf16.mxu0 0
    %339 = vmatpush2.bf16.msra.mxu0 0
    %340 = vmatprep.subr.bf16.mxu0 0
    %341 = vmatpush2.bf16.msra.mxu0 0
    %342 = vmatprep.subr.bf16.mxu0 0
    %343 = vmatpush2.bf16.msra.mxu0 0
    %344 = vmatprep.subr.bf16.mxu0 0
    %345 = vmatpush2.bf16.msra.mxu0 0
    %346 = vmatprep.mubr.bf16.mxu0 0
    %347 = vmatmul.mubr.bf16.gmra.mxu0 %v178
    %v348 = vpop.f32.mrf.mxu0
    %v349 = vadd.f32 %v127, %v348
    %v350 = vpop.f32.mrf.mxu0
    %v351 = vadd.f32 %v131, %v350
    %v352 = vpop.f32.mrf.mxu0
    %v353 = vadd.f32 %v127, %v352
    %v354 = vpop.f32.mrf.mxu0
    %v355 = vadd.f32 %v131, %v354
    %356 = vmatprep.mubr.bf16.mxu0 0
    %357 = vmatmul.mubr.bf16.gmra.mxu0 %v181
    %v358 = vpop.f32.mrf.mxu0
    %v359 = vadd.f32 %v127, %v358
    %v360 = vpop.f32.mrf.mxu0
    %v361 = vadd.f32 %v131, %v360
    %v362 = vpop.f32.mrf.mxu0
    %v363 = vadd.f32 %v127, %v362
    %v364 = vpop.f32.mrf.mxu0
    %v365 = vadd.f32 %v131, %v364
    %366 = vmatprep.mubr.bf16.mxu0 0
    %367 = vmatmul.mubr.bf16.gmra.mxu0 %v184
    %v368 = vpop.f32.mrf.mxu0
    %v369 = vadd.f32 %v127, %v368
    %v370 = vpop.f32.mrf.mxu0
    %v371 = vadd.f32 %v131, %v370
    %v372 = vpop.f32.mrf.mxu0
    %v373 = vadd.f32 %v127, %v372
    %v374 = vpop.f32.mrf.mxu0
    %v375 = vadd.f32 %v131, %v374
    %376 = vmatprep.mubr.bf16.mxu0 0
    %377 = vmatmul.mubr.bf16.gmra.mxu0 %v187
    %v378 = vpop.f32.mrf.mxu0
    %v379 = vadd.f32 %v127, %v378
    %v380 = vpop.f32.mrf.mxu0
    %v381 = vadd.f32 %v131, %v380
    %v382 = vpop.f32.mrf.mxu0
    %v383 = vadd.f32 %v127, %v382
    %v384 = vpop.f32.mrf.mxu0
    %v385 = vadd.f32 %v131, %v384
    %386 = vmatprep.mubr.bf16.mxu0 0
    %387 = vmatmul.mubr.bf16.gmra.mxu0 %v190
    %v388 = vpop.f32.mrf.mxu0
    %v389 = vadd.f32 %v127, %v388
    %v390 = vpop.f32.mrf.mxu0
    %v391 = vadd.f32 %v131, %v390
    %v392 = vpop.f32.mrf.mxu0
    %v393 = vadd.f32 %v127, %v392
    %v394 = vpop.f32.mrf.mxu0
    %v395 = vadd.f32 %v131, %v394
    %396 = vmatprep.mubr.bf16.mxu0 0
    %397 = vmatmul.mubr.bf16.gmra.mxu0 %v193
    %v398 = vpop.f32.mrf.mxu0
    %v399 = vadd.f32 %v127, %v398
    %v400 = vpop.f32.mrf.mxu0
    %v401 = vadd.f32 %v131, %v400
    %v402 = vpop.f32.mrf.mxu0
    %v403 = vadd.f32 %v127, %v402
    %v404 = vpop.f32.mrf.mxu0
    %v405 = vadd.f32 %v131, %v404
    %406 = vmatprep.mubr.bf16.mxu0 0
    %407 = vmatmul.mubr.bf16.gmra.mxu0 %v196
    %v408 = vpop.f32.mrf.mxu0
    %v409 = vadd.f32 %v127, %v408
    %v410 = vpop.f32.mrf.mxu0
    %v411 = vadd.f32 %v131, %v410
    %v412 = vpop.f32.mrf.mxu0
    %v413 = vadd.f32 %v127, %v412
    %v414 = vpop.f32.mrf.mxu0
    %v415 = vadd.f32 %v131, %v414
    %416 = vmatprep.mubr.bf16.mxu0 0
    %417 = vmatmul.mubr.bf16.gmra.mxu0 %v199
    %v418 = vpop.f32.mrf.mxu0
    %v419 = vadd.f32 %v127, %v418
    %v420 = vpop.f32.mrf.mxu0
    %v421 = vadd.f32 %v131, %v420
    %v422 = vpop.f32.mrf.mxu0
    %v423 = vadd.f32 %v127, %v422
    %v424 = vpop.f32.mrf.mxu0
    %v425 = vadd.f32 %v131, %v424
    %426 = vdwg.mxu0
    %v427 = vmax.f32 %v236, 0.0
    %v428 = vmax.f32 %v238, 0.0
    %v429 = vmax.f32 %v349, 0.0
    %v430 = vmax.f32 %v351, 0.0
    %v431 = vmax.f32 %v240, 0.0
    %v432 = vmax.f32 %v242, 0.0
    %v433 = vmax.f32 %v353, 0.0
    %v434 = vmax.f32 %v355, 0.0
    %v435 = vmax.f32 %v246, 0.0
    %v436 = vmax.f32 %v248, 0.0
    %v437 = vmax.f32 %v359, 0.0
    %v438 = vmax.f32 %v361, 0.0
    %v439 = vmax.f32 %v250, 0.0
    %v440 = vmax.f32 %v252, 0.0
    %v441 = vmax.f32 %v363, 0.0
    %v442 = vmax.f32 %v365, 0.0
    %v443 = vmax.f32 %v256, 0.0
    %v444 = vmax.f32 %v258, 0.0
    %v445 = vmax.f32 %v369, 0.0
    %v446 = vmax.f32 %v371, 0.0
    %v447 = vmax.f32 %v260, 0.0
    %v448 = vmax.f32 %v262, 0.0
    %v449 = vmax.f32 %v373, 0.0
    %v450 = vmax.f32 %v375, 0.0
    %v451 = vmax.f32 %v266, 0.0
    %v452 = vmax.f32 %v268, 0.0
    %v453 = vmax.f32 %v379, 0.0
    %v454 = vmax.f32 %v381, 0.0
    %v455 = vmax.f32 %v270, 0.0
    %v456 = vmax.f32 %v272, 0.0
    %v457 = vmax.f32 %v383, 0.0
    %v458 = vmax.f32 %v385, 0.0
    %v459 = vmax.f32 %v276, 0.0
    %v460 = vmax.f32 %v278, 0.0
    %v461 = vmax.f32 %v389, 0.0
    %v462 = vmax.f32 %v391, 0.0
    %v463 = vmax.f32 %v280, 0.0
    %v464 = vmax.f32 %v282, 0.0
    %v465 = vmax.f32 %v393, 0.0
    %v466 = vmax.f32 %v395, 0.0
    %v467 = vmax.f32 %v286, 0.0
    %v468 = vmax.f32 %v288, 0.0
    %v469 = vmax.f32 %v399, 0.0
    %v470 = vmax.f32 %v401, 0.0
    %v471 = vmax.f32 %v290, 0.0
    %v472 = vmax.f32 %v292, 0.0
    %v473 = vmax.f32 %v403, 0.0
    %v474 = vmax.f32 %v405, 0.0
    %v475 = vmax.f32 %v296, 0.0
    %v476 = vmax.f32 %v298, 0.0
    %v477 = vmax.f32 %v409, 0.0
    %v478 = vmax.f32 %v411, 0.0
    %v479 = vmax.f32 %v300, 0.0
    %v480 = vmax.f32 %v302, 0.0
    %v481 = vmax.f32 %v413, 0.0
    %v482 = vmax.f32 %v415, 0.0
    %v483 = vmax.f32 %v306, 0.0
    %v484 = vmax.f32 %v308, 0.0
    %v485 = vmax.f32 %v419, 0.0
    %v486 = vmax.f32 %v421, 0.0
    %v487 = vmax.f32 %v310, 0.0
    %v488 = vmax.f32 %v312, 0.0
    %v489 = vmax.f32 %v423, 0.0
    %v490 = vmax.f32 %v425, 0.0
    %v491 = vpack.c.bf16 %v431, %v427
    %v492 = vpack.c.bf16 %v432, %v428
    %v493 = vpack.c.bf16 %v433, %v429
    %v494 = vpack.c.bf16 %v434, %v430
    %v495 = vpack.c.bf16 %v439, %v435
    %v496 = vpack.c.bf16 %v440, %v436
    %v497 = vpack.c.bf16 %v441, %v437
    %v498 = vpack.c.bf16 %v442, %v438
    %v499 = vpack.c.bf16 %v447, %v443
    %v500 = vpack.c.bf16 %v448, %v444
    %v501 = vpack.c.bf16 %v449, %v445
    %v502 = vpack.c.bf16 %v450, %v446
    %v503 = vpack.c.bf16 %v455, %v451
    %v504 = vpack.c.bf16 %v456, %v452
    %v505 = vpack.c.bf16 %v457, %v453
    %v506 = vpack.c.bf16 %v458, %v454
    %v507 = vpack.c.bf16 %v463, %v459
    %v508 = vpack.c.bf16 %v464, %v460
    %v509 = vpack.c.bf16 %v465, %v461
    %v510 = vpack.c.bf16 %v466, %v462
    %v511 = vpack.c.bf16 %v471, %v467
    %v512 = vpack.c.bf16 %v472, %v468
    %v513 = vpack.c.bf16 %v473, %v469
    %v514 = vpack.c.bf16 %v474, %v470
    %v515 = vpack.c.bf16 %v479, %v475
    %v516 = vpack.c.bf16 %v480, %v476
    %v517 = vpack.c.bf16 %v481, %v477
    %v518 = vpack.c.bf16 %v482, %v478
    %v519 = vpack.c.bf16 %v487, %v483
    %v520 = vpack.c.bf16 %v488, %v484
    %v521 = vpack.c.bf16 %v489, %v485
    %v522 = vpack.c.bf16 %v490, %v486
    %v523 = vld [vmem:[#allocation3] sm:$0xff]
    %v524 = vld [vmem:[#allocation3 + $0x8] sm:$0xff]
    %v525 = vld [vmem:[#allocation3 + $0x10] sm:$0xff]
    %v526 = vld [vmem:[#allocation3 + $0x18] sm:$0xff]
    %v527 = vld [vmem:[#allocation3 + $0x20] sm:$0xff]
    %v528 = vld [vmem:[#allocation3 + $0x28] sm:$0xff]
    %v529 = vld [vmem:[#allocation3 + $0x30] sm:$0xff]
    %v530 = vld [vmem:[#allocation3 + $0x38] sm:$0xff]
    %v531 = vld [vmem:[#allocation3 + $0x40] sm:$0xff]
    %v532 = vld [vmem:[#allocation3 + $0x48] sm:$0xff]
    %v533 = vld [vmem:[#allocation3 + $0x50] sm:$0xff]
    %v534 = vld [vmem:[#allocation3 + $0x58] sm:$0xff]
    %v535 = vld [vmem:[#allocation3 + $0x60] sm:$0xff]
    %v536 = vld [vmem:[#allocation3 + $0x68] sm:$0xff]
    %v537 = vld [vmem:[#allocation3 + $0x70] sm:$0xff]
    %v538 = vld [vmem:[#allocation3 + $0x78] sm:$0xff]
    %v539 = vld [vmem:[#allocation3 + $0x80] sm:$0xff]
    %v540 = vld [vmem:[#allocation3 + $0x88] sm:$0xff]
    %v541 = vld [vmem:[#allocation3 + $0x90] sm:$0xff]
    %v542 = vld [vmem:[#allocation3 + $0x98] sm:$0xff]
    %v543 = vld [vmem:[#allocation3 + $0xa0] sm:$0xff]
    %v544 = vld [vmem:[#allocation3 + $0xa8] sm:$0xff]
    %v545 = vld [vmem:[#allocation3 + $0xb0] sm:$0xff]
    %v546 = vld [vmem:[#allocation3 + $0xb8] sm:$0xff]
    %v547 = vld [vmem:[#allocation3 + $0xc0] sm:$0xff]
    %v548 = vld [vmem:[#allocation3 + $0xc8] sm:$0xff]
    %v549 = vld [vmem:[#allocation3 + $0xd0] sm:$0xff]
    %v550 = vld [vmem:[#allocation3 + $0xd8] sm:$0xff]
    %v551 = vld [vmem:[#allocation3 + $0xe0] sm:$0xff]
    %v552 = vld [vmem:[#allocation3 + $0xe8] sm:$0xff]
    %v553 = vld [vmem:[#allocation3 + $0xf0] sm:$0xff]
    %v554 = vld [vmem:[#allocation3 + $0xf8] sm:$0xff]
    %v555 = vld [vmem:[#allocation3 + $0x100] sm:$0xff]
    %v556 = vld [vmem:[#allocation3 + $0x108] sm:$0xff]
    %v557 = vld [vmem:[#allocation3 + $0x110] sm:$0xff]
    %v558 = vld [vmem:[#allocation3 + $0x118] sm:$0xff]
    %v559 = vld [vmem:[#allocation3 + $0x120] sm:$0xff]
    %v560 = vld [vmem:[#allocation3 + $0x128] sm:$0xff]
    %v561 = vld [vmem:[#allocation3 + $0x130] sm:$0xff]
    %v562 = vld [vmem:[#allocation3 + $0x138] sm:$0xff]
    %v563 = vld [vmem:[#allocation3 + $0x140] sm:$0xff]
    %v564 = vld [vmem:[#allocation3 + $0x148] sm:$0xff]
    %v565 = vld [vmem:[#allocation3 + $0x150] sm:$0xff]
    %v566 = vld [vmem:[#allocation3 + $0x158] sm:$0xff]
    %v567 = vld [vmem:[#allocation3 + $0x160] sm:$0xff]
    %v568 = vld [vmem:[#allocation3 + $0x168] sm:$0xff]
    %v569 = vld [vmem:[#allocation3 + $0x170] sm:$0xff]
    %v570 = vld [vmem:[#allocation3 + $0x178] sm:$0xff]
    %v571 = vld [vmem:[#allocation3 + $0x180] sm:$0xff]
    %v572 = vld [vmem:[#allocation3 + $0x188] sm:$0xff]
    %v573 = vld [vmem:[#allocation3 + $0x190] sm:$0xff]
    %v574 = vld [vmem:[#allocation3 + $0x198] sm:$0xff]
    %v575 = vld [vmem:[#allocation3 + $0x1a0] sm:$0xff]
    %v576 = vld [vmem:[#allocation3 + $0x1a8] sm:$0xff]
    %v577 = vld [vmem:[#allocation3 + $0x1b0] sm:$0xff]
    %v578 = vld [vmem:[#allocation3 + $0x1b8] sm:$0xff]
    %v579 = vld [vmem:[#allocation3 + $0x1c0] sm:$0xff]
    %v580 = vld [vmem:[#allocation3 + $0x1c8] sm:$0xff]
    %v581 = vld [vmem:[#allocation3 + $0x1d0] sm:$0xff]
    %v582 = vld [vmem:[#allocation3 + $0x1d8] sm:$0xff]
    %v583 = vld [vmem:[#allocation3 + $0x1e0] sm:$0xff]
    %v584 = vld [vmem:[#allocation3 + $0x1e8] sm:$0xff]
    %v585 = vld [vmem:[#allocation3 + $0x1f0] sm:$0xff]
    %v586 = vld [vmem:[#allocation3 + $0x1f8] sm:$0xff]
    %v587 = vld [vmem:[#allocation3 + $0x200] sm:$0xff]
    %v588 = vld [vmem:[#allocation3 + $0x208] sm:$0xff]
    %v589 = vld [vmem:[#allocation3 + $0x210] sm:$0xff]
    %v590 = vld [vmem:[#allocation3 + $0x218] sm:$0xff]
    %v591 = vld [vmem:[#allocation3 + $0x220] sm:$0xff]
    %v592 = vld [vmem:[#allocation3 + $0x228] sm:$0xff]
    %v593 = vld [vmem:[#allocation3 + $0x230] sm:$0xff]
    %v594 = vld [vmem:[#allocation3 + $0x238] sm:$0xff]
    %v595 = vld [vmem:[#allocation3 + $0x240] sm:$0xff]
    %v596 = vld [vmem:[#allocation3 + $0x248] sm:$0xff]
    %v597 = vld [vmem:[#allocation3 + $0x250] sm:$0xff]
    %v598 = vld [vmem:[#allocation3 + $0x258] sm:$0xff]
    %v599 = vld [vmem:[#allocation3 + $0x260] sm:$0xff]
    %v600 = vld [vmem:[#allocation3 + $0x268] sm:$0xff]
    %v601 = vld [vmem:[#allocation3 + $0x270] sm:$0xff]
    %v602 = vld [vmem:[#allocation3 + $0x278] sm:$0xff]
    %v603 = vld [vmem:[#allocation3 + $0x280] sm:$0xff]
    %v604 = vld [vmem:[#allocation3 + $0x288] sm:$0xff]
    %v605 = vld [vmem:[#allocation3 + $0x290] sm:$0xff]
    %v606 = vld [vmem:[#allocation3 + $0x298] sm:$0xff]
    %v607 = vld [vmem:[#allocation3 + $0x2a0] sm:$0xff]
    %v608 = vld [vmem:[#allocation3 + $0x2a8] sm:$0xff]
    %v609 = vld [vmem:[#allocation3 + $0x2b0] sm:$0xff]
    %v610 = vld [vmem:[#allocation3 + $0x2b8] sm:$0xff]
    %v611 = vld [vmem:[#allocation3 + $0x2c0] sm:$0xff]
    %v612 = vld [vmem:[#allocation3 + $0x2c8] sm:$0xff]
    %v613 = vld [vmem:[#allocation3 + $0x2d0] sm:$0xff]
    %v614 = vld [vmem:[#allocation3 + $0x2d8] sm:$0xff]
    %v615 = vld [vmem:[#allocation3 + $0x2e0] sm:$0xff]
    %v616 = vld [vmem:[#allocation3 + $0x2e8] sm:$0xff]
    %v617 = vld [vmem:[#allocation3 + $0x2f0] sm:$0xff]
    %v618 = vld [vmem:[#allocation3 + $0x2f8] sm:$0xff]
    %v619 = vld [vmem:[#allocation3 + $0x300] sm:$0xff]
    %v620 = vld [vmem:[#allocation3 + $0x308] sm:$0xff]
    %v621 = vld [vmem:[#allocation3 + $0x310] sm:$0xff]
    %v622 = vld [vmem:[#allocation3 + $0x318] sm:$0xff]
    %v623 = vld [vmem:[#allocation3 + $0x320] sm:$0xff]
    %v624 = vld [vmem:[#allocation3 + $0x328] sm:$0xff]
    %v625 = vld [vmem:[#allocation3 + $0x330] sm:$0xff]
    %v626 = vld [vmem:[#allocation3 + $0x338] sm:$0xff]
    %v627 = vld [vmem:[#allocation3 + $0x340] sm:$0xff]
    %v628 = vld [vmem:[#allocation3 + $0x348] sm:$0xff]
    %v629 = vld [vmem:[#allocation3 + $0x350] sm:$0xff]
    %v630 = vld [vmem:[#allocation3 + $0x358] sm:$0xff]
    %v631 = vld [vmem:[#allocation3 + $0x360] sm:$0xff]
    %v632 = vld [vmem:[#allocation3 + $0x368] sm:$0xff]
    %v633 = vld [vmem:[#allocation3 + $0x370] sm:$0xff]
    %v634 = vld [vmem:[#allocation3 + $0x378] sm:$0xff]
    %v635 = vld [vmem:[#allocation3 + $0x380] sm:$0xff]
    %v636 = vld [vmem:[#allocation3 + $0x388] sm:$0xff]
    %v637 = vld [vmem:[#allocation3 + $0x390] sm:$0xff]
    %v638 = vld [vmem:[#allocation3 + $0x398] sm:$0xff]
    %v639 = vld [vmem:[#allocation3 + $0x3a0] sm:$0xff]
    %v640 = vld [vmem:[#allocation3 + $0x3a8] sm:$0xff]
    %v641 = vld [vmem:[#allocation3 + $0x3b0] sm:$0xff]
    %v642 = vld [vmem:[#allocation3 + $0x3b8] sm:$0xff]
    %v643 = vld [vmem:[#allocation3 + $0x3c0] sm:$0xff]
    %v644 = vld [vmem:[#allocation3 + $0x3c8] sm:$0xff]
    %v645 = vld [vmem:[#allocation3 + $0x3d0] sm:$0xff]
    %v646 = vld [vmem:[#allocation3 + $0x3d8] sm:$0xff]
    %v647 = vld [vmem:[#allocation3 + $0x3e0] sm:$0xff]
    %v648 = vld [vmem:[#allocation3 + $0x3e8] sm:$0xff]
    %v649 = vld [vmem:[#allocation3 + $0x3f0] sm:$0xff]
    %v650 = vld [vmem:[#allocation3 + $0x3f8] sm:$0xff]
    %v651 = vld [vmem:[%s4] sm:$0xf]
    %v653 = vlaneseq
    %v654 = vshrl.u32 %v653, 7
    %v655 = vsub.s32 0, %v654
    %v656 = vrot.slane %v651, %v655
    %v657 = vlaneseq
    %v658 = vshrl.u32 %v657, 7
    %v659 = vsub.s32 1, %v658
    %v660 = vrot.slane %v651, %v659
    %v661 = vlaneseq
    %v662 = vshrl.u32 %v661, 7
    %v663 = vsub.s32 2, %v662
    %v664 = vrot.slane %v651, %v663
    %v665 = vlaneseq
    %v666 = vshrl.u32 %v665, 7
    %v667 = vsub.s32 3, %v666
    %v668 = vrot.slane %v651, %v667
    %v801 = vunpack.c.l.b16 %v523
    %v802 = vunpack.c.h.b16 %v523
    %v803 = vunpack.c.l.b16 %v524
    %v804 = vunpack.c.h.b16 %v524
    %v805 = vunpack.c.l.b16 %v525
    %v806 = vunpack.c.h.b16 %v525
    %v807 = vunpack.c.l.b16 %v526
    %v808 = vunpack.c.h.b16 %v526
    %v809 = vunpack.c.l.b16 %v527
    %v810 = vunpack.c.h.b16 %v527
    %v811 = vunpack.c.l.b16 %v528
    %v812 = vunpack.c.h.b16 %v528
    %v813 = vunpack.c.l.b16 %v529
    %v814 = vunpack.c.h.b16 %v529
    %v815 = vunpack.c.l.b16 %v530
    %v816 = vunpack.c.h.b16 %v530
    %v817 = vunpack.c.l.b16 %v531
    %v818 = vunpack.c.h.b16 %v531
    %v819 = vunpack.c.l.b16 %v532
    %v820 = vunpack.c.h.b16 %v532
    %v821 = vunpack.c.l.b16 %v533
    %v822 = vunpack.c.h.b16 %v533
    %v823 = vunpack.c.l.b16 %v534
    %v824 = vunpack.c.h.b16 %v534
    %v825 = vunpack.c.l.b16 %v535
    %v826 = vunpack.c.h.b16 %v535
    %v827 = vunpack.c.l.b16 %v536
    %v828 = vunpack.c.h.b16 %v536
    %v829 = vunpack.c.l.b16 %v537
    %v830 = vunpack.c.h.b16 %v537
    %v831 = vunpack.c.l.b16 %v538
    %v832 = vunpack.c.h.b16 %v538
    %v833 = vunpack.c.l.b16 %v539
    %v834 = vunpack.c.h.b16 %v539
    %v835 = vunpack.c.l.b16 %v540
    %v836 = vunpack.c.h.b16 %v540
    %v837 = vunpack.c.l.b16 %v541
    %v838 = vunpack.c.h.b16 %v541
    %v839 = vunpack.c.l.b16 %v542
    %v840 = vunpack.c.h.b16 %v542
    %v841 = vunpack.c.l.b16 %v543
    %v842 = vunpack.c.h.b16 %v543
    %v843 = vunpack.c.l.b16 %v544
    %v844 = vunpack.c.h.b16 %v544
    %v845 = vunpack.c.l.b16 %v545
    %v846 = vunpack.c.h.b16 %v545
    %v847 = vunpack.c.l.b16 %v546
    %v848 = vunpack.c.h.b16 %v546
    %v849 = vunpack.c.l.b16 %v547
    %v850 = vunpack.c.h.b16 %v547
    %v851 = vunpack.c.l.b16 %v548
    %v852 = vunpack.c.h.b16 %v548
    %v853 = vunpack.c.l.b16 %v549
    %v854 = vunpack.c.h.b16 %v549
    %v855 = vunpack.c.l.b16 %v550
    %v856 = vunpack.c.h.b16 %v550
    %v857 = vunpack.c.l.b16 %v551
    %v858 = vunpack.c.h.b16 %v551
    %v859 = vunpack.c.l.b16 %v552
    %v860 = vunpack.c.h.b16 %v552
    %v861 = vunpack.c.l.b16 %v553
    %v862 = vunpack.c.h.b16 %v553
    %v863 = vunpack.c.l.b16 %v554
    %v864 = vunpack.c.h.b16 %v554
    %v865 = vunpack.c.l.b16 %v555
    %v866 = vunpack.c.h.b16 %v555
    %v867 = vunpack.c.l.b16 %v556
    %v868 = vunpack.c.h.b16 %v556
    %v869 = vunpack.c.l.b16 %v557
    %v870 = vunpack.c.h.b16 %v557
    %v871 = vunpack.c.l.b16 %v558
    %v872 = vunpack.c.h.b16 %v558
    %v873 = vunpack.c.l.b16 %v559
    %v874 = vunpack.c.h.b16 %v559
    %v875 = vunpack.c.l.b16 %v560
    %v876 = vunpack.c.h.b16 %v560
    %v877 = vunpack.c.l.b16 %v561
    %v878 = vunpack.c.h.b16 %v561
    %v879 = vunpack.c.l.b16 %v562
    %v880 = vunpack.c.h.b16 %v562
    %v881 = vunpack.c.l.b16 %v563
    %v882 = vunpack.c.h.b16 %v563
    %v883 = vunpack.c.l.b16 %v564
    %v884 = vunpack.c.h.b16 %v564
    %v885 = vunpack.c.l.b16 %v565
    %v886 = vunpack.c.h.b16 %v565
    %v887 = vunpack.c.l.b16 %v566
    %v888 = vunpack.c.h.b16 %v566
    %v889 = vunpack.c.l.b16 %v567
    %v890 = vunpack.c.h.b16 %v567
    %v891 = vunpack.c.l.b16 %v568
    %v892 = vunpack.c.h.b16 %v568
    %v893 = vunpack.c.l.b16 %v569
    %v894 = vunpack.c.h.b16 %v569
    %v895 = vunpack.c.l.b16 %v570
    %v896 = vunpack.c.h.b16 %v570
    %v897 = vunpack.c.l.b16 %v571
    %v898 = vunpack.c.h.b16 %v571
    %v899 = vunpack.c.l.b16 %v572
    %v900 = vunpack.c.h.b16 %v572
    %v901 = vunpack.c.l.b16 %v573
    %v902 = vunpack.c.h.b16 %v573
    %v903 = vunpack.c.l.b16 %v574
    %v904 = vunpack.c.h.b16 %v574
    %v905 = vunpack.c.l.b16 %v575
    %v906 = vunpack.c.h.b16 %v575
    %v907 = vunpack.c.l.b16 %v576
    %v908 = vunpack.c.h.b16 %v576
    %v909 = vunpack.c.l.b16 %v577
    %v910 = vunpack.c.h.b16 %v577
    %v911 = vunpack.c.l.b16 %v578
    %v912 = vunpack.c.h.b16 %v578
    %v913 = vunpack.c.l.b16 %v579
    %v914 = vunpack.c.h.b16 %v579
    %v915 = vunpack.c.l.b16 %v580
    %v916 = vunpack.c.h.b16 %v580
    %v917 = vunpack.c.l.b16 %v581
    %v918 = vunpack.c.h.b16 %v581
    %v919 = vunpack.c.l.b16 %v582
    %v920 = vunpack.c.h.b16 %v582
    %v921 = vunpack.c.l.b16 %v583
    %v922 = vunpack.c.h.b16 %v583
    %v923 = vunpack.c.l.b16 %v584
    %v924 = vunpack.c.h.b16 %v584
    %v925 = vunpack.c.l.b16 %v585
    %v926 = vunpack.c.h.b16 %v585
    %v927 = vunpack.c.l.b16 %v586
    %v928 = vunpack.c.h.b16 %v586
    %v929 = vunpack.c.l.b16 %v587
    %v930 = vunpack.c.h.b16 %v587
    %v931 = vunpack.c.l.b16 %v588
    %v932 = vunpack.c.h.b16 %v588
    %v933 = vunpack.c.l.b16 %v589
    %v934 = vunpack.c.h.b16 %v589
    %v935 = vunpack.c.l.b16 %v590
    %v936 = vunpack.c.h.b16 %v590
    %v937 = vunpack.c.l.b16 %v591
    %v938 = vunpack.c.h.b16 %v591
    %v939 = vunpack.c.l.b16 %v592
    %v940 = vunpack.c.h.b16 %v592
    %v941 = vunpack.c.l.b16 %v593
    %v942 = vunpack.c.h.b16 %v593
    %v943 = vunpack.c.l.b16 %v594
    %v944 = vunpack.c.h.b16 %v594
    %v945 = vunpack.c.l.b16 %v595
    %v946 = vunpack.c.h.b16 %v595
    %v947 = vunpack.c.l.b16 %v596
    %v948 = vunpack.c.h.b16 %v596
    %v949 = vunpack.c.l.b16 %v597
    %v950 = vunpack.c.h.b16 %v597
    %v951 = vunpack.c.l.b16 %v598
    %v952 = vunpack.c.h.b16 %v598
    %v953 = vunpack.c.l.b16 %v599
    %v954 = vunpack.c.h.b16 %v599
    %v955 = vunpack.c.l.b16 %v600
    %v956 = vunpack.c.h.b16 %v600
    %v957 = vunpack.c.l.b16 %v601
    %v958 = vunpack.c.h.b16 %v601
    %v959 = vunpack.c.l.b16 %v602
    %v960 = vunpack.c.h.b16 %v602
    %v961 = vunpack.c.l.b16 %v603
    %v962 = vunpack.c.h.b16 %v603
    %v963 = vunpack.c.l.b16 %v604
    %v964 = vunpack.c.h.b16 %v604
    %v965 = vunpack.c.l.b16 %v605
    %v966 = vunpack.c.h.b16 %v605
    %v967 = vunpack.c.l.b16 %v606
    %v968 = vunpack.c.h.b16 %v606
    %v969 = vunpack.c.l.b16 %v607
    %v970 = vunpack.c.h.b16 %v607
    %v971 = vunpack.c.l.b16 %v608
    %v972 = vunpack.c.h.b16 %v608
    %v973 = vunpack.c.l.b16 %v609
    %v974 = vunpack.c.h.b16 %v609
    %v975 = vunpack.c.l.b16 %v610
    %v976 = vunpack.c.h.b16 %v610
    %v977 = vunpack.c.l.b16 %v611
    %v978 = vunpack.c.h.b16 %v611
    %v979 = vunpack.c.l.b16 %v612
    %v980 = vunpack.c.h.b16 %v612
    %v981 = vunpack.c.l.b16 %v613
    %v982 = vunpack.c.h.b16 %v613
    %v983 = vunpack.c.l.b16 %v614
    %v984 = vunpack.c.h.b16 %v614
    %v985 = vunpack.c.l.b16 %v615
    %v986 = vunpack.c.h.b16 %v615
    %v987 = vunpack.c.l.b16 %v616
    %v988 = vunpack.c.h.b16 %v616
    %v989 = vunpack.c.l.b16 %v617
    %v990 = vunpack.c.h.b16 %v617
    %v991 = vunpack.c.l.b16 %v618
    %v992 = vunpack.c.h.b16 %v618
    %v993 = vunpack.c.l.b16 %v619
    %v994 = vunpack.c.h.b16 %v619
    %v995 = vunpack.c.l.b16 %v620
    %v996 = vunpack.c.h.b16 %v620
    %v997 = vunpack.c.l.b16 %v621
    %v998 = vunpack.c.h.b16 %v621
    %v999 = vunpack.c.l.b16 %v622
    %v1000 = vunpack.c.h.b16 %v622
    %v1001 = vunpack.c.l.b16 %v623
    %v1002 = vunpack.c.h.b16 %v623
    %v1003 = vunpack.c.l.b16 %v624
    %v1004 = vunpack.c.h.b16 %v624
    %v1005 = vunpack.c.l.b16 %v625
    %v1006 = vunpack.c.h.b16 %v625
    %v1007 = vunpack.c.l.b16 %v626
    %v1008 = vunpack.c.h.b16 %v626
    %v1009 = vunpack.c.l.b16 %v627
    %v1010 = vunpack.c.h.b16 %v627
    %v1011 = vunpack.c.l.b16 %v628
    %v1012 = vunpack.c.h.b16 %v628
    %v1013 = vunpack.c.l.b16 %v629
    %v1014 = vunpack.c.h.b16 %v629
    %v1015 = vunpack.c.l.b16 %v630
    %v1016 = vunpack.c.h.b16 %v630
    %v1017 = vunpack.c.l.b16 %v631
    %v1018 = vunpack.c.h.b16 %v631
    %v1019 = vunpack.c.l.b16 %v632
    %v1020 = vunpack.c.h.b16 %v632
    %v1021 = vunpack.c.l.b16 %v633
    %v1022 = vunpack.c.h.b16 %v633
    %v1023 = vunpack.c.l.b16 %v634
    %v1024 = vunpack.c.h.b16 %v634
    %v1025 = vunpack.c.l.b16 %v635
    %v1026 = vunpack.c.h.b16 %v635
    %v1027 = vunpack.c.l.b16 %v636
    %v1028 = vunpack.c.h.b16 %v636
    %v1029 = vunpack.c.l.b16 %v637
    %v1030 = vunpack.c.h.b16 %v637
    %v1031 = vunpack.c.l.b16 %v638
    %v1032 = vunpack.c.h.b16 %v638
    %v1033 = vunpack.c.l.b16 %v639
    %v1034 = vunpack.c.h.b16 %v639
    %v1035 = vunpack.c.l.b16 %v640
    %v1036 = vunpack.c.h.b16 %v640
    %v1037 = vunpack.c.l.b16 %v641
    %v1038 = vunpack.c.h.b16 %v641
    %v1039 = vunpack.c.l.b16 %v642
    %v1040 = vunpack.c.h.b16 %v642
    %v1041 = vunpack.c.l.b16 %v643
    %v1042 = vunpack.c.h.b16 %v643
    %v1043 = vunpack.c.l.b16 %v644
    %v1044 = vunpack.c.h.b16 %v644
    %v1045 = vunpack.c.l.b16 %v645
    %v1046 = vunpack.c.h.b16 %v645
    %v1047 = vunpack.c.l.b16 %v646
    %v1048 = vunpack.c.h.b16 %v646
    %v1049 = vunpack.c.l.b16 %v647
    %v1050 = vunpack.c.h.b16 %v647
    %v1051 = vunpack.c.l.b16 %v648
    %v1052 = vunpack.c.h.b16 %v648
    %v1053 = vunpack.c.l.b16 %v649
    %v1054 = vunpack.c.h.b16 %v649
    %v1055 = vunpack.c.l.b16 %v650
    %v1056 = vunpack.c.h.b16 %v650
    %v1057 = vpack.c.b16 %v805, %v801
    %v1058 = vpack.c.b16 %v806, %v802
    %v1059 = vpack.c.b16 %v807, %v803
    %v1060 = vpack.c.b16 %v808, %v804
    %v1061 = vpack.c.b16 %v813, %v809
    %v1062 = vpack.c.b16 %v814, %v810
    %v1063 = vpack.c.b16 %v815, %v811
    %v1064 = vpack.c.b16 %v816, %v812
    %v1065 = vpack.c.b16 %v821, %v817
    %v1066 = vpack.c.b16 %v822, %v818
    %v1067 = vpack.c.b16 %v823, %v819
    %v1068 = vpack.c.b16 %v824, %v820
    %v1069 = vpack.c.b16 %v829, %v825
    %v1070 = vpack.c.b16 %v830, %v826
    %v1071 = vpack.c.b16 %v831, %v827
    %v1072 = vpack.c.b16 %v832, %v828
    %v1073 = vpack.c.b16 %v837, %v833
    %v1074 = vpack.c.b16 %v838, %v834
    %v1075 = vpack.c.b16 %v839, %v835
    %v1076 = vpack.c.b16 %v840, %v836
    %v1077 = vpack.c.b16 %v845, %v841
    %v1078 = vpack.c.b16 %v846, %v842
    %v1079 = vpack.c.b16 %v847, %v843
    %v1080 = vpack.c.b16 %v848, %v844
    %v1081 = vpack.c.b16 %v853, %v849
    %v1082 = vpack.c.b16 %v854, %v850
    %v1083 = vpack.c.b16 %v855, %v851
    %v1084 = vpack.c.b16 %v856, %v852
    %v1085 = vpack.c.b16 %v861, %v857
    %v1086 = vpack.c.b16 %v862, %v858
    %v1087 = vpack.c.b16 %v863, %v859
    %v1088 = vpack.c.b16 %v864, %v860
    %v1089 = vpack.c.b16 %v869, %v865
    %v1090 = vpack.c.b16 %v870, %v866
    %v1091 = vpack.c.b16 %v871, %v867
    %v1092 = vpack.c.b16 %v872, %v868
    %v1093 = vpack.c.b16 %v877, %v873
    %v1094 = vpack.c.b16 %v878, %v874
    %v1095 = vpack.c.b16 %v879, %v875
    %v1096 = vpack.c.b16 %v880, %v876
    %v1097 = vpack.c.b16 %v885, %v881
    %v1098 = vpack.c.b16 %v886, %v882
    %v1099 = vpack.c.b16 %v887, %v883
    %v1100 = vpack.c.b16 %v888, %v884
    %v1101 = vpack.c.b16 %v893, %v889
    %v1102 = vpack.c.b16 %v894, %v890
    %v1103 = vpack.c.b16 %v895, %v891
    %v1104 = vpack.c.b16 %v896, %v892
    %v1105 = vpack.c.b16 %v901, %v897
    %v1106 = vpack.c.b16 %v902, %v898
    %v1107 = vpack.c.b16 %v903, %v899
    %v1108 = vpack.c.b16 %v904, %v900
    %v1109 = vpack.c.b16 %v909, %v905
    %v1110 = vpack.c.b16 %v910, %v906
    %v1111 = vpack.c.b16 %v911, %v907
    %v1112 = vpack.c.b16 %v912, %v908
    %v1113 = vpack.c.b16 %v917, %v913
    %v1114 = vpack.c.b16 %v918, %v914
    %v1115 = vpack.c.b16 %v919, %v915
    %v1116 = vpack.c.b16 %v920, %v916
    %v1117 = vpack.c.b16 %v925, %v921
    %v1118 = vpack.c.b16 %v926, %v922
    %v1119 = vpack.c.b16 %v927, %v923
    %v1120 = vpack.c.b16 %v928, %v924
    %v1121 = vpack.c.b16 %v933, %v929
    %v1122 = vpack.c.b16 %v934, %v930
    %v1123 = vpack.c.b16 %v935, %v931
    %v1124 = vpack.c.b16 %v936, %v932
    %v1125 = vpack.c.b16 %v941, %v937
    %v1126 = vpack.c.b16 %v942, %v938
    %v1127 = vpack.c.b16 %v943, %v939
    %v1128 = vpack.c.b16 %v944, %v940
    %v1129 = vpack.c.b16 %v949, %v945
    %v1130 = vpack.c.b16 %v950, %v946
    %v1131 = vpack.c.b16 %v951, %v947
    %v1132 = vpack.c.b16 %v952, %v948
    %v1133 = vpack.c.b16 %v957, %v953
    %v1134 = vpack.c.b16 %v958, %v954
    %v1135 = vpack.c.b16 %v959, %v955
    %v1136 = vpack.c.b16 %v960, %v956
    %v1137 = vpack.c.b16 %v965, %v961
    %v1138 = vpack.c.b16 %v966, %v962
    %v1139 = vpack.c.b16 %v967, %v963
    %v1140 = vpack.c.b16 %v968, %v964
    %v1141 = vpack.c.b16 %v973, %v969
    %v1142 = vpack.c.b16 %v974, %v970
    %v1143 = vpack.c.b16 %v975, %v971
    %v1144 = vpack.c.b16 %v976, %v972
    %v1145 = vpack.c.b16 %v981, %v977
    %v1146 = vpack.c.b16 %v982, %v978
    %v1147 = vpack.c.b16 %v983, %v979
    %v1148 = vpack.c.b16 %v984, %v980
    %v1149 = vpack.c.b16 %v989, %v985
    %v1150 = vpack.c.b16 %v990, %v986
    %v1151 = vpack.c.b16 %v991, %v987
    %v1152 = vpack.c.b16 %v992, %v988
    %v1153 = vpack.c.b16 %v997, %v993
    %v1154 = vpack.c.b16 %v998, %v994
    %v1155 = vpack.c.b16 %v999, %v995
    %v1156 = vpack.c.b16 %v1000, %v996
    %v1157 = vpack.c.b16 %v1005, %v1001
    %v1158 = vpack.c.b16 %v1006, %v1002
    %v1159 = vpack.c.b16 %v1007, %v1003
    %v1160 = vpack.c.b16 %v1008, %v1004
    %v1161 = vpack.c.b16 %v1013, %v1009
    %v1162 = vpack.c.b16 %v1014, %v1010
    %v1163 = vpack.c.b16 %v1015, %v1011
    %v1164 = vpack.c.b16 %v1016, %v1012
    %v1165 = vpack.c.b16 %v1021, %v1017
    %v1166 = vpack.c.b16 %v1022, %v1018
    %v1167 = vpack.c.b16 %v1023, %v1019
    %v1168 = vpack.c.b16 %v1024, %v1020
    %v1169 = vpack.c.b16 %v1029, %v1025
    %v1170 = vpack.c.b16 %v1030, %v1026
    %v1171 = vpack.c.b16 %v1031, %v1027
    %v1172 = vpack.c.b16 %v1032, %v1028
    %v1173 = vpack.c.b16 %v1037, %v1033
    %v1174 = vpack.c.b16 %v1038, %v1034
    %v1175 = vpack.c.b16 %v1039, %v1035
    %v1176 = vpack.c.b16 %v1040, %v1036
    %v1177 = vpack.c.b16 %v1045, %v1041
    %v1178 = vpack.c.b16 %v1046, %v1042
    %v1179 = vpack.c.b16 %v1047, %v1043
    %v1180 = vpack.c.b16 %v1048, %v1044
    %v1181 = vpack.c.b16 %v1053, %v1049
    %v1182 = vpack.c.b16 %v1054, %v1050
    %v1183 = vpack.c.b16 %v1055, %v1051
    %v1184 = vpack.c.b16 %v1056, %v1052
    %1313 = vmatprep.subr.bf16.mxu0 %v1086
    %1314 = vmatpush1.bf16.msra.mxu0 %v1085
    %1315 = vmatprep.subr.bf16.mxu0 %v1082
    %1316 = vmatpush1.bf16.msra.mxu0 %v1081
    %1317 = vmatprep.subr.bf16.mxu0 %v1078
    %1318 = vmatpush1.bf16.msra.mxu0 %v1077
    %1319 = vmatprep.subr.bf16.mxu0 %v1074
    %1320 = vmatpush1.bf16.msra.mxu0 %v1073
    %1321 = vmatprep.subr.bf16.mxu0 %v1070
    %1322 = vmatpush1.bf16.msra.mxu0 %v1069
    %1323 = vmatprep.subr.bf16.mxu0 %v1066
    %1324 = vmatpush1.bf16.msra.mxu0 %v1065
    %1325 = vmatprep.subr.bf16.mxu0 %v1062
    %1326 = vmatpush1.bf16.msra.mxu0 %v1061
    %1327 = vmatprep.subr.bf16.mxu0 %v1058
    %1328 = vmatpush1.bf16.msra.mxu0 %v1057
    %1329 = vmatprep.subr.bf16.mxu0 %v1118
    %1330 = vmatpush2.bf16.msra.mxu0 %v1117
    %1331 = vmatprep.subr.bf16.mxu0 %v1114
    %1332 = vmatpush2.bf16.msra.mxu0 %v1113
    %1333 = vmatprep.subr.bf16.mxu0 %v1110
    %1334 = vmatpush2.bf16.msra.mxu0 %v1109
    %1335 = vmatprep.subr.bf16.mxu0 %v1106
    %1336 = vmatpush2.bf16.msra.mxu0 %v1105
    %1337 = vmatprep.subr.bf16.mxu0 %v1102
    %1338 = vmatpush2.bf16.msra.mxu0 %v1101
    %1339 = vmatprep.subr.bf16.mxu0 %v1098
    %1340 = vmatpush2.bf16.msra.mxu0 %v1097
    %1341 = vmatprep.subr.bf16.mxu0 %v1094
    %1342 = vmatpush2.bf16.msra.mxu0 %v1093
    %1343 = vmatprep.subr.bf16.mxu0 %v1090
    %1344 = vmatpush2.bf16.msra.mxu0 %v1089
    %1345 = vmatprep.mubr.bf16.mxu0 %v492
    %1346 = vmatmul.mubr.bf16.gmra.mxu0 %v491
    %v1347 = vpop.f32.mrf.mxu0
    %v1348 = vadd.f32 %v656, %v1347
    %v1349 = vpop.f32.mrf.mxu0
    %v1350 = vadd.f32 %v660, %v1349
    %v1351 = vpop.f32.mrf.mxu0
    %v1352 = vadd.f32 %v656, %v1351
    %v1353 = vpop.f32.mrf.mxu0
    %v1354 = vadd.f32 %v660, %v1353
    %1355 = vmatprep.mubr.bf16.mxu0 %v496
    %1356 = vmatmul.mubr.bf16.gmra.mxu0 %v495
    %v1357 = vpop.f32.mrf.mxu0
    %v1358 = vadd.f32 %v656, %v1357
    %v1359 = vpop.f32.mrf.mxu0
    %v1360 = vadd.f32 %v660, %v1359
    %v1361 = vpop.f32.mrf.mxu0
    %v1362 = vadd.f32 %v656, %v1361
    %v1363 = vpop.f32.mrf.mxu0
    %v1364 = vadd.f32 %v660, %v1363
    %1365 = vmatprep.mubr.bf16.mxu0 %v500
    %1366 = vmatmul.mubr.bf16.gmra.mxu0 %v499
    %v1367 = vpop.f32.mrf.mxu0
    %v1368 = vadd.f32 %v656, %v1367
    %v1369 = vpop.f32.mrf.mxu0
    %v1370 = vadd.f32 %v660, %v1369
    %v1371 = vpop.f32.mrf.mxu0
    %v1372 = vadd.f32 %v656, %v1371
    %v1373 = vpop.f32.mrf.mxu0
    %v1374 = vadd.f32 %v660, %v1373
    %1375 = vmatprep.mubr.bf16.mxu0 %v504
    %1376 = vmatmul.mubr.bf16.gmra.mxu0 %v503
    %v1377 = vpop.f32.mrf.mxu0
    %v1378 = vadd.f32 %v656, %v1377
    %v1379 = vpop.f32.mrf.mxu0
    %v1380 = vadd.f32 %v660, %v1379
    %v1381 = vpop.f32.mrf.mxu0
    %v1382 = vadd.f32 %v656, %v1381
    %v1383 = vpop.f32.mrf.mxu0
    %v1384 = vadd.f32 %v660, %v1383
    %1385 = vmatprep.mubr.bf16.mxu0 %v508
    %1386 = vmatmul.mubr.bf16.gmra.mxu0 %v507
    %v1387 = vpop.f32.mrf.mxu0
    %v1388 = vadd.f32 %v656, %v1387
    %v1389 = vpop.f32.mrf.mxu0
    %v1390 = vadd.f32 %v660, %v1389
    %v1391 = vpop.f32.mrf.mxu0
    %v1392 = vadd.f32 %v656, %v1391
    %v1393 = vpop.f32.mrf.mxu0
    %v1394 = vadd.f32 %v660, %v1393
    %1395 = vmatprep.mubr.bf16.mxu0 %v512
    %1396 = vmatmul.mubr.bf16.gmra.mxu0 %v511
    %v1397 = vpop.f32.mrf.mxu0
    %v1398 = vadd.f32 %v656, %v1397
    %v1399 = vpop.f32.mrf.mxu0
    %v1400 = vadd.f32 %v660, %v1399
    %v1401 = vpop.f32.mrf.mxu0
    %v1402 = vadd.f32 %v656, %v1401
    %v1403 = vpop.f32.mrf.mxu0
    %v1404 = vadd.f32 %v660, %v1403
    %1405 = vmatprep.mubr.bf16.mxu0 %v516
    %1406 = vmatmul.mubr.bf16.gmra.mxu0 %v515
    %v1407 = vpop.f32.mrf.mxu0
    %v1408 = vadd.f32 %v656, %v1407
    %v1409 = vpop.f32.mrf.mxu0
    %v1410 = vadd.f32 %v660, %v1409
    %v1411 = vpop.f32.mrf.mxu0
    %v1412 = vadd.f32 %v656, %v1411
    %v1413 = vpop.f32.mrf.mxu0
    %v1414 = vadd.f32 %v660, %v1413
    %1415 = vmatprep.mubr.bf16.mxu0 %v520
    %1416 = vmatmul.mubr.bf16.gmra.mxu0 %v519
    %v1417 = vpop.f32.mrf.mxu0
    %v1418 = vadd.f32 %v656, %v1417
    %v1419 = vpop.f32.mrf.mxu0
    %v1420 = vadd.f32 %v660, %v1419
    %v1421 = vpop.f32.mrf.mxu0
    %v1422 = vadd.f32 %v656, %v1421
    %v1423 = vpop.f32.mrf.mxu0
    %v1424 = vadd.f32 %v660, %v1423
    %1425 = vdwg.mxu0
    %1426 = vmatprep.subr.bf16.mxu0 %v1150
    %1427 = vmatpush1.bf16.msra.mxu0 %v1149
    %1428 = vmatprep.subr.bf16.mxu0 %v1146
    %1429 = vmatpush1.bf16.msra.mxu0 %v1145
    %1430 = vmatprep.subr.bf16.mxu0 %v1142
    %1431 = vmatpush1.bf16.msra.mxu0 %v1141
    %1432 = vmatprep.subr.bf16.mxu0 %v1138
    %1433 = vmatpush1.bf16.msra.mxu0 %v1137
    %1434 = vmatprep.subr.bf16.mxu0 %v1134
    %1435 = vmatpush1.bf16.msra.mxu0 %v1133
    %1436 = vmatprep.subr.bf16.mxu0 %v1130
    %1437 = vmatpush1.bf16.msra.mxu0 %v1129
    %1438 = vmatprep.subr.bf16.mxu0 %v1126
    %1439 = vmatpush1.bf16.msra.mxu0 %v1125
    %1440 = vmatprep.subr.bf16.mxu0 %v1122
    %1441 = vmatpush1.bf16.msra.mxu0 %v1121
    %1442 = vmatprep.subr.bf16.mxu0 %v1182
    %1443 = vmatpush2.bf16.msra.mxu0 %v1181
    %1444 = vmatprep.subr.bf16.mxu0 %v1178
    %1445 = vmatpush2.bf16.msra.mxu0 %v1177
    %1446 = vmatprep.subr.bf16.mxu0 %v1174
    %1447 = vmatpush2.bf16.msra.mxu0 %v1173
    %1448 = vmatprep.subr.bf16.mxu0 %v1170
    %1449 = vmatpush2.bf16.msra.mxu0 %v1169
    %1450 = vmatprep.subr.bf16.mxu0 %v1166
    %1451 = vmatpush2.bf16.msra.mxu0 %v1165
    %1452 = vmatprep.subr.bf16.mxu0 %v1162
    %1453 = vmatpush2.bf16.msra.mxu0 %v1161
    %1454 = vmatprep.subr.bf16.mxu0 %v1158
    %1455 = vmatpush2.bf16.msra.mxu0 %v1157
    %1456 = vmatprep.subr.bf16.mxu0 %v1154
    %1457 = vmatpush2.bf16.msra.mxu0 %v1153
    %1458 = vmatprep.mubr.bf16.mxu0 %v494
    %1459 = vmatmul.mubr.bf16.gmra.mxu0 %v493
    %v1460 = vpop.f32.mrf.mxu0
    %v1461 = vadd.f32 %v1348, %v1460
    %v1462 = vpop.f32.mrf.mxu0
    %v1463 = vadd.f32 %v1350, %v1462
    %v1464 = vpop.f32.mrf.mxu0
    %v1465 = vadd.f32 %v1352, %v1464
    %v1466 = vpop.f32.mrf.mxu0
    %v1467 = vadd.f32 %v1354, %v1466
    %1468 = vmatprep.mubr.bf16.mxu0 %v498
    %1469 = vmatmul.mubr.bf16.gmra.mxu0 %v497
    %v1470 = vpop.f32.mrf.mxu0
    %v1471 = vadd.f32 %v1358, %v1470
    %v1472 = vpop.f32.mrf.mxu0
    %v1473 = vadd.f32 %v1360, %v1472
    %v1474 = vpop.f32.mrf.mxu0
    %v1475 = vadd.f32 %v1362, %v1474
    %v1476 = vpop.f32.mrf.mxu0
    %v1477 = vadd.f32 %v1364, %v1476
    %1478 = vmatprep.mubr.bf16.mxu0 %v502
    %1479 = vmatmul.mubr.bf16.gmra.mxu0 %v501
    %v1480 = vpop.f32.mrf.mxu0
    %v1481 = vadd.f32 %v1368, %v1480
    %v1482 = vpop.f32.mrf.mxu0
    %v1483 = vadd.f32 %v1370, %v1482
    %v1484 = vpop.f32.mrf.mxu0
    %v1485 = vadd.f32 %v1372, %v1484
    %v1486 = vpop.f32.mrf.mxu0
    %v1487 = vadd.f32 %v1374, %v1486
    %1488 = vmatprep.mubr.bf16.mxu0 %v506
    %1489 = vmatmul.mubr.bf16.gmra.mxu0 %v505
    %v1490 = vpop.f32.mrf.mxu0
    %v1491 = vadd.f32 %v1378, %v1490
    %v1492 = vpop.f32.mrf.mxu0
    %v1493 = vadd.f32 %v1380, %v1492
    %v1494 = vpop.f32.mrf.mxu0
    %v1495 = vadd.f32 %v1382, %v1494
    %v1496 = vpop.f32.mrf.mxu0
    %v1497 = vadd.f32 %v1384, %v1496
    %1498 = vmatprep.mubr.bf16.mxu0 %v510
    %1499 = vmatmul.mubr.bf16.gmra.mxu0 %v509
    %v1500 = vpop.f32.mrf.mxu0
    %v1501 = vadd.f32 %v1388, %v1500
    %v1502 = vpop.f32.mrf.mxu0
    %v1503 = vadd.f32 %v1390, %v1502
    %v1504 = vpop.f32.mrf.mxu0
    %v1505 = vadd.f32 %v1392, %v1504
    %v1506 = vpop.f32.mrf.mxu0
    %v1507 = vadd.f32 %v1394, %v1506
    %1508 = vmatprep.mubr.bf16.mxu0 %v514
    %1509 = vmatmul.mubr.bf16.gmra.mxu0 %v513
    %v1510 = vpop.f32.mrf.mxu0
    %v1511 = vadd.f32 %v1398, %v1510
    %v1512 = vpop.f32.mrf.mxu0
    %v1513 = vadd.f32 %v1400, %v1512
    %v1514 = vpop.f32.mrf.mxu0
    %v1515 = vadd.f32 %v1402, %v1514
    %v1516 = vpop.f32.mrf.mxu0
    %v1517 = vadd.f32 %v1404, %v1516
    %1518 = vmatprep.mubr.bf16.mxu0 %v518
    %1519 = vmatmul.mubr.bf16.gmra.mxu0 %v517
    %v1520 = vpop.f32.mrf.mxu0
    %v1521 = vadd.f32 %v1408, %v1520
    %v1522 = vpop.f32.mrf.mxu0
    %v1523 = vadd.f32 %v1410, %v1522
    %v1524 = vpop.f32.mrf.mxu0
    %v1525 = vadd.f32 %v1412, %v1524
    %v1526 = vpop.f32.mrf.mxu0
    %v1527 = vadd.f32 %v1414, %v1526
    %1528 = vmatprep.mubr.bf16.mxu0 %v522
    %1529 = vmatmul.mubr.bf16.gmra.mxu0 %v521
    %v1530 = vpop.f32.mrf.mxu0
    %v1531 = vadd.f32 %v1418, %v1530
    %v1532 = vpop.f32.mrf.mxu0
    %v1533 = vadd.f32 %v1420, %v1532
    %v1534 = vpop.f32.mrf.mxu0
    %v1535 = vadd.f32 %v1422, %v1534
    %v1536 = vpop.f32.mrf.mxu0
    %v1537 = vadd.f32 %v1424, %v1536
    %1538 = vdwg.mxu0
    %1539 = vmatprep.subr.bf16.mxu0 %v1088
    %1540 = vmatpush1.bf16.msra.mxu0 %v1087
    %1541 = vmatprep.subr.bf16.mxu0 %v1084
    %1542 = vmatpush1.bf16.msra.mxu0 %v1083
    %1543 = vmatprep.subr.bf16.mxu0 %v1080
    %1544 = vmatpush1.bf16.msra.mxu0 %v1079
    %1545 = vmatprep.subr.bf16.mxu0 %v1076
    %1546 = vmatpush1.bf16.msra.mxu0 %v1075
    %1547 = vmatprep.subr.bf16.mxu0 %v1072
    %1548 = vmatpush1.bf16.msra.mxu0 %v1071
    %1549 = vmatprep.subr.bf16.mxu0 %v1068
    %1550 = vmatpush1.bf16.msra.mxu0 %v1067
    %1551 = vmatprep.subr.bf16.mxu0 %v1064
    %1552 = vmatpush1.bf16.msra.mxu0 %v1063
    %1553 = vmatprep.subr.bf16.mxu0 %v1060
    %1554 = vmatpush1.bf16.msra.mxu0 %v1059
    %1555 = vmatprep.subr.bf16.mxu0 %v1120
    %1556 = vmatpush2.bf16.msra.mxu0 %v1119
    %1557 = vmatprep.subr.bf16.mxu0 %v1116
    %1558 = vmatpush2.bf16.msra.mxu0 %v1115
    %1559 = vmatprep.subr.bf16.mxu0 %v1112
    %1560 = vmatpush2.bf16.msra.mxu0 %v1111
    %1561 = vmatprep.subr.bf16.mxu0 %v1108
    %1562 = vmatpush2.bf16.msra.mxu0 %v1107
    %1563 = vmatprep.subr.bf16.mxu0 %v1104
    %1564 = vmatpush2.bf16.msra.mxu0 %v1103
    %1565 = vmatprep.subr.bf16.mxu0 %v1100
    %1566 = vmatpush2.bf16.msra.mxu0 %v1099
    %1567 = vmatprep.subr.bf16.mxu0 %v1096
    %1568 = vmatpush2.bf16.msra.mxu0 %v1095
    %1569 = vmatprep.subr.bf16.mxu0 %v1092
    %1570 = vmatpush2.bf16.msra.mxu0 %v1091
    %1571 = vmatprep.mubr.bf16.mxu0 %v492
    %1572 = vmatmul.mubr.bf16.gmra.mxu0 %v491
    %v1573 = vpop.f32.mrf.mxu0
    %v1574 = vadd.f32 %v664, %v1573
    %v1575 = vpop.f32.mrf.mxu0
    %v1576 = vadd.f32 %v668, %v1575
    %v1577 = vpop.f32.mrf.mxu0
    %v1578 = vadd.f32 %v664, %v1577
    %v1579 = vpop.f32.mrf.mxu0
    %v1580 = vadd.f32 %v668, %v1579
    %1581 = vmatprep.mubr.bf16.mxu0 %v496
    %1582 = vmatmul.mubr.bf16.gmra.mxu0 %v495
    %v1583 = vpop.f32.mrf.mxu0
    %v1584 = vadd.f32 %v664, %v1583
    %v1585 = vpop.f32.mrf.mxu0
    %v1586 = vadd.f32 %v668, %v1585
    %v1587 = vpop.f32.mrf.mxu0
    %v1588 = vadd.f32 %v664, %v1587
    %v1589 = vpop.f32.mrf.mxu0
    %v1590 = vadd.f32 %v668, %v1589
    %1591 = vmatprep.mubr.bf16.mxu0 %v500
    %1592 = vmatmul.mubr.bf16.gmra.mxu0 %v499
    %v1593 = vpop.f32.mrf.mxu0
    %v1594 = vadd.f32 %v664, %v1593
    %v1595 = vpop.f32.mrf.mxu0
    %v1596 = vadd.f32 %v668, %v1595
    %v1597 = vpop.f32.mrf.mxu0
    %v1598 = vadd.f32 %v664, %v1597
    %v1599 = vpop.f32.mrf.mxu0
    %v1600 = vadd.f32 %v668, %v1599
    %1601 = vmatprep.mubr.bf16.mxu0 %v504
    %1602 = vmatmul.mubr.bf16.gmra.mxu0 %v503
    %v1603 = vpop.f32.mrf.mxu0
    %v1604 = vadd.f32 %v664, %v1603
    %v1605 = vpop.f32.mrf.mxu0
    %v1606 = vadd.f32 %v668, %v1605
    %v1607 = vpop.f32.mrf.mxu0
    %v1608 = vadd.f32 %v664, %v1607
    %v1609 = vpop.f32.mrf.mxu0
    %v1610 = vadd.f32 %v668, %v1609
    %1611 = vmatprep.mubr.bf16.mxu0 %v508
    %1612 = vmatmul.mubr.bf16.gmra.mxu0 %v507
    %v1613 = vpop.f32.mrf.mxu0
    %v1614 = vadd.f32 %v664, %v1613
    %v1615 = vpop.f32.mrf.mxu0
    %v1616 = vadd.f32 %v668, %v1615
    %v1617 = vpop.f32.mrf.mxu0
    %v1618 = vadd.f32 %v664, %v1617
    %v1619 = vpop.f32.mrf.mxu0
    %v1620 = vadd.f32 %v668, %v1619
    %1621 = vmatprep.mubr.bf16.mxu0 %v512
    %1622 = vmatmul.mubr.bf16.gmra.mxu0 %v511
    %v1623 = vpop.f32.mrf.mxu0
    %v1624 = vadd.f32 %v664, %v1623
    %v1625 = vpop.f32.mrf.mxu0
    %v1626 = vadd.f32 %v668, %v1625
    %v1627 = vpop.f32.mrf.mxu0
    %v1628 = vadd.f32 %v664, %v1627
    %v1629 = vpop.f32.mrf.mxu0
    %v1630 = vadd.f32 %v668, %v1629
    %1631 = vmatprep.mubr.bf16.mxu0 %v516
    %1632 = vmatmul.mubr.bf16.gmra.mxu0 %v515
    %v1633 = vpop.f32.mrf.mxu0
    %v1634 = vadd.f32 %v664, %v1633
    %v1635 = vpop.f32.mrf.mxu0
    %v1636 = vadd.f32 %v668, %v1635
    %v1637 = vpop.f32.mrf.mxu0
    %v1638 = vadd.f32 %v664, %v1637
    %v1639 = vpop.f32.mrf.mxu0
    %v1640 = vadd.f32 %v668, %v1639
    %1641 = vmatprep.mubr.bf16.mxu0 %v520
    %1642 = vmatmul.mubr.bf16.gmra.mxu0 %v519
    %v1643 = vpop.f32.mrf.mxu0
    %v1644 = vadd.f32 %v664, %v1643
    %v1645 = vpop.f32.mrf.mxu0
    %v1646 = vadd.f32 %v668, %v1645
    %v1647 = vpop.f32.mrf.mxu0
    %v1648 = vadd.f32 %v664, %v1647
    %v1649 = vpop.f32.mrf.mxu0
    %v1650 = vadd.f32 %v668, %v1649
    %1651 = vdwg.mxu0
    %1652 = vmatprep.subr.bf16.mxu0 %v1152
    %1653 = vmatpush1.bf16.msra.mxu0 %v1151
    %1654 = vmatprep.subr.bf16.mxu0 %v1148
    %1655 = vmatpush1.bf16.msra.mxu0 %v1147
    %1656 = vmatprep.subr.bf16.mxu0 %v1144
    %1657 = vmatpush1.bf16.msra.mxu0 %v1143
    %1658 = vmatprep.subr.bf16.mxu0 %v1140
    %1659 = vmatpush1.bf16.msra.mxu0 %v1139
    %1660 = vmatprep.subr.bf16.mxu0 %v1136
    %1661 = vmatpush1.bf16.msra.mxu0 %v1135
    %1662 = vmatprep.subr.bf16.mxu0 %v1132
    %1663 = vmatpush1.bf16.msra.mxu0 %v1131
    %1664 = vmatprep.subr.bf16.mxu0 %v1128
    %1665 = vmatpush1.bf16.msra.mxu0 %v1127
    %1666 = vmatprep.subr.bf16.mxu0 %v1124
    %1667 = vmatpush1.bf16.msra.mxu0 %v1123
    %1668 = vmatprep.subr.bf16.mxu0 %v1184
    %1669 = vmatpush2.bf16.msra.mxu0 %v1183
    %1670 = vmatprep.subr.bf16.mxu0 %v1180
    %1671 = vmatpush2.bf16.msra.mxu0 %v1179
    %1672 = vmatprep.subr.bf16.mxu0 %v1176
    %1673 = vmatpush2.bf16.msra.mxu0 %v1175
    %1674 = vmatprep.subr.bf16.mxu0 %v1172
    %1675 = vmatpush2.bf16.msra.mxu0 %v1171
    %1676 = vmatprep.subr.bf16.mxu0 %v1168
    %1677 = vmatpush2.bf16.msra.mxu0 %v1167
    %1678 = vmatprep.subr.bf16.mxu0 %v1164
    %1679 = vmatpush2.bf16.msra.mxu0 %v1163
    %1680 = vmatprep.subr.bf16.mxu0 %v1160
    %1681 = vmatpush2.bf16.msra.mxu0 %v1159
    %1682 = vmatprep.subr.bf16.mxu0 %v1156
    %1683 = vmatpush2.bf16.msra.mxu0 %v1155
    %1684 = vmatprep.mubr.bf16.mxu0 %v494
    %1685 = vmatmul.mubr.bf16.gmra.mxu0 %v493
    %v1686 = vpop.f32.mrf.mxu0
    %v1687 = vadd.f32 %v1574, %v1686
    %v1688 = vpop.f32.mrf.mxu0
    %v1689 = vadd.f32 %v1576, %v1688
    %v1690 = vpop.f32.mrf.mxu0
    %v1691 = vadd.f32 %v1578, %v1690
    %v1692 = vpop.f32.mrf.mxu0
    %v1693 = vadd.f32 %v1580, %v1692
    %1694 = vmatprep.mubr.bf16.mxu0 %v498
    %1695 = vmatmul.mubr.bf16.gmra.mxu0 %v497
    %v1696 = vpop.f32.mrf.mxu0
    %v1697 = vadd.f32 %v1584, %v1696
    %v1698 = vpop.f32.mrf.mxu0
    %v1699 = vadd.f32 %v1586, %v1698
    %v1700 = vpop.f32.mrf.mxu0
    %v1701 = vadd.f32 %v1588, %v1700
    %v1702 = vpop.f32.mrf.mxu0
    %v1703 = vadd.f32 %v1590, %v1702
    %1704 = vmatprep.mubr.bf16.mxu0 %v502
    %1705 = vmatmul.mubr.bf16.gmra.mxu0 %v501
    %v1706 = vpop.f32.mrf.mxu0
    %v1707 = vadd.f32 %v1594, %v1706
    %v1708 = vpop.f32.mrf.mxu0
    %v1709 = vadd.f32 %v1596, %v1708
    %v1710 = vpop.f32.mrf.mxu0
    %v1711 = vadd.f32 %v1598, %v1710
    %v1712 = vpop.f32.mrf.mxu0
    %v1713 = vadd.f32 %v1600, %v1712
    %1714 = vmatprep.mubr.bf16.mxu0 %v506
    %1715 = vmatmul.mubr.bf16.gmra.mxu0 %v505
    %v1716 = vpop.f32.mrf.mxu0
    %v1717 = vadd.f32 %v1604, %v1716
    %v1718 = vpop.f32.mrf.mxu0
    %v1719 = vadd.f32 %v1606, %v1718
    %v1720 = vpop.f32.mrf.mxu0
    %v1721 = vadd.f32 %v1608, %v1720
    %v1722 = vpop.f32.mrf.mxu0
    %v1723 = vadd.f32 %v1610, %v1722
    %1724 = vmatprep.mubr.bf16.mxu0 %v510
    %1725 = vmatmul.mubr.bf16.gmra.mxu0 %v509
    %v1726 = vpop.f32.mrf.mxu0
    %v1727 = vadd.f32 %v1614, %v1726
    %v1728 = vpop.f32.mrf.mxu0
    %v1729 = vadd.f32 %v1616, %v1728
    %v1730 = vpop.f32.mrf.mxu0
    %v1731 = vadd.f32 %v1618, %v1730
    %v1732 = vpop.f32.mrf.mxu0
    %v1733 = vadd.f32 %v1620, %v1732
    %1734 = vmatprep.mubr.bf16.mxu0 %v514
    %1735 = vmatmul.mubr.bf16.gmra.mxu0 %v513
    %v1736 = vpop.f32.mrf.mxu0
    %v1737 = vadd.f32 %v1624, %v1736
    %v1738 = vpop.f32.mrf.mxu0
    %v1739 = vadd.f32 %v1626, %v1738
    %v1740 = vpop.f32.mrf.mxu0
    %v1741 = vadd.f32 %v1628, %v1740
    %v1742 = vpop.f32.mrf.mxu0
    %v1743 = vadd.f32 %v1630, %v1742
    %1744 = vmatprep.mubr.bf16.mxu0 %v518
    %1745 = vmatmul.mubr.bf16.gmra.mxu0 %v517
    %v1746 = vpop.f32.mrf.mxu0
    %v1747 = vadd.f32 %v1634, %v1746
    %v1748 = vpop.f32.mrf.mxu0
    %v1749 = vadd.f32 %v1636, %v1748
    %v1750 = vpop.f32.mrf.mxu0
    %v1751 = vadd.f32 %v1638, %v1750
    %v1752 = vpop.f32.mrf.mxu0
    %v1753 = vadd.f32 %v1640, %v1752
    %1754 = vmatprep.mubr.bf16.mxu0 %v522
    %1755 = vmatmul.mubr.bf16.gmra.mxu0 %v521
    %v1756 = vpop.f32.mrf.mxu0
    %v1757 = vadd.f32 %v1644, %v1756
    %v1758 = vpop.f32.mrf.mxu0
    %v1759 = vadd.f32 %v1646, %v1758
    %v1760 = vpop.f32.mrf.mxu0
    %v1761 = vadd.f32 %v1648, %v1760
    %v1762 = vpop.f32.mrf.mxu0
    %v1763 = vadd.f32 %v1650, %v1762
    %1764 = vdwg.mxu0
    %v1765 = vmax.f32 %v1461, 0.0
    %v1766 = vmax.f32 %v1463, 0.0
    %v1767 = vmax.f32 %v1687, 0.0
    %v1768 = vmax.f32 %v1689, 0.0
    %v1769 = vmax.f32 %v1465, 0.0
    %v1770 = vmax.f32 %v1467, 0.0
    %v1771 = vmax.f32 %v1691, 0.0
    %v1772 = vmax.f32 %v1693, 0.0
    %v1773 = vmax.f32 %v1471, 0.0
    %v1774 = vmax.f32 %v1473, 0.0
    %v1775 = vmax.f32 %v1697, 0.0
    %v1776 = vmax.f32 %v1699, 0.0
    %v1777 = vmax.f32 %v1475, 0.0
    %v1778 = vmax.f32 %v1477, 0.0
    %v1779 = vmax.f32 %v1701, 0.0
    %v1780 = vmax.f32 %v1703, 0.0
    %v1781 = vmax.f32 %v1481, 0.0
    %v1782 = vmax.f32 %v1483, 0.0
    %v1783 = vmax.f32 %v1707, 0.0
    %v1784 = vmax.f32 %v1709, 0.0
    %v1785 = vmax.f32 %v1485, 0.0
    %v1786 = vmax.f32 %v1487, 0.0
    %v1787 = vmax.f32 %v1711, 0.0
    %v1788 = vmax.f32 %v1713, 0.0
    %v1789 = vmax.f32 %v1491, 0.0
    %v1790 = vmax.f32 %v1493, 0.0
    %v1791 = vmax.f32 %v1717, 0.0
    %v1792 = vmax.f32 %v1719, 0.0
    %v1793 = vmax.f32 %v1495, 0.0
    %v1794 = vmax.f32 %v1497, 0.0
    %v1795 = vmax.f32 %v1721, 0.0
    %v1796 = vmax.f32 %v1723, 0.0
    %v1797 = vmax.f32 %v1501, 0.0
    %v1798 = vmax.f32 %v1503, 0.0
    %v1799 = vmax.f32 %v1727, 0.0
    %v1800 = vmax.f32 %v1729, 0.0
    %v1801 = vmax.f32 %v1505, 0.0
    %v1802 = vmax.f32 %v1507, 0.0
    %v1803 = vmax.f32 %v1731, 0.0
    %v1804 = vmax.f32 %v1733, 0.0
    %v1805 = vmax.f32 %v1511, 0.0
    %v1806 = vmax.f32 %v1513, 0.0
    %v1807 = vmax.f32 %v1737, 0.0
    %v1808 = vmax.f32 %v1739, 0.0
    %v1809 = vmax.f32 %v1515, 0.0
    %v1810 = vmax.f32 %v1517, 0.0
    %v1811 = vmax.f32 %v1741, 0.0
    %v1812 = vmax.f32 %v1743, 0.0
    %v1813 = vmax.f32 %v1521, 0.0
    %v1814 = vmax.f32 %v1523, 0.0
    %v1815 = vmax.f32 %v1747, 0.0
    %v1816 = vmax.f32 %v1749, 0.0
    %v1817 = vmax.f32 %v1525, 0.0
    %v1818 = vmax.f32 %v1527, 0.0
    %v1819 = vmax.f32 %v1751, 0.0
    %v1820 = vmax.f32 %v1753, 0.0
    %v1821 = vmax.f32 %v1531, 0.0
    %v1822 = vmax.f32 %v1533, 0.0
    %v1823 = vmax.f32 %v1757, 0.0
    %v1824 = vmax.f32 %v1759, 0.0
    %v1825 = vmax.f32 %v1535, 0.0
    %v1826 = vmax.f32 %v1537, 0.0
    %v1827 = vmax.f32 %v1761, 0.0
    %v1828 = vmax.f32 %v1763, 0.0
    %v1829 = vpack.c.bf16 %v1769, %v1765
    %v1830 = vpack.c.bf16 %v1770, %v1766
    %v1831 = vpack.c.bf16 %v1771, %v1767
    %v1832 = vpack.c.bf16 %v1772, %v1768
    %v1833 = vpack.c.bf16 %v1777, %v1773
    %v1834 = vpack.c.bf16 %v1778, %v1774
    %v1835 = vpack.c.bf16 %v1779, %v1775
    %v1836 = vpack.c.bf16 %v1780, %v1776
    %v1837 = vpack.c.bf16 %v1785, %v1781
    %v1838 = vpack.c.bf16 %v1786, %v1782
    %v1839 = vpack.c.bf16 %v1787, %v1783
    %v1840 = vpack.c.bf16 %v1788, %v1784
    %v1841 = vpack.c.bf16 %v1793, %v1789
    %v1842 = vpack.c.bf16 %v1794, %v1790
    %v1843 = vpack.c.bf16 %v1795, %v1791
    %v1844 = vpack.c.bf16 %v1796, %v1792
    %v1845 = vpack.c.bf16 %v1801, %v1797
    %v1846 = vpack.c.bf16 %v1802, %v1798
    %v1847 = vpack.c.bf16 %v1803, %v1799
    %v1848 = vpack.c.bf16 %v1804, %v1800
    %v1849 = vpack.c.bf16 %v1809, %v1805
    %v1850 = vpack.c.bf16 %v1810, %v1806
    %v1851 = vpack.c.bf16 %v1811, %v1807
    %v1852 = vpack.c.bf16 %v1812, %v1808
    %v1853 = vpack.c.bf16 %v1817, %v1813
    %v1854 = vpack.c.bf16 %v1818, %v1814
    %v1855 = vpack.c.bf16 %v1819, %v1815
    %v1856 = vpack.c.bf16 %v1820, %v1816
    %v1857 = vpack.c.bf16 %v1825, %v1821
    %v1858 = vpack.c.bf16 %v1826, %v1822
    %v1859 = vpack.c.bf16 %v1827, %v1823
    %v1860 = vpack.c.bf16 %v1828, %v1824
    %v1861 = vld [vmem:[#allocation5] sm:$0xff]
    %v1862 = vld [vmem:[#allocation5 + $0x8] sm:$0xff]
    %v1863 = vld [vmem:[#allocation5 + $0x10] sm:$0xff]
    %v1864 = vld [vmem:[#allocation5 + $0x18] sm:$0xff]
    %v1865 = vld [vmem:[#allocation5 + $0x20] sm:$0xff]
    %v1866 = vld [vmem:[#allocation5 + $0x28] sm:$0xff]
    %v1867 = vld [vmem:[#allocation5 + $0x30] sm:$0xff]
    %v1868 = vld [vmem:[#allocation5 + $0x38] sm:$0xff]
    %v1869 = vld [vmem:[#allocation5 + $0x40] sm:$0xff]
    %v1870 = vld [vmem:[#allocation5 + $0x48] sm:$0xff]
    %v1871 = vld [vmem:[#allocation5 + $0x50] sm:$0xff]
    %v1872 = vld [vmem:[#allocation5 + $0x58] sm:$0xff]
    %v1873 = vld [vmem:[#allocation5 + $0x60] sm:$0xff]
    %v1874 = vld [vmem:[#allocation5 + $0x68] sm:$0xff]
    %v1875 = vld [vmem:[#allocation5 + $0x70] sm:$0xff]
    %v1876 = vld [vmem:[#allocation5 + $0x78] sm:$0xff]
    %v1877 = vld [vmem:[#allocation5 + $0x80] sm:$0xff]
    %v1878 = vld [vmem:[#allocation5 + $0x88] sm:$0xff]
    %v1879 = vld [vmem:[#allocation5 + $0x90] sm:$0xff]
    %v1880 = vld [vmem:[#allocation5 + $0x98] sm:$0xff]
    %v1881 = vld [vmem:[#allocation5 + $0xa0] sm:$0xff]
    %v1882 = vld [vmem:[#allocation5 + $0xa8] sm:$0xff]
    %v1883 = vld [vmem:[#allocation5 + $0xb0] sm:$0xff]
    %v1884 = vld [vmem:[#allocation5 + $0xb8] sm:$0xff]
    %v1885 = vld [vmem:[#allocation5 + $0xc0] sm:$0xff]
    %v1886 = vld [vmem:[#allocation5 + $0xc8] sm:$0xff]
    %v1887 = vld [vmem:[#allocation5 + $0xd0] sm:$0xff]
    %v1888 = vld [vmem:[#allocation5 + $0xd8] sm:$0xff]
    %v1889 = vld [vmem:[#allocation5 + $0xe0] sm:$0xff]
    %v1890 = vld [vmem:[#allocation5 + $0xe8] sm:$0xff]
    %v1891 = vld [vmem:[#allocation5 + $0xf0] sm:$0xff]
    %v1892 = vld [vmem:[#allocation5 + $0xf8] sm:$0xff]
    %v1893 = vld [vmem:[#allocation5 + $0x100] sm:$0xff]
    %v1894 = vld [vmem:[#allocation5 + $0x108] sm:$0xff]
    %v1895 = vld [vmem:[#allocation5 + $0x110] sm:$0xff]
    %v1896 = vld [vmem:[#allocation5 + $0x118] sm:$0xff]
    %v1897 = vld [vmem:[#allocation5 + $0x120] sm:$0xff]
    %v1898 = vld [vmem:[#allocation5 + $0x128] sm:$0xff]
    %v1899 = vld [vmem:[#allocation5 + $0x130] sm:$0xff]
    %v1900 = vld [vmem:[#allocation5 + $0x138] sm:$0xff]
    %v1901 = vld [vmem:[#allocation5 + $0x140] sm:$0xff]
    %v1902 = vld [vmem:[#allocation5 + $0x148] sm:$0xff]
    %v1903 = vld [vmem:[#allocation5 + $0x150] sm:$0xff]
    %v1904 = vld [vmem:[#allocation5 + $0x158] sm:$0xff]
    %v1905 = vld [vmem:[#allocation5 + $0x160] sm:$0xff]
    %v1906 = vld [vmem:[#allocation5 + $0x168] sm:$0xff]
    %v1907 = vld [vmem:[#allocation5 + $0x170] sm:$0xff]
    %v1908 = vld [vmem:[#allocation5 + $0x178] sm:$0xff]
    %v1909 = vld [vmem:[#allocation5 + $0x180] sm:$0xff]
    %v1910 = vld [vmem:[#allocation5 + $0x188] sm:$0xff]
    %v1911 = vld [vmem:[#allocation5 + $0x190] sm:$0xff]
    %v1912 = vld [vmem:[#allocation5 + $0x198] sm:$0xff]
    %v1913 = vld [vmem:[#allocation5 + $0x1a0] sm:$0xff]
    %v1914 = vld [vmem:[#allocation5 + $0x1a8] sm:$0xff]
    %v1915 = vld [vmem:[#allocation5 + $0x1b0] sm:$0xff]
    %v1916 = vld [vmem:[#allocation5 + $0x1b8] sm:$0xff]
    %v1917 = vld [vmem:[#allocation5 + $0x1c0] sm:$0xff]
    %v1918 = vld [vmem:[#allocation5 + $0x1c8] sm:$0xff]
    %v1919 = vld [vmem:[#allocation5 + $0x1d0] sm:$0xff]
    %v1920 = vld [vmem:[#allocation5 + $0x1d8] sm:$0xff]
    %v1921 = vld [vmem:[#allocation5 + $0x1e0] sm:$0xff]
    %v1922 = vld [vmem:[#allocation5 + $0x1e8] sm:$0xff]
    %v1923 = vld [vmem:[#allocation5 + $0x1f0] sm:$0xff]
    %v1924 = vld [vmem:[#allocation5 + $0x1f8] sm:$0xff]
    %v1925 = vld [vmem:[#allocation5 + $0x200] sm:$0xff]
    %v1926 = vld [vmem:[#allocation5 + $0x208] sm:$0xff]
    %v1927 = vld [vmem:[#allocation5 + $0x210] sm:$0xff]
    %v1928 = vld [vmem:[#allocation5 + $0x218] sm:$0xff]
    %v1929 = vld [vmem:[#allocation5 + $0x220] sm:$0xff]
    %v1930 = vld [vmem:[#allocation5 + $0x228] sm:$0xff]
    %v1931 = vld [vmem:[#allocation5 + $0x230] sm:$0xff]
    %v1932 = vld [vmem:[#allocation5 + $0x238] sm:$0xff]
    %v1933 = vld [vmem:[#allocation5 + $0x240] sm:$0xff]
    %v1934 = vld [vmem:[#allocation5 + $0x248] sm:$0xff]
    %v1935 = vld [vmem:[#allocation5 + $0x250] sm:$0xff]
    %v1936 = vld [vmem:[#allocation5 + $0x258] sm:$0xff]
    %v1937 = vld [vmem:[#allocation5 + $0x260] sm:$0xff]
    %v1938 = vld [vmem:[#allocation5 + $0x268] sm:$0xff]
    %v1939 = vld [vmem:[#allocation5 + $0x270] sm:$0xff]
    %v1940 = vld [vmem:[#allocation5 + $0x278] sm:$0xff]
    %v1941 = vld [vmem:[#allocation5 + $0x280] sm:$0xff]
    %v1942 = vld [vmem:[#allocation5 + $0x288] sm:$0xff]
    %v1943 = vld [vmem:[#allocation5 + $0x290] sm:$0xff]
    %v1944 = vld [vmem:[#allocation5 + $0x298] sm:$0xff]
    %v1945 = vld [vmem:[#allocation5 + $0x2a0] sm:$0xff]
    %v1946 = vld [vmem:[#allocation5 + $0x2a8] sm:$0xff]
    %v1947 = vld [vmem:[#allocation5 + $0x2b0] sm:$0xff]
    %v1948 = vld [vmem:[#allocation5 + $0x2b8] sm:$0xff]
    %v1949 = vld [vmem:[#allocation5 + $0x2c0] sm:$0xff]
    %v1950 = vld [vmem:[#allocation5 + $0x2c8] sm:$0xff]
    %v1951 = vld [vmem:[#allocation5 + $0x2d0] sm:$0xff]
    %v1952 = vld [vmem:[#allocation5 + $0x2d8] sm:$0xff]
    %v1953 = vld [vmem:[#allocation5 + $0x2e0] sm:$0xff]
    %v1954 = vld [vmem:[#allocation5 + $0x2e8] sm:$0xff]
    %v1955 = vld [vmem:[#allocation5 + $0x2f0] sm:$0xff]
    %v1956 = vld [vmem:[#allocation5 + $0x2f8] sm:$0xff]
    %v1957 = vld [vmem:[#allocation5 + $0x300] sm:$0xff]
    %v1958 = vld [vmem:[#allocation5 + $0x308] sm:$0xff]
    %v1959 = vld [vmem:[#allocation5 + $0x310] sm:$0xff]
    %v1960 = vld [vmem:[#allocation5 + $0x318] sm:$0xff]
    %v1961 = vld [vmem:[#allocation5 + $0x320] sm:$0xff]
    %v1962 = vld [vmem:[#allocation5 + $0x328] sm:$0xff]
    %v1963 = vld [vmem:[#allocation5 + $0x330] sm:$0xff]
    %v1964 = vld [vmem:[#allocation5 + $0x338] sm:$0xff]
    %v1965 = vld [vmem:[#allocation5 + $0x340] sm:$0xff]
    %v1966 = vld [vmem:[#allocation5 + $0x348] sm:$0xff]
    %v1967 = vld [vmem:[#allocation5 + $0x350] sm:$0xff]
    %v1968 = vld [vmem:[#allocation5 + $0x358] sm:$0xff]
    %v1969 = vld [vmem:[#allocation5 + $0x360] sm:$0xff]
    %v1970 = vld [vmem:[#allocation5 + $0x368] sm:$0xff]
    %v1971 = vld [vmem:[#allocation5 + $0x370] sm:$0xff]
    %v1972 = vld [vmem:[#allocation5 + $0x378] sm:$0xff]
    %v1973 = vld [vmem:[#allocation5 + $0x380] sm:$0xff]
    %v1974 = vld [vmem:[#allocation5 + $0x388] sm:$0xff]
    %v1975 = vld [vmem:[#allocation5 + $0x390] sm:$0xff]
    %v1976 = vld [vmem:[#allocation5 + $0x398] sm:$0xff]
    %v1977 = vld [vmem:[#allocation5 + $0x3a0] sm:$0xff]
    %v1978 = vld [vmem:[#allocation5 + $0x3a8] sm:$0xff]
    %v1979 = vld [vmem:[#allocation5 + $0x3b0] sm:$0xff]
    %v1980 = vld [vmem:[#allocation5 + $0x3b8] sm:$0xff]
    %v1981 = vld [vmem:[#allocation5 + $0x3c0] sm:$0xff]
    %v1982 = vld [vmem:[#allocation5 + $0x3c8] sm:$0xff]
    %v1983 = vld [vmem:[#allocation5 + $0x3d0] sm:$0xff]
    %v1984 = vld [vmem:[#allocation5 + $0x3d8] sm:$0xff]
    %v1985 = vld [vmem:[#allocation5 + $0x3e0] sm:$0xff]
    %v1986 = vld [vmem:[#allocation5 + $0x3e8] sm:$0xff]
    %v1987 = vld [vmem:[#allocation5 + $0x3f0] sm:$0xff]
    %v1988 = vld [vmem:[#allocation5 + $0x3f8] sm:$0xff]
    %v1989 = vld [vmem:[%s6] sm:$0xf]
    %v1991 = vlaneseq
    %v1992 = vshrl.u32 %v1991, 7
    %v1993 = vsub.s32 0, %v1992
    %v1994 = vrot.slane %v1989, %v1993
    %v1995 = vlaneseq
    %v1996 = vshrl.u32 %v1995, 7
    %v1997 = vsub.s32 1, %v1996
    %v1998 = vrot.slane %v1989, %v1997
    %v1999 = vlaneseq
    %v2000 = vshrl.u32 %v1999, 7
    %v2001 = vsub.s32 2, %v2000
    %v2002 = vrot.slane %v1989, %v2001
    %v2003 = vlaneseq
    %v2004 = vshrl.u32 %v2003, 7
    %v2005 = vsub.s32 3, %v2004
    %v2006 = vrot.slane %v1989, %v2005
    %v2139 = vunpack.c.l.b16 %v1861
    %v2140 = vunpack.c.h.b16 %v1861
    %v2141 = vunpack.c.l.b16 %v1862
    %v2142 = vunpack.c.h.b16 %v1862
    %v2143 = vunpack.c.l.b16 %v1863
    %v2144 = vunpack.c.h.b16 %v1863
    %v2145 = vunpack.c.l.b16 %v1864
    %v2146 = vunpack.c.h.b16 %v1864
    %v2147 = vunpack.c.l.b16 %v1865
    %v2148 = vunpack.c.h.b16 %v1865
    %v2149 = vunpack.c.l.b16 %v1866
    %v2150 = vunpack.c.h.b16 %v1866
    %v2151 = vunpack.c.l.b16 %v1867
    %v2152 = vunpack.c.h.b16 %v1867
    %v2153 = vunpack.c.l.b16 %v1868
    %v2154 = vunpack.c.h.b16 %v1868
    %v2155 = vunpack.c.l.b16 %v1869
    %v2156 = vunpack.c.h.b16 %v1869
    %v2157 = vunpack.c.l.b16 %v1870
    %v2158 = vunpack.c.h.b16 %v1870
    %v2159 = vunpack.c.l.b16 %v1871
    %v2160 = vunpack.c.h.b16 %v1871
    %v2161 = vunpack.c.l.b16 %v1872
    %v2162 = vunpack.c.h.b16 %v1872
    %v2163 = vunpack.c.l.b16 %v1873
    %v2164 = vunpack.c.h.b16 %v1873
    %v2165 = vunpack.c.l.b16 %v1874
    %v2166 = vunpack.c.h.b16 %v1874
    %v2167 = vunpack.c.l.b16 %v1875
    %v2168 = vunpack.c.h.b16 %v1875
    %v2169 = vunpack.c.l.b16 %v1876
    %v2170 = vunpack.c.h.b16 %v1876
    %v2171 = vunpack.c.l.b16 %v1877
    %v2172 = vunpack.c.h.b16 %v1877
    %v2173 = vunpack.c.l.b16 %v1878
    %v2174 = vunpack.c.h.b16 %v1878
    %v2175 = vunpack.c.l.b16 %v1879
    %v2176 = vunpack.c.h.b16 %v1879
    %v2177 = vunpack.c.l.b16 %v1880
    %v2178 = vunpack.c.h.b16 %v1880
    %v2179 = vunpack.c.l.b16 %v1881
    %v2180 = vunpack.c.h.b16 %v1881
    %v2181 = vunpack.c.l.b16 %v1882
    %v2182 = vunpack.c.h.b16 %v1882
    %v2183 = vunpack.c.l.b16 %v1883
    %v2184 = vunpack.c.h.b16 %v1883
    %v2185 = vunpack.c.l.b16 %v1884
    %v2186 = vunpack.c.h.b16 %v1884
    %v2187 = vunpack.c.l.b16 %v1885
    %v2188 = vunpack.c.h.b16 %v1885
    %v2189 = vunpack.c.l.b16 %v1886
    %v2190 = vunpack.c.h.b16 %v1886
    %v2191 = vunpack.c.l.b16 %v1887
    %v2192 = vunpack.c.h.b16 %v1887
    %v2193 = vunpack.c.l.b16 %v1888
    %v2194 = vunpack.c.h.b16 %v1888
    %v2195 = vunpack.c.l.b16 %v1889
    %v2196 = vunpack.c.h.b16 %v1889
    %v2197 = vunpack.c.l.b16 %v1890
    %v2198 = vunpack.c.h.b16 %v1890
    %v2199 = vunpack.c.l.b16 %v1891
    %v2200 = vunpack.c.h.b16 %v1891
    %v2201 = vunpack.c.l.b16 %v1892
    %v2202 = vunpack.c.h.b16 %v1892
    %v2203 = vunpack.c.l.b16 %v1893
    %v2204 = vunpack.c.h.b16 %v1893
    %v2205 = vunpack.c.l.b16 %v1894
    %v2206 = vunpack.c.h.b16 %v1894
    %v2207 = vunpack.c.l.b16 %v1895
    %v2208 = vunpack.c.h.b16 %v1895
    %v2209 = vunpack.c.l.b16 %v1896
    %v2210 = vunpack.c.h.b16 %v1896
    %v2211 = vunpack.c.l.b16 %v1897
    %v2212 = vunpack.c.h.b16 %v1897
    %v2213 = vunpack.c.l.b16 %v1898
    %v2214 = vunpack.c.h.b16 %v1898
    %v2215 = vunpack.c.l.b16 %v1899
    %v2216 = vunpack.c.h.b16 %v1899
    %v2217 = vunpack.c.l.b16 %v1900
    %v2218 = vunpack.c.h.b16 %v1900
    %v2219 = vunpack.c.l.b16 %v1901
    %v2220 = vunpack.c.h.b16 %v1901
    %v2221 = vunpack.c.l.b16 %v1902
    %v2222 = vunpack.c.h.b16 %v1902
    %v2223 = vunpack.c.l.b16 %v1903
    %v2224 = vunpack.c.h.b16 %v1903
    %v2225 = vunpack.c.l.b16 %v1904
    %v2226 = vunpack.c.h.b16 %v1904
    %v2227 = vunpack.c.l.b16 %v1905
    %v2228 = vunpack.c.h.b16 %v1905
    %v2229 = vunpack.c.l.b16 %v1906
    %v2230 = vunpack.c.h.b16 %v1906
    %v2231 = vunpack.c.l.b16 %v1907
    %v2232 = vunpack.c.h.b16 %v1907
    %v2233 = vunpack.c.l.b16 %v1908
    %v2234 = vunpack.c.h.b16 %v1908
    %v2235 = vunpack.c.l.b16 %v1909
    %v2236 = vunpack.c.h.b16 %v1909
    %v2237 = vunpack.c.l.b16 %v1910
    %v2238 = vunpack.c.h.b16 %v1910
    %v2239 = vunpack.c.l.b16 %v1911
    %v2240 = vunpack.c.h.b16 %v1911
    %v2241 = vunpack.c.l.b16 %v1912
    %v2242 = vunpack.c.h.b16 %v1912
    %v2243 = vunpack.c.l.b16 %v1913
    %v2244 = vunpack.c.h.b16 %v1913
    %v2245 = vunpack.c.l.b16 %v1914
    %v2246 = vunpack.c.h.b16 %v1914
    %v2247 = vunpack.c.l.b16 %v1915
    %v2248 = vunpack.c.h.b16 %v1915
    %v2249 = vunpack.c.l.b16 %v1916
    %v2250 = vunpack.c.h.b16 %v1916
    %v2251 = vunpack.c.l.b16 %v1917
    %v2252 = vunpack.c.h.b16 %v1917
    %v2253 = vunpack.c.l.b16 %v1918
    %v2254 = vunpack.c.h.b16 %v1918
    %v2255 = vunpack.c.l.b16 %v1919
    %v2256 = vunpack.c.h.b16 %v1919
    %v2257 = vunpack.c.l.b16 %v1920
    %v2258 = vunpack.c.h.b16 %v1920
    %v2259 = vunpack.c.l.b16 %v1921
    %v2260 = vunpack.c.h.b16 %v1921
    %v2261 = vunpack.c.l.b16 %v1922
    %v2262 = vunpack.c.h.b16 %v1922
    %v2263 = vunpack.c.l.b16 %v1923
    %v2264 = vunpack.c.h.b16 %v1923
    %v2265 = vunpack.c.l.b16 %v1924
    %v2266 = vunpack.c.h.b16 %v1924
    %v2267 = vunpack.c.l.b16 %v1925
    %v2268 = vunpack.c.h.b16 %v1925
    %v2269 = vunpack.c.l.b16 %v1926
    %v2270 = vunpack.c.h.b16 %v1926
    %v2271 = vunpack.c.l.b16 %v1927
    %v2272 = vunpack.c.h.b16 %v1927
    %v2273 = vunpack.c.l.b16 %v1928
    %v2274 = vunpack.c.h.b16 %v1928
    %v2275 = vunpack.c.l.b16 %v1929
    %v2276 = vunpack.c.h.b16 %v1929
    %v2277 = vunpack.c.l.b16 %v1930
    %v2278 = vunpack.c.h.b16 %v1930
    %v2279 = vunpack.c.l.b16 %v1931
    %v2280 = vunpack.c.h.b16 %v1931
    %v2281 = vunpack.c.l.b16 %v1932
    %v2282 = vunpack.c.h.b16 %v1932
    %v2283 = vunpack.c.l.b16 %v1933
    %v2284 = vunpack.c.h.b16 %v1933
    %v2285 = vunpack.c.l.b16 %v1934
    %v2286 = vunpack.c.h.b16 %v1934
    %v2287 = vunpack.c.l.b16 %v1935
    %v2288 = vunpack.c.h.b16 %v1935
    %v2289 = vunpack.c.l.b16 %v1936
    %v2290 = vunpack.c.h.b16 %v1936
    %v2291 = vunpack.c.l.b16 %v1937
    %v2292 = vunpack.c.h.b16 %v1937
    %v2293 = vunpack.c.l.b16 %v1938
    %v2294 = vunpack.c.h.b16 %v1938
    %v2295 = vunpack.c.l.b16 %v1939
    %v2296 = vunpack.c.h.b16 %v1939
    %v2297 = vunpack.c.l.b16 %v1940
    %v2298 = vunpack.c.h.b16 %v1940
    %v2299 = vunpack.c.l.b16 %v1941
    %v2300 = vunpack.c.h.b16 %v1941
    %v2301 = vunpack.c.l.b16 %v1942
    %v2302 = vunpack.c.h.b16 %v1942
    %v2303 = vunpack.c.l.b16 %v1943
    %v2304 = vunpack.c.h.b16 %v1943
    %v2305 = vunpack.c.l.b16 %v1944
    %v2306 = vunpack.c.h.b16 %v1944
    %v2307 = vunpack.c.l.b16 %v1945
    %v2308 = vunpack.c.h.b16 %v1945
    %v2309 = vunpack.c.l.b16 %v1946
    %v2310 = vunpack.c.h.b16 %v1946
    %v2311 = vunpack.c.l.b16 %v1947
    %v2312 = vunpack.c.h.b16 %v1947
    %v2313 = vunpack.c.l.b16 %v1948
    %v2314 = vunpack.c.h.b16 %v1948
    %v2315 = vunpack.c.l.b16 %v1949
    %v2316 = vunpack.c.h.b16 %v1949
    %v2317 = vunpack.c.l.b16 %v1950
    %v2318 = vunpack.c.h.b16 %v1950
    %v2319 = vunpack.c.l.b16 %v1951
    %v2320 = vunpack.c.h.b16 %v1951
    %v2321 = vunpack.c.l.b16 %v1952
    %v2322 = vunpack.c.h.b16 %v1952
    %v2323 = vunpack.c.l.b16 %v1953
    %v2324 = vunpack.c.h.b16 %v1953
    %v2325 = vunpack.c.l.b16 %v1954
    %v2326 = vunpack.c.h.b16 %v1954
    %v2327 = vunpack.c.l.b16 %v1955
    %v2328 = vunpack.c.h.b16 %v1955
    %v2329 = vunpack.c.l.b16 %v1956
    %v2330 = vunpack.c.h.b16 %v1956
    %v2331 = vunpack.c.l.b16 %v1957
    %v2332 = vunpack.c.h.b16 %v1957
    %v2333 = vunpack.c.l.b16 %v1958
    %v2334 = vunpack.c.h.b16 %v1958
    %v2335 = vunpack.c.l.b16 %v1959
    %v2336 = vunpack.c.h.b16 %v1959
    %v2337 = vunpack.c.l.b16 %v1960
    %v2338 = vunpack.c.h.b16 %v1960
    %v2339 = vunpack.c.l.b16 %v1961
    %v2340 = vunpack.c.h.b16 %v1961
    %v2341 = vunpack.c.l.b16 %v1962
    %v2342 = vunpack.c.h.b16 %v1962
    %v2343 = vunpack.c.l.b16 %v1963
    %v2344 = vunpack.c.h.b16 %v1963
    %v2345 = vunpack.c.l.b16 %v1964
    %v2346 = vunpack.c.h.b16 %v1964
    %v2347 = vunpack.c.l.b16 %v1965
    %v2348 = vunpack.c.h.b16 %v1965
    %v2349 = vunpack.c.l.b16 %v1966
    %v2350 = vunpack.c.h.b16 %v1966
    %v2351 = vunpack.c.l.b16 %v1967
    %v2352 = vunpack.c.h.b16 %v1967
    %v2353 = vunpack.c.l.b16 %v1968
    %v2354 = vunpack.c.h.b16 %v1968
    %v2355 = vunpack.c.l.b16 %v1969
    %v2356 = vunpack.c.h.b16 %v1969
    %v2357 = vunpack.c.l.b16 %v1970
    %v2358 = vunpack.c.h.b16 %v1970
    %v2359 = vunpack.c.l.b16 %v1971
    %v2360 = vunpack.c.h.b16 %v1971
    %v2361 = vunpack.c.l.b16 %v1972
    %v2362 = vunpack.c.h.b16 %v1972
    %v2363 = vunpack.c.l.b16 %v1973
    %v2364 = vunpack.c.h.b16 %v1973
    %v2365 = vunpack.c.l.b16 %v1974
    %v2366 = vunpack.c.h.b16 %v1974
    %v2367 = vunpack.c.l.b16 %v1975
    %v2368 = vunpack.c.h.b16 %v1975
    %v2369 = vunpack.c.l.b16 %v1976
    %v2370 = vunpack.c.h.b16 %v1976
    %v2371 = vunpack.c.l.b16 %v1977
    %v2372 = vunpack.c.h.b16 %v1977
    %v2373 = vunpack.c.l.b16 %v1978
    %v2374 = vunpack.c.h.b16 %v1978
    %v2375 = vunpack.c.l.b16 %v1979
    %v2376 = vunpack.c.h.b16 %v1979
    %v2377 = vunpack.c.l.b16 %v1980
    %v2378 = vunpack.c.h.b16 %v1980
    %v2379 = vunpack.c.l.b16 %v1981
    %v2380 = vunpack.c.h.b16 %v1981
    %v2381 = vunpack.c.l.b16 %v1982
    %v2382 = vunpack.c.h.b16 %v1982
    %v2383 = vunpack.c.l.b16 %v1983
    %v2384 = vunpack.c.h.b16 %v1983
    %v2385 = vunpack.c.l.b16 %v1984
    %v2386 = vunpack.c.h.b16 %v1984
    %v2387 = vunpack.c.l.b16 %v1985
    %v2388 = vunpack.c.h.b16 %v1985
    %v2389 = vunpack.c.l.b16 %v1986
    %v2390 = vunpack.c.h.b16 %v1986
    %v2391 = vunpack.c.l.b16 %v1987
    %v2392 = vunpack.c.h.b16 %v1987
    %v2393 = vunpack.c.l.b16 %v1988
    %v2394 = vunpack.c.h.b16 %v1988
    %v2395 = vpack.c.b16 %v2143, %v2139
    %v2396 = vpack.c.b16 %v2144, %v2140
    %v2397 = vpack.c.b16 %v2145, %v2141
    %v2398 = vpack.c.b16 %v2146, %v2142
    %v2399 = vpack.c.b16 %v2151, %v2147
    %v2400 = vpack.c.b16 %v2152, %v2148
    %v2401 = vpack.c.b16 %v2153, %v2149
    %v2402 = vpack.c.b16 %v2154, %v2150
    %v2403 = vpack.c.b16 %v2159, %v2155
    %v2404 = vpack.c.b16 %v2160, %v2156
    %v2405 = vpack.c.b16 %v2161, %v2157
    %v2406 = vpack.c.b16 %v2162, %v2158
    %v2407 = vpack.c.b16 %v2167, %v2163
    %v2408 = vpack.c.b16 %v2168, %v2164
    %v2409 = vpack.c.b16 %v2169, %v2165
    %v2410 = vpack.c.b16 %v2170, %v2166
    %v2411 = vpack.c.b16 %v2175, %v2171
    %v2412 = vpack.c.b16 %v2176, %v2172
    %v2413 = vpack.c.b16 %v2177, %v2173
    %v2414 = vpack.c.b16 %v2178, %v2174
    %v2415 = vpack.c.b16 %v2183, %v2179
    %v2416 = vpack.c.b16 %v2184, %v2180
    %v2417 = vpack.c.b16 %v2185, %v2181
    %v2418 = vpack.c.b16 %v2186, %v2182
    %v2419 = vpack.c.b16 %v2191, %v2187
    %v2420 = vpack.c.b16 %v2192, %v2188
    %v2421 = vpack.c.b16 %v2193, %v2189
    %v2422 = vpack.c.b16 %v2194, %v2190
    %v2423 = vpack.c.b16 %v2199, %v2195
    %v2424 = vpack.c.b16 %v2200, %v2196
    %v2425 = vpack.c.b16 %v2201, %v2197
    %v2426 = vpack.c.b16 %v2202, %v2198
    %v2427 = vpack.c.b16 %v2207, %v2203
    %v2428 = vpack.c.b16 %v2208, %v2204
    %v2429 = vpack.c.b16 %v2209, %v2205
    %v2430 = vpack.c.b16 %v2210, %v2206
    %v2431 = vpack.c.b16 %v2215, %v2211
    %v2432 = vpack.c.b16 %v2216, %v2212
    %v2433 = vpack.c.b16 %v2217, %v2213
    %v2434 = vpack.c.b16 %v2218, %v2214
    %v2435 = vpack.c.b16 %v2223, %v2219
    %v2436 = vpack.c.b16 %v2224, %v2220
    %v2437 = vpack.c.b16 %v2225, %v2221
    %v2438 = vpack.c.b16 %v2226, %v2222
    %v2439 = vpack.c.b16 %v2231, %v2227
    %v2440 = vpack.c.b16 %v2232, %v2228
    %v2441 = vpack.c.b16 %v2233, %v2229
    %v2442 = vpack.c.b16 %v2234, %v2230
    %v2443 = vpack.c.b16 %v2239, %v2235
    %v2444 = vpack.c.b16 %v2240, %v2236
    %v2445 = vpack.c.b16 %v2241, %v2237
    %v2446 = vpack.c.b16 %v2242, %v2238
    %v2447 = vpack.c.b16 %v2247, %v2243
    %v2448 = vpack.c.b16 %v2248, %v2244
    %v2449 = vpack.c.b16 %v2249, %v2245
    %v2450 = vpack.c.b16 %v2250, %v2246
    %v2451 = vpack.c.b16 %v2255, %v2251
    %v2452 = vpack.c.b16 %v2256, %v2252
    %v2453 = vpack.c.b16 %v2257, %v2253
    %v2454 = vpack.c.b16 %v2258, %v2254
    %v2455 = vpack.c.b16 %v2263, %v2259
    %v2456 = vpack.c.b16 %v2264, %v2260
    %v2457 = vpack.c.b16 %v2265, %v2261
    %v2458 = vpack.c.b16 %v2266, %v2262
    %v2459 = vpack.c.b16 %v2271, %v2267
    %v2460 = vpack.c.b16 %v2272, %v2268
    %v2461 = vpack.c.b16 %v2273, %v2269
    %v2462 = vpack.c.b16 %v2274, %v2270
    %v2463 = vpack.c.b16 %v2279, %v2275
    %v2464 = vpack.c.b16 %v2280, %v2276
    %v2465 = vpack.c.b16 %v2281, %v2277
    %v2466 = vpack.c.b16 %v2282, %v2278
    %v2467 = vpack.c.b16 %v2287, %v2283
    %v2468 = vpack.c.b16 %v2288, %v2284
    %v2469 = vpack.c.b16 %v2289, %v2285
    %v2470 = vpack.c.b16 %v2290, %v2286
    %v2471 = vpack.c.b16 %v2295, %v2291
    %v2472 = vpack.c.b16 %v2296, %v2292
    %v2473 = vpack.c.b16 %v2297, %v2293
    %v2474 = vpack.c.b16 %v2298, %v2294
    %v2475 = vpack.c.b16 %v2303, %v2299
    %v2476 = vpack.c.b16 %v2304, %v2300
    %v2477 = vpack.c.b16 %v2305, %v2301
    %v2478 = vpack.c.b16 %v2306, %v2302
    %v2479 = vpack.c.b16 %v2311, %v2307
    %v2480 = vpack.c.b16 %v2312, %v2308
    %v2481 = vpack.c.b16 %v2313, %v2309
    %v2482 = vpack.c.b16 %v2314, %v2310
    %v2483 = vpack.c.b16 %v2319, %v2315
    %v2484 = vpack.c.b16 %v2320, %v2316
    %v2485 = vpack.c.b16 %v2321, %v2317
    %v2486 = vpack.c.b16 %v2322, %v2318
    %v2487 = vpack.c.b16 %v2327, %v2323
    %v2488 = vpack.c.b16 %v2328, %v2324
    %v2489 = vpack.c.b16 %v2329, %v2325
    %v2490 = vpack.c.b16 %v2330, %v2326
    %v2491 = vpack.c.b16 %v2335, %v2331
    %v2492 = vpack.c.b16 %v2336, %v2332
    %v2493 = vpack.c.b16 %v2337, %v2333
    %v2494 = vpack.c.b16 %v2338, %v2334
    %v2495 = vpack.c.b16 %v2343, %v2339
    %v2496 = vpack.c.b16 %v2344, %v2340
    %v2497 = vpack.c.b16 %v2345, %v2341
    %v2498 = vpack.c.b16 %v2346, %v2342
    %v2499 = vpack.c.b16 %v2351, %v2347
    %v2500 = vpack.c.b16 %v2352, %v2348
    %v2501 = vpack.c.b16 %v2353, %v2349
    %v2502 = vpack.c.b16 %v2354, %v2350
    %v2503 = vpack.c.b16 %v2359, %v2355
    %v2504 = vpack.c.b16 %v2360, %v2356
    %v2505 = vpack.c.b16 %v2361, %v2357
    %v2506 = vpack.c.b16 %v2362, %v2358
    %v2507 = vpack.c.b16 %v2367, %v2363
    %v2508 = vpack.c.b16 %v2368, %v2364
    %v2509 = vpack.c.b16 %v2369, %v2365
    %v2510 = vpack.c.b16 %v2370, %v2366
    %v2511 = vpack.c.b16 %v2375, %v2371
    %v2512 = vpack.c.b16 %v2376, %v2372
    %v2513 = vpack.c.b16 %v2377, %v2373
    %v2514 = vpack.c.b16 %v2378, %v2374
    %v2515 = vpack.c.b16 %v2383, %v2379
    %v2516 = vpack.c.b16 %v2384, %v2380
    %v2517 = vpack.c.b16 %v2385, %v2381
    %v2518 = vpack.c.b16 %v2386, %v2382
    %v2519 = vpack.c.b16 %v2391, %v2387
    %v2520 = vpack.c.b16 %v2392, %v2388
    %v2521 = vpack.c.b16 %v2393, %v2389
    %v2522 = vpack.c.b16 %v2394, %v2390
    %2651 = vmatprep.subr.bf16.mxu0 %v2424
    %2652 = vmatpush1.bf16.msra.mxu0 %v2423
    %2653 = vmatprep.subr.bf16.mxu0 %v2420
    %2654 = vmatpush1.bf16.msra.mxu0 %v2419
    %2655 = vmatprep.subr.bf16.mxu0 %v2416
    %2656 = vmatpush1.bf16.msra.mxu0 %v2415
    %2657 = vmatprep.subr.bf16.mxu0 %v2412
    %2658 = vmatpush1.bf16.msra.mxu0 %v2411
    %2659 = vmatprep.subr.bf16.mxu0 %v2408
    %2660 = vmatpush1.bf16.msra.mxu0 %v2407
    %2661 = vmatprep.subr.bf16.mxu0 %v2404
    %2662 = vmatpush1.bf16.msra.mxu0 %v2403
    %2663 = vmatprep.subr.bf16.mxu0 %v2400
    %2664 = vmatpush1.bf16.msra.mxu0 %v2399
    %2665 = vmatprep.subr.bf16.mxu0 %v2396
    %2666 = vmatpush1.bf16.msra.mxu0 %v2395
    %2667 = vmatprep.subr.bf16.mxu0 %v2456
    %2668 = vmatpush2.bf16.msra.mxu0 %v2455
    %2669 = vmatprep.subr.bf16.mxu0 %v2452
    %2670 = vmatpush2.bf16.msra.mxu0 %v2451
    %2671 = vmatprep.subr.bf16.mxu0 %v2448
    %2672 = vmatpush2.bf16.msra.mxu0 %v2447
    %2673 = vmatprep.subr.bf16.mxu0 %v2444
    %2674 = vmatpush2.bf16.msra.mxu0 %v2443
    %2675 = vmatprep.subr.bf16.mxu0 %v2440
    %2676 = vmatpush2.bf16.msra.mxu0 %v2439
    %2677 = vmatprep.subr.bf16.mxu0 %v2436
    %2678 = vmatpush2.bf16.msra.mxu0 %v2435
    %2679 = vmatprep.subr.bf16.mxu0 %v2432
    %2680 = vmatpush2.bf16.msra.mxu0 %v2431
    %2681 = vmatprep.subr.bf16.mxu0 %v2428
    %2682 = vmatpush2.bf16.msra.mxu0 %v2427
    %2683 = vmatprep.mubr.bf16.mxu0 %v1830
    %2684 = vmatmul.mubr.bf16.gmra.mxu0 %v1829
    %v2685 = vpop.f32.mrf.mxu0
    %v2686 = vadd.f32 %v1994, %v2685
    %v2687 = vpop.f32.mrf.mxu0
    %v2688 = vadd.f32 %v1998, %v2687
    %v2689 = vpop.f32.mrf.mxu0
    %v2690 = vadd.f32 %v1994, %v2689
    %v2691 = vpop.f32.mrf.mxu0
    %v2692 = vadd.f32 %v1998, %v2691
    %2693 = vmatprep.mubr.bf16.mxu0 %v1834
    %2694 = vmatmul.mubr.bf16.gmra.mxu0 %v1833
    %v2695 = vpop.f32.mrf.mxu0
    %v2696 = vadd.f32 %v1994, %v2695
    %v2697 = vpop.f32.mrf.mxu0
    %v2698 = vadd.f32 %v1998, %v2697
    %v2699 = vpop.f32.mrf.mxu0
    %v2700 = vadd.f32 %v1994, %v2699
    %v2701 = vpop.f32.mrf.mxu0
    %v2702 = vadd.f32 %v1998, %v2701
    %2703 = vmatprep.mubr.bf16.mxu0 %v1838
    %2704 = vmatmul.mubr.bf16.gmra.mxu0 %v1837
    %v2705 = vpop.f32.mrf.mxu0
    %v2706 = vadd.f32 %v1994, %v2705
    %v2707 = vpop.f32.mrf.mxu0
    %v2708 = vadd.f32 %v1998, %v2707
    %v2709 = vpop.f32.mrf.mxu0
    %v2710 = vadd.f32 %v1994, %v2709
    %v2711 = vpop.f32.mrf.mxu0
    %v2712 = vadd.f32 %v1998, %v2711
    %2713 = vmatprep.mubr.bf16.mxu0 %v1842
    %2714 = vmatmul.mubr.bf16.gmra.mxu0 %v1841
    %v2715 = vpop.f32.mrf.mxu0
    %v2716 = vadd.f32 %v1994, %v2715
    %v2717 = vpop.f32.mrf.mxu0
    %v2718 = vadd.f32 %v1998, %v2717
    %v2719 = vpop.f32.mrf.mxu0
    %v2720 = vadd.f32 %v1994, %v2719
    %v2721 = vpop.f32.mrf.mxu0
    %v2722 = vadd.f32 %v1998, %v2721
    %2723 = vmatprep.mubr.bf16.mxu0 %v1846
    %2724 = vmatmul.mubr.bf16.gmra.mxu0 %v1845
    %v2725 = vpop.f32.mrf.mxu0
    %v2726 = vadd.f32 %v1994, %v2725
    %v2727 = vpop.f32.mrf.mxu0
    %v2728 = vadd.f32 %v1998, %v2727
    %v2729 = vpop.f32.mrf.mxu0
    %v2730 = vadd.f32 %v1994, %v2729
    %v2731 = vpop.f32.mrf.mxu0
    %v2732 = vadd.f32 %v1998, %v2731
    %2733 = vmatprep.mubr.bf16.mxu0 %v1850
    %2734 = vmatmul.mubr.bf16.gmra.mxu0 %v1849
    %v2735 = vpop.f32.mrf.mxu0
    %v2736 = vadd.f32 %v1994, %v2735
    %v2737 = vpop.f32.mrf.mxu0
    %v2738 = vadd.f32 %v1998, %v2737
    %v2739 = vpop.f32.mrf.mxu0
    %v2740 = vadd.f32 %v1994, %v2739
    %v2741 = vpop.f32.mrf.mxu0
    %v2742 = vadd.f32 %v1998, %v2741
    %2743 = vmatprep.mubr.bf16.mxu0 %v1854
    %2744 = vmatmul.mubr.bf16.gmra.mxu0 %v1853
    %v2745 = vpop.f32.mrf.mxu0
    %v2746 = vadd.f32 %v1994, %v2745
    %v2747 = vpop.f32.mrf.mxu0
    %v2748 = vadd.f32 %v1998, %v2747
    %v2749 = vpop.f32.mrf.mxu0
    %v2750 = vadd.f32 %v1994, %v2749
    %v2751 = vpop.f32.mrf.mxu0
    %v2752 = vadd.f32 %v1998, %v2751
    %2753 = vmatprep.mubr.bf16.mxu0 %v1858
    %2754 = vmatmul.mubr.bf16.gmra.mxu0 %v1857
    %v2755 = vpop.f32.mrf.mxu0
    %v2756 = vadd.f32 %v1994, %v2755
    %v2757 = vpop.f32.mrf.mxu0
    %v2758 = vadd.f32 %v1998, %v2757
    %v2759 = vpop.f32.mrf.mxu0
    %v2760 = vadd.f32 %v1994, %v2759
    %v2761 = vpop.f32.mrf.mxu0
    %v2762 = vadd.f32 %v1998, %v2761
    %2763 = vdwg.mxu0
    %2764 = vmatprep.subr.bf16.mxu0 %v2488
    %2765 = vmatpush1.bf16.msra.mxu0 %v2487
    %2766 = vmatprep.subr.bf16.mxu0 %v2484
    %2767 = vmatpush1.bf16.msra.mxu0 %v2483
    %2768 = vmatprep.subr.bf16.mxu0 %v2480
    %2769 = vmatpush1.bf16.msra.mxu0 %v2479
    %2770 = vmatprep.subr.bf16.mxu0 %v2476
    %2771 = vmatpush1.bf16.msra.mxu0 %v2475
    %2772 = vmatprep.subr.bf16.mxu0 %v2472
    %2773 = vmatpush1.bf16.msra.mxu0 %v2471
    %2774 = vmatprep.subr.bf16.mxu0 %v2468
    %2775 = vmatpush1.bf16.msra.mxu0 %v2467
    %2776 = vmatprep.subr.bf16.mxu0 %v2464
    %2777 = vmatpush1.bf16.msra.mxu0 %v2463
    %2778 = vmatprep.subr.bf16.mxu0 %v2460
    %2779 = vmatpush1.bf16.msra.mxu0 %v2459
    %2780 = vmatprep.subr.bf16.mxu0 %v2520
    %2781 = vmatpush2.bf16.msra.mxu0 %v2519
    %2782 = vmatprep.subr.bf16.mxu0 %v2516
    %2783 = vmatpush2.bf16.msra.mxu0 %v2515
    %2784 = vmatprep.subr.bf16.mxu0 %v2512
    %2785 = vmatpush2.bf16.msra.mxu0 %v2511
    %2786 = vmatprep.subr.bf16.mxu0 %v2508
    %2787 = vmatpush2.bf16.msra.mxu0 %v2507
    %2788 = vmatprep.subr.bf16.mxu0 %v2504
    %2789 = vmatpush2.bf16.msra.mxu0 %v2503
    %2790 = vmatprep.subr.bf16.mxu0 %v2500
    %2791 = vmatpush2.bf16.msra.mxu0 %v2499
    %2792 = vmatprep.subr.bf16.mxu0 %v2496
    %2793 = vmatpush2.bf16.msra.mxu0 %v2495
    %2794 = vmatprep.subr.bf16.mxu0 %v2492
    %2795 = vmatpush2.bf16.msra.mxu0 %v2491
    %2796 = vmatprep.mubr.bf16.mxu0 %v1832
    %2797 = vmatmul.mubr.bf16.gmra.mxu0 %v1831
    %v2798 = vpop.f32.mrf.mxu0
    %v2799 = vadd.f32 %v2686, %v2798
    %v2800 = vpop.f32.mrf.mxu0
    %v2801 = vadd.f32 %v2688, %v2800
    %v2802 = vpop.f32.mrf.mxu0
    %v2803 = vadd.f32 %v2690, %v2802
    %v2804 = vpop.f32.mrf.mxu0
    %v2805 = vadd.f32 %v2692, %v2804
    %2806 = vmatprep.mubr.bf16.mxu0 %v1836
    %2807 = vmatmul.mubr.bf16.gmra.mxu0 %v1835
    %v2808 = vpop.f32.mrf.mxu0
    %v2809 = vadd.f32 %v2696, %v2808
    %v2810 = vpop.f32.mrf.mxu0
    %v2811 = vadd.f32 %v2698, %v2810
    %v2812 = vpop.f32.mrf.mxu0
    %v2813 = vadd.f32 %v2700, %v2812
    %v2814 = vpop.f32.mrf.mxu0
    %v2815 = vadd.f32 %v2702, %v2814
    %2816 = vmatprep.mubr.bf16.mxu0 %v1840
    %2817 = vmatmul.mubr.bf16.gmra.mxu0 %v1839
    %v2818 = vpop.f32.mrf.mxu0
    %v2819 = vadd.f32 %v2706, %v2818
    %v2820 = vpop.f32.mrf.mxu0
    %v2821 = vadd.f32 %v2708, %v2820
    %v2822 = vpop.f32.mrf.mxu0
    %v2823 = vadd.f32 %v2710, %v2822
    %v2824 = vpop.f32.mrf.mxu0
    %v2825 = vadd.f32 %v2712, %v2824
    %2826 = vmatprep.mubr.bf16.mxu0 %v1844
    %2827 = vmatmul.mubr.bf16.gmra.mxu0 %v1843
    %v2828 = vpop.f32.mrf.mxu0
    %v2829 = vadd.f32 %v2716, %v2828
    %v2830 = vpop.f32.mrf.mxu0
    %v2831 = vadd.f32 %v2718, %v2830
    %v2832 = vpop.f32.mrf.mxu0
    %v2833 = vadd.f32 %v2720, %v2832
    %v2834 = vpop.f32.mrf.mxu0
    %v2835 = vadd.f32 %v2722, %v2834
    %2836 = vmatprep.mubr.bf16.mxu0 %v1848
    %2837 = vmatmul.mubr.bf16.gmra.mxu0 %v1847
    %v2838 = vpop.f32.mrf.mxu0
    %v2839 = vadd.f32 %v2726, %v2838
    %v2840 = vpop.f32.mrf.mxu0
    %v2841 = vadd.f32 %v2728, %v2840
    %v2842 = vpop.f32.mrf.mxu0
    %v2843 = vadd.f32 %v2730, %v2842
    %v2844 = vpop.f32.mrf.mxu0
    %v2845 = vadd.f32 %v2732, %v2844
    %2846 = vmatprep.mubr.bf16.mxu0 %v1852
    %2847 = vmatmul.mubr.bf16.gmra.mxu0 %v1851
    %v2848 = vpop.f32.mrf.mxu0
    %v2849 = vadd.f32 %v2736, %v2848
    %v2850 = vpop.f32.mrf.mxu0
    %v2851 = vadd.f32 %v2738, %v2850
    %v2852 = vpop.f32.mrf.mxu0
    %v2853 = vadd.f32 %v2740, %v2852
    %v2854 = vpop.f32.mrf.mxu0
    %v2855 = vadd.f32 %v2742, %v2854
    %2856 = vmatprep.mubr.bf16.mxu0 %v1856
    %2857 = vmatmul.mubr.bf16.gmra.mxu0 %v1855
    %v2858 = vpop.f32.mrf.mxu0
    %v2859 = vadd.f32 %v2746, %v2858
    %v2860 = vpop.f32.mrf.mxu0
    %v2861 = vadd.f32 %v2748, %v2860
    %v2862 = vpop.f32.mrf.mxu0
    %v2863 = vadd.f32 %v2750, %v2862
    %v2864 = vpop.f32.mrf.mxu0
    %v2865 = vadd.f32 %v2752, %v2864
    %2866 = vmatprep.mubr.bf16.mxu0 %v1860
    %2867 = vmatmul.mubr.bf16.gmra.mxu0 %v1859
    %v2868 = vpop.f32.mrf.mxu0
    %v2869 = vadd.f32 %v2756, %v2868
    %v2870 = vpop.f32.mrf.mxu0
    %v2871 = vadd.f32 %v2758, %v2870
    %v2872 = vpop.f32.mrf.mxu0
    %v2873 = vadd.f32 %v2760, %v2872
    %v2874 = vpop.f32.mrf.mxu0
    %v2875 = vadd.f32 %v2762, %v2874
    %2876 = vdwg.mxu0
    %2877 = vmatprep.subr.bf16.mxu0 %v2426
    %2878 = vmatpush1.bf16.msra.mxu0 %v2425
    %2879 = vmatprep.subr.bf16.mxu0 %v2422
    %2880 = vmatpush1.bf16.msra.mxu0 %v2421
    %2881 = vmatprep.subr.bf16.mxu0 %v2418
    %2882 = vmatpush1.bf16.msra.mxu0 %v2417
    %2883 = vmatprep.subr.bf16.mxu0 %v2414
    %2884 = vmatpush1.bf16.msra.mxu0 %v2413
    %2885 = vmatprep.subr.bf16.mxu0 %v2410
    %2886 = vmatpush1.bf16.msra.mxu0 %v2409
    %2887 = vmatprep.subr.bf16.mxu0 %v2406
    %2888 = vmatpush1.bf16.msra.mxu0 %v2405
    %2889 = vmatprep.subr.bf16.mxu0 %v2402
    %2890 = vmatpush1.bf16.msra.mxu0 %v2401
    %2891 = vmatprep.subr.bf16.mxu0 %v2398
    %2892 = vmatpush1.bf16.msra.mxu0 %v2397
    %2893 = vmatprep.subr.bf16.mxu0 %v2458
    %2894 = vmatpush2.bf16.msra.mxu0 %v2457
    %2895 = vmatprep.subr.bf16.mxu0 %v2454
    %2896 = vmatpush2.bf16.msra.mxu0 %v2453
    %2897 = vmatprep.subr.bf16.mxu0 %v2450
    %2898 = vmatpush2.bf16.msra.mxu0 %v2449
    %2899 = vmatprep.subr.bf16.mxu0 %v2446
    %2900 = vmatpush2.bf16.msra.mxu0 %v2445
    %2901 = vmatprep.subr.bf16.mxu0 %v2442
    %2902 = vmatpush2.bf16.msra.mxu0 %v2441
    %2903 = vmatprep.subr.bf16.mxu0 %v2438
    %2904 = vmatpush2.bf16.msra.mxu0 %v2437
    %2905 = vmatprep.subr.bf16.mxu0 %v2434
    %2906 = vmatpush2.bf16.msra.mxu0 %v2433
    %2907 = vmatprep.subr.bf16.mxu0 %v2430
    %2908 = vmatpush2.bf16.msra.mxu0 %v2429
    %2909 = vmatprep.mubr.bf16.mxu0 %v1830
    %2910 = vmatmul.mubr.bf16.gmra.mxu0 %v1829
    %v2911 = vpop.f32.mrf.mxu0
    %v2912 = vadd.f32 %v2002, %v2911
    %v2913 = vpop.f32.mrf.mxu0
    %v2914 = vadd.f32 %v2006, %v2913
    %v2915 = vpop.f32.mrf.mxu0
    %v2916 = vadd.f32 %v2002, %v2915
    %v2917 = vpop.f32.mrf.mxu0
    %v2918 = vadd.f32 %v2006, %v2917
    %2919 = vmatprep.mubr.bf16.mxu0 %v1834
    %2920 = vmatmul.mubr.bf16.gmra.mxu0 %v1833
    %v2921 = vpop.f32.mrf.mxu0
    %v2922 = vadd.f32 %v2002, %v2921
    %v2923 = vpop.f32.mrf.mxu0
    %v2924 = vadd.f32 %v2006, %v2923
    %v2925 = vpop.f32.mrf.mxu0
    %v2926 = vadd.f32 %v2002, %v2925
    %v2927 = vpop.f32.mrf.mxu0
    %v2928 = vadd.f32 %v2006, %v2927
    %2929 = vmatprep.mubr.bf16.mxu0 %v1838
    %2930 = vmatmul.mubr.bf16.gmra.mxu0 %v1837
    %v2931 = vpop.f32.mrf.mxu0
    %v2932 = vadd.f32 %v2002, %v2931
    %v2933 = vpop.f32.mrf.mxu0
    %v2934 = vadd.f32 %v2006, %v2933
    %v2935 = vpop.f32.mrf.mxu0
    %v2936 = vadd.f32 %v2002, %v2935
    %v2937 = vpop.f32.mrf.mxu0
    %v2938 = vadd.f32 %v2006, %v2937
    %2939 = vmatprep.mubr.bf16.mxu0 %v1842
    %2940 = vmatmul.mubr.bf16.gmra.mxu0 %v1841
    %v2941 = vpop.f32.mrf.mxu0
    %v2942 = vadd.f32 %v2002, %v2941
    %v2943 = vpop.f32.mrf.mxu0
    %v2944 = vadd.f32 %v2006, %v2943
    %v2945 = vpop.f32.mrf.mxu0
    %v2946 = vadd.f32 %v2002, %v2945
    %v2947 = vpop.f32.mrf.mxu0
    %v2948 = vadd.f32 %v2006, %v2947
    %2949 = vmatprep.mubr.bf16.mxu0 %v1846
    %2950 = vmatmul.mubr.bf16.gmra.mxu0 %v1845
    %v2951 = vpop.f32.mrf.mxu0
    %v2952 = vadd.f32 %v2002, %v2951
    %v2953 = vpop.f32.mrf.mxu0
    %v2954 = vadd.f32 %v2006, %v2953
    %v2955 = vpop.f32.mrf.mxu0
    %v2956 = vadd.f32 %v2002, %v2955
    %v2957 = vpop.f32.mrf.mxu0
    %v2958 = vadd.f32 %v2006, %v2957
    %2959 = vmatprep.mubr.bf16.mxu0 %v1850
    %2960 = vmatmul.mubr.bf16.gmra.mxu0 %v1849
    %v2961 = vpop.f32.mrf.mxu0
    %v2962 = vadd.f32 %v2002, %v2961
    %v2963 = vpop.f32.mrf.mxu0
    %v2964 = vadd.f32 %v2006, %v2963
    %v2965 = vpop.f32.mrf.mxu0
    %v2966 = vadd.f32 %v2002, %v2965
    %v2967 = vpop.f32.mrf.mxu0
    %v2968 = vadd.f32 %v2006, %v2967
    %2969 = vmatprep.mubr.bf16.mxu0 %v1854
    %2970 = vmatmul.mubr.bf16.gmra.mxu0 %v1853
    %v2971 = vpop.f32.mrf.mxu0
    %v2972 = vadd.f32 %v2002, %v2971
    %v2973 = vpop.f32.mrf.mxu0
    %v2974 = vadd.f32 %v2006, %v2973
    %v2975 = vpop.f32.mrf.mxu0
    %v2976 = vadd.f32 %v2002, %v2975
    %v2977 = vpop.f32.mrf.mxu0
    %v2978 = vadd.f32 %v2006, %v2977
    %2979 = vmatprep.mubr.bf16.mxu0 %v1858
    %2980 = vmatmul.mubr.bf16.gmra.mxu0 %v1857
    %v2981 = vpop.f32.mrf.mxu0
    %v2982 = vadd.f32 %v2002, %v2981
    %v2983 = vpop.f32.mrf.mxu0
    %v2984 = vadd.f32 %v2006, %v2983
    %v2985 = vpop.f32.mrf.mxu0
    %v2986 = vadd.f32 %v2002, %v2985
    %v2987 = vpop.f32.mrf.mxu0
    %v2988 = vadd.f32 %v2006, %v2987
    %2989 = vdwg.mxu0
    %2990 = vmatprep.subr.bf16.mxu0 %v2490
    %2991 = vmatpush1.bf16.msra.mxu0 %v2489
    %2992 = vmatprep.subr.bf16.mxu0 %v2486
    %2993 = vmatpush1.bf16.msra.mxu0 %v2485
    %2994 = vmatprep.subr.bf16.mxu0 %v2482
    %2995 = vmatpush1.bf16.msra.mxu0 %v2481
    %2996 = vmatprep.subr.bf16.mxu0 %v2478
    %2997 = vmatpush1.bf16.msra.mxu0 %v2477
    %2998 = vmatprep.subr.bf16.mxu0 %v2474
    %2999 = vmatpush1.bf16.msra.mxu0 %v2473
    %3000 = vmatprep.subr.bf16.mxu0 %v2470
    %3001 = vmatpush1.bf16.msra.mxu0 %v2469
    %3002 = vmatprep.subr.bf16.mxu0 %v2466
    %3003 = vmatpush1.bf16.msra.mxu0 %v2465
    %3004 = vmatprep.subr.bf16.mxu0 %v2462
    %3005 = vmatpush1.bf16.msra.mxu0 %v2461
    %3006 = vmatprep.subr.bf16.mxu0 %v2522
    %3007 = vmatpush2.bf16.msra.mxu0 %v2521
    %3008 = vmatprep.subr.bf16.mxu0 %v2518
    %3009 = vmatpush2.bf16.msra.mxu0 %v2517
    %3010 = vmatprep.subr.bf16.mxu0 %v2514
    %3011 = vmatpush2.bf16.msra.mxu0 %v2513
    %3012 = vmatprep.subr.bf16.mxu0 %v2510
    %3013 = vmatpush2.bf16.msra.mxu0 %v2509
    %3014 = vmatprep.subr.bf16.mxu0 %v2506
    %3015 = vmatpush2.bf16.msra.mxu0 %v2505
    %3016 = vmatprep.subr.bf16.mxu0 %v2502
    %3017 = vmatpush2.bf16.msra.mxu0 %v2501
    %3018 = vmatprep.subr.bf16.mxu0 %v2498
    %3019 = vmatpush2.bf16.msra.mxu0 %v2497
    %3020 = vmatprep.subr.bf16.mxu0 %v2494
    %3021 = vmatpush2.bf16.msra.mxu0 %v2493
    %3022 = vmatprep.mubr.bf16.mxu0 %v1832
    %3023 = vmatmul.mubr.bf16.gmra.mxu0 %v1831
    %v3024 = vpop.f32.mrf.mxu0
    %v3025 = vadd.f32 %v2912, %v3024
    %v3026 = vpop.f32.mrf.mxu0
    %v3027 = vadd.f32 %v2914, %v3026
    %v3028 = vpop.f32.mrf.mxu0
    %v3029 = vadd.f32 %v2916, %v3028
    %v3030 = vpop.f32.mrf.mxu0
    %v3031 = vadd.f32 %v2918, %v3030
    %3032 = vmatprep.mubr.bf16.mxu0 %v1836
    %3033 = vmatmul.mubr.bf16.gmra.mxu0 %v1835
    %v3034 = vpop.f32.mrf.mxu0
    %v3035 = vadd.f32 %v2922, %v3034
    %v3036 = vpop.f32.mrf.mxu0
    %v3037 = vadd.f32 %v2924, %v3036
    %v3038 = vpop.f32.mrf.mxu0
    %v3039 = vadd.f32 %v2926, %v3038
    %v3040 = vpop.f32.mrf.mxu0
    %v3041 = vadd.f32 %v2928, %v3040
    %3042 = vmatprep.mubr.bf16.mxu0 %v1840
    %3043 = vmatmul.mubr.bf16.gmra.mxu0 %v1839
    %v3044 = vpop.f32.mrf.mxu0
    %v3045 = vadd.f32 %v2932, %v3044
    %v3046 = vpop.f32.mrf.mxu0
    %v3047 = vadd.f32 %v2934, %v3046
    %v3048 = vpop.f32.mrf.mxu0
    %v3049 = vadd.f32 %v2936, %v3048
    %v3050 = vpop.f32.mrf.mxu0
    %v3051 = vadd.f32 %v2938, %v3050
    %3052 = vmatprep.mubr.bf16.mxu0 %v1844
    %3053 = vmatmul.mubr.bf16.gmra.mxu0 %v1843
    %v3054 = vpop.f32.mrf.mxu0
    %v3055 = vadd.f32 %v2942, %v3054
    %v3056 = vpop.f32.mrf.mxu0
    %v3057 = vadd.f32 %v2944, %v3056
    %v3058 = vpop.f32.mrf.mxu0
    %v3059 = vadd.f32 %v2946, %v3058
    %v3060 = vpop.f32.mrf.mxu0
    %v3061 = vadd.f32 %v2948, %v3060
    %3062 = vmatprep.mubr.bf16.mxu0 %v1848
    %3063 = vmatmul.mubr.bf16.gmra.mxu0 %v1847
    %v3064 = vpop.f32.mrf.mxu0
    %v3065 = vadd.f32 %v2952, %v3064
    %v3066 = vpop.f32.mrf.mxu0
    %v3067 = vadd.f32 %v2954, %v3066
    %v3068 = vpop.f32.mrf.mxu0
    %v3069 = vadd.f32 %v2956, %v3068
    %v3070 = vpop.f32.mrf.mxu0
    %v3071 = vadd.f32 %v2958, %v3070
    %3072 = vmatprep.mubr.bf16.mxu0 %v1852
    %3073 = vmatmul.mubr.bf16.gmra.mxu0 %v1851
    %v3074 = vpop.f32.mrf.mxu0
    %v3075 = vadd.f32 %v2962, %v3074
    %v3076 = vpop.f32.mrf.mxu0
    %v3077 = vadd.f32 %v2964, %v3076
    %v3078 = vpop.f32.mrf.mxu0
    %v3079 = vadd.f32 %v2966, %v3078
    %v3080 = vpop.f32.mrf.mxu0
    %v3081 = vadd.f32 %v2968, %v3080
    %3082 = vmatprep.mubr.bf16.mxu0 %v1856
    %3083 = vmatmul.mubr.bf16.gmra.mxu0 %v1855
    %v3084 = vpop.f32.mrf.mxu0
    %v3085 = vadd.f32 %v2972, %v3084
    %v3086 = vpop.f32.mrf.mxu0
    %v3087 = vadd.f32 %v2974, %v3086
    %v3088 = vpop.f32.mrf.mxu0
    %v3089 = vadd.f32 %v2976, %v3088
    %v3090 = vpop.f32.mrf.mxu0
    %v3091 = vadd.f32 %v2978, %v3090
    %3092 = vmatprep.mubr.bf16.mxu0 %v1860
    %3093 = vmatmul.mubr.bf16.gmra.mxu0 %v1859
    %v3094 = vpop.f32.mrf.mxu0
    %v3095 = vadd.f32 %v2982, %v3094
    %v3096 = vpop.f32.mrf.mxu0
    %v3097 = vadd.f32 %v2984, %v3096
    %v3098 = vpop.f32.mrf.mxu0
    %v3099 = vadd.f32 %v2986, %v3098
    %v3100 = vpop.f32.mrf.mxu0
    %v3101 = vadd.f32 %v2988, %v3100
    %3102 = vdwg.mxu0
    %v3103 = vmax.f32 %v2799, 0.0
    %v3104 = vmax.f32 %v2801, 0.0
    %v3105 = vmax.f32 %v3025, 0.0
    %v3106 = vmax.f32 %v3027, 0.0
    %v3107 = vmax.f32 %v2803, 0.0
    %v3108 = vmax.f32 %v2805, 0.0
    %v3109 = vmax.f32 %v3029, 0.0
    %v3110 = vmax.f32 %v3031, 0.0
    %v3111 = vmax.f32 %v2809, 0.0
    %v3112 = vmax.f32 %v2811, 0.0
    %v3113 = vmax.f32 %v3035, 0.0
    %v3114 = vmax.f32 %v3037, 0.0
    %v3115 = vmax.f32 %v2813, 0.0
    %v3116 = vmax.f32 %v2815, 0.0
    %v3117 = vmax.f32 %v3039, 0.0
    %v3118 = vmax.f32 %v3041, 0.0
    %v3119 = vmax.f32 %v2819, 0.0
    %v3120 = vmax.f32 %v2821, 0.0
    %v3121 = vmax.f32 %v3045, 0.0
    %v3122 = vmax.f32 %v3047, 0.0
    %v3123 = vmax.f32 %v2823, 0.0
    %v3124 = vmax.f32 %v2825, 0.0
    %v3125 = vmax.f32 %v3049, 0.0
    %v3126 = vmax.f32 %v3051, 0.0
    %v3127 = vmax.f32 %v2829, 0.0
    %v3128 = vmax.f32 %v2831, 0.0
    %v3129 = vmax.f32 %v3055, 0.0
    %v3130 = vmax.f32 %v3057, 0.0
    %v3131 = vmax.f32 %v2833, 0.0
    %v3132 = vmax.f32 %v2835, 0.0
    %v3133 = vmax.f32 %v3059, 0.0
    %v3134 = vmax.f32 %v3061, 0.0
    %v3135 = vmax.f32 %v2839, 0.0
    %v3136 = vmax.f32 %v2841, 0.0
    %v3137 = vmax.f32 %v3065, 0.0
    %v3138 = vmax.f32 %v3067, 0.0
    %v3139 = vmax.f32 %v2843, 0.0
    %v3140 = vmax.f32 %v2845, 0.0
    %v3141 = vmax.f32 %v3069, 0.0
    %v3142 = vmax.f32 %v3071, 0.0
    %v3143 = vmax.f32 %v2849, 0.0
    %v3144 = vmax.f32 %v2851, 0.0
    %v3145 = vmax.f32 %v3075, 0.0
    %v3146 = vmax.f32 %v3077, 0.0
    %v3147 = vmax.f32 %v2853, 0.0
    %v3148 = vmax.f32 %v2855, 0.0
    %v3149 = vmax.f32 %v3079, 0.0
    %v3150 = vmax.f32 %v3081, 0.0
    %v3151 = vmax.f32 %v2859, 0.0
    %v3152 = vmax.f32 %v2861, 0.0
    %v3153 = vmax.f32 %v3085, 0.0
    %v3154 = vmax.f32 %v3087, 0.0
    %v3155 = vmax.f32 %v2863, 0.0
    %v3156 = vmax.f32 %v2865, 0.0
    %v3157 = vmax.f32 %v3089, 0.0
    %v3158 = vmax.f32 %v3091, 0.0
    %v3159 = vmax.f32 %v2869, 0.0
    %v3160 = vmax.f32 %v2871, 0.0
    %v3161 = vmax.f32 %v3095, 0.0
    %v3162 = vmax.f32 %v3097, 0.0
    %v3163 = vmax.f32 %v2873, 0.0
    %v3164 = vmax.f32 %v2875, 0.0
    %v3165 = vmax.f32 %v3099, 0.0
    %v3166 = vmax.f32 %v3101, 0.0
    %v3167 = vpack.c.bf16 %v3107, %v3103
    %v3168 = vpack.c.bf16 %v3108, %v3104
    %v3169 = vpack.c.bf16 %v3109, %v3105
    %v3170 = vpack.c.bf16 %v3110, %v3106
    %v3171 = vpack.c.bf16 %v3115, %v3111
    %v3172 = vpack.c.bf16 %v3116, %v3112
    %v3173 = vpack.c.bf16 %v3117, %v3113
    %v3174 = vpack.c.bf16 %v3118, %v3114
    %v3175 = vpack.c.bf16 %v3123, %v3119
    %v3176 = vpack.c.bf16 %v3124, %v3120
    %v3177 = vpack.c.bf16 %v3125, %v3121
    %v3178 = vpack.c.bf16 %v3126, %v3122
    %v3179 = vpack.c.bf16 %v3131, %v3127
    %v3180 = vpack.c.bf16 %v3132, %v3128
    %v3181 = vpack.c.bf16 %v3133, %v3129
    %v3182 = vpack.c.bf16 %v3134, %v3130
    %v3183 = vpack.c.bf16 %v3139, %v3135
    %v3184 = vpack.c.bf16 %v3140, %v3136
    %v3185 = vpack.c.bf16 %v3141, %v3137
    %v3186 = vpack.c.bf16 %v3142, %v3138
    %v3187 = vpack.c.bf16 %v3147, %v3143
    %v3188 = vpack.c.bf16 %v3148, %v3144
    %v3189 = vpack.c.bf16 %v3149, %v3145
    %v3190 = vpack.c.bf16 %v3150, %v3146
    %v3191 = vpack.c.bf16 %v3155, %v3151
    %v3192 = vpack.c.bf16 %v3156, %v3152
    %v3193 = vpack.c.bf16 %v3157, %v3153
    %v3194 = vpack.c.bf16 %v3158, %v3154
    %v3195 = vpack.c.bf16 %v3163, %v3159
    %v3196 = vpack.c.bf16 %v3164, %v3160
    %v3197 = vpack.c.bf16 %v3165, %v3161
    %v3198 = vpack.c.bf16 %v3166, %v3162
    %v3199 = vld [vmem:[#allocation7] sm:$0xff]
    %v3200 = vld [vmem:[#allocation7 + $0x8] sm:$0xff]
    %v3201 = vld [vmem:[#allocation7 + $0x10] sm:$0xff]
    %v3202 = vld [vmem:[#allocation7 + $0x18] sm:$0xff]
    %v3203 = vld [vmem:[#allocation7 + $0x20] sm:$0xff]
    %v3204 = vld [vmem:[#allocation7 + $0x28] sm:$0xff]
    %v3205 = vld [vmem:[#allocation7 + $0x30] sm:$0xff]
    %v3206 = vld [vmem:[#allocation7 + $0x38] sm:$0xff]
    %v3207 = vld [vmem:[#allocation7 + $0x40] sm:$0xff]
    %v3208 = vld [vmem:[#allocation7 + $0x48] sm:$0xff]
    %v3209 = vld [vmem:[#allocation7 + $0x50] sm:$0xff]
    %v3210 = vld [vmem:[#allocation7 + $0x58] sm:$0xff]
    %v3211 = vld [vmem:[#allocation7 + $0x60] sm:$0xff]
    %v3212 = vld [vmem:[#allocation7 + $0x68] sm:$0xff]
    %v3213 = vld [vmem:[#allocation7 + $0x70] sm:$0xff]
    %v3214 = vld [vmem:[#allocation7 + $0x78] sm:$0xff]
    %v3215 = vld [vmem:[#allocation7 + $0x80] sm:$0xff]
    %v3216 = vld [vmem:[#allocation7 + $0x88] sm:$0xff]
    %v3217 = vld [vmem:[#allocation7 + $0x90] sm:$0xff]
    %v3218 = vld [vmem:[#allocation7 + $0x98] sm:$0xff]
    %v3219 = vld [vmem:[#allocation7 + $0xa0] sm:$0xff]
    %v3220 = vld [vmem:[#allocation7 + $0xa8] sm:$0xff]
    %v3221 = vld [vmem:[#allocation7 + $0xb0] sm:$0xff]
    %v3222 = vld [vmem:[#allocation7 + $0xb8] sm:$0xff]
    %v3223 = vld [vmem:[#allocation7 + $0xc0] sm:$0xff]
    %v3224 = vld [vmem:[#allocation7 + $0xc8] sm:$0xff]
    %v3225 = vld [vmem:[#allocation7 + $0xd0] sm:$0xff]
    %v3226 = vld [vmem:[#allocation7 + $0xd8] sm:$0xff]
    %v3227 = vld [vmem:[#allocation7 + $0xe0] sm:$0xff]
    %v3228 = vld [vmem:[#allocation7 + $0xe8] sm:$0xff]
    %v3229 = vld [vmem:[#allocation7 + $0xf0] sm:$0xff]
    %v3230 = vld [vmem:[#allocation7 + $0xf8] sm:$0xff]
    %v3231 = vld [vmem:[#allocation7 + $0x100] sm:$0xff]
    %v3232 = vld [vmem:[#allocation7 + $0x108] sm:$0xff]
    %v3233 = vld [vmem:[#allocation7 + $0x110] sm:$0xff]
    %v3234 = vld [vmem:[#allocation7 + $0x118] sm:$0xff]
    %v3235 = vld [vmem:[#allocation7 + $0x120] sm:$0xff]
    %v3236 = vld [vmem:[#allocation7 + $0x128] sm:$0xff]
    %v3237 = vld [vmem:[#allocation7 + $0x130] sm:$0xff]
    %v3238 = vld [vmem:[#allocation7 + $0x138] sm:$0xff]
    %v3239 = vld [vmem:[#allocation7 + $0x140] sm:$0xff]
    %v3240 = vld [vmem:[#allocation7 + $0x148] sm:$0xff]
    %v3241 = vld [vmem:[#allocation7 + $0x150] sm:$0xff]
    %v3242 = vld [vmem:[#allocation7 + $0x158] sm:$0xff]
    %v3243 = vld [vmem:[#allocation7 + $0x160] sm:$0xff]
    %v3244 = vld [vmem:[#allocation7 + $0x168] sm:$0xff]
    %v3245 = vld [vmem:[#allocation7 + $0x170] sm:$0xff]
    %v3246 = vld [vmem:[#allocation7 + $0x178] sm:$0xff]
    %v3247 = vld [vmem:[#allocation7 + $0x180] sm:$0xff]
    %v3248 = vld [vmem:[#allocation7 + $0x188] sm:$0xff]
    %v3249 = vld [vmem:[#allocation7 + $0x190] sm:$0xff]
    %v3250 = vld [vmem:[#allocation7 + $0x198] sm:$0xff]
    %v3251 = vld [vmem:[#allocation7 + $0x1a0] sm:$0xff]
    %v3252 = vld [vmem:[#allocation7 + $0x1a8] sm:$0xff]
    %v3253 = vld [vmem:[#allocation7 + $0x1b0] sm:$0xff]
    %v3254 = vld [vmem:[#allocation7 + $0x1b8] sm:$0xff]
    %v3255 = vld [vmem:[#allocation7 + $0x1c0] sm:$0xff]
    %v3256 = vld [vmem:[#allocation7 + $0x1c8] sm:$0xff]
    %v3257 = vld [vmem:[#allocation7 + $0x1d0] sm:$0xff]
    %v3258 = vld [vmem:[#allocation7 + $0x1d8] sm:$0xff]
    %v3259 = vld [vmem:[#allocation7 + $0x1e0] sm:$0xff]
    %v3260 = vld [vmem:[#allocation7 + $0x1e8] sm:$0xff]
    %v3261 = vld [vmem:[#allocation7 + $0x1f0] sm:$0xff]
    %v3262 = vld [vmem:[#allocation7 + $0x1f8] sm:$0xff]
    %v3263 = vld [vmem:[#allocation7 + $0x200] sm:$0xff]
    %v3264 = vld [vmem:[#allocation7 + $0x208] sm:$0xff]
    %v3265 = vld [vmem:[#allocation7 + $0x210] sm:$0xff]
    %v3266 = vld [vmem:[#allocation7 + $0x218] sm:$0xff]
    %v3267 = vld [vmem:[#allocation7 + $0x220] sm:$0xff]
    %v3268 = vld [vmem:[#allocation7 + $0x228] sm:$0xff]
    %v3269 = vld [vmem:[#allocation7 + $0x230] sm:$0xff]
    %v3270 = vld [vmem:[#allocation7 + $0x238] sm:$0xff]
    %v3271 = vld [vmem:[#allocation7 + $0x240] sm:$0xff]
    %v3272 = vld [vmem:[#allocation7 + $0x248] sm:$0xff]
    %v3273 = vld [vmem:[#allocation7 + $0x250] sm:$0xff]
    %v3274 = vld [vmem:[#allocation7 + $0x258] sm:$0xff]
    %v3275 = vld [vmem:[#allocation7 + $0x260] sm:$0xff]
    %v3276 = vld [vmem:[#allocation7 + $0x268] sm:$0xff]
    %v3277 = vld [vmem:[#allocation7 + $0x270] sm:$0xff]
    %v3278 = vld [vmem:[#allocation7 + $0x278] sm:$0xff]
    %v3279 = vld [vmem:[#allocation7 + $0x280] sm:$0xff]
    %v3280 = vld [vmem:[#allocation7 + $0x288] sm:$0xff]
    %v3281 = vld [vmem:[#allocation7 + $0x290] sm:$0xff]
    %v3282 = vld [vmem:[#allocation7 + $0x298] sm:$0xff]
    %v3283 = vld [vmem:[#allocation7 + $0x2a0] sm:$0xff]
    %v3284 = vld [vmem:[#allocation7 + $0x2a8] sm:$0xff]
    %v3285 = vld [vmem:[#allocation7 + $0x2b0] sm:$0xff]
    %v3286 = vld [vmem:[#allocation7 + $0x2b8] sm:$0xff]
    %v3287 = vld [vmem:[#allocation7 + $0x2c0] sm:$0xff]
    %v3288 = vld [vmem:[#allocation7 + $0x2c8] sm:$0xff]
    %v3289 = vld [vmem:[#allocation7 + $0x2d0] sm:$0xff]
    %v3290 = vld [vmem:[#allocation7 + $0x2d8] sm:$0xff]
    %v3291 = vld [vmem:[#allocation7 + $0x2e0] sm:$0xff]
    %v3292 = vld [vmem:[#allocation7 + $0x2e8] sm:$0xff]
    %v3293 = vld [vmem:[#allocation7 + $0x2f0] sm:$0xff]
    %v3294 = vld [vmem:[#allocation7 + $0x2f8] sm:$0xff]
    %v3295 = vld [vmem:[#allocation7 + $0x300] sm:$0xff]
    %v3296 = vld [vmem:[#allocation7 + $0x308] sm:$0xff]
    %v3297 = vld [vmem:[#allocation7 + $0x310] sm:$0xff]
    %v3298 = vld [vmem:[#allocation7 + $0x318] sm:$0xff]
    %v3299 = vld [vmem:[#allocation7 + $0x320] sm:$0xff]
    %v3300 = vld [vmem:[#allocation7 + $0x328] sm:$0xff]
    %v3301 = vld [vmem:[#allocation7 + $0x330] sm:$0xff]
    %v3302 = vld [vmem:[#allocation7 + $0x338] sm:$0xff]
    %v3303 = vld [vmem:[#allocation7 + $0x340] sm:$0xff]
    %v3304 = vld [vmem:[#allocation7 + $0x348] sm:$0xff]
    %v3305 = vld [vmem:[#allocation7 + $0x350] sm:$0xff]
    %v3306 = vld [vmem:[#allocation7 + $0x358] sm:$0xff]
    %v3307 = vld [vmem:[#allocation7 + $0x360] sm:$0xff]
    %v3308 = vld [vmem:[#allocation7 + $0x368] sm:$0xff]
    %v3309 = vld [vmem:[#allocation7 + $0x370] sm:$0xff]
    %v3310 = vld [vmem:[#allocation7 + $0x378] sm:$0xff]
    %v3311 = vld [vmem:[#allocation7 + $0x380] sm:$0xff]
    %v3312 = vld [vmem:[#allocation7 + $0x388] sm:$0xff]
    %v3313 = vld [vmem:[#allocation7 + $0x390] sm:$0xff]
    %v3314 = vld [vmem:[#allocation7 + $0x398] sm:$0xff]
    %v3315 = vld [vmem:[#allocation7 + $0x3a0] sm:$0xff]
    %v3316 = vld [vmem:[#allocation7 + $0x3a8] sm:$0xff]
    %v3317 = vld [vmem:[#allocation7 + $0x3b0] sm:$0xff]
    %v3318 = vld [vmem:[#allocation7 + $0x3b8] sm:$0xff]
    %v3319 = vld [vmem:[#allocation7 + $0x3c0] sm:$0xff]
    %v3320 = vld [vmem:[#allocation7 + $0x3c8] sm:$0xff]
    %v3321 = vld [vmem:[#allocation7 + $0x3d0] sm:$0xff]
    %v3322 = vld [vmem:[#allocation7 + $0x3d8] sm:$0xff]
    %v3323 = vld [vmem:[#allocation7 + $0x3e0] sm:$0xff]
    %v3324 = vld [vmem:[#allocation7 + $0x3e8] sm:$0xff]
    %v3325 = vld [vmem:[#allocation7 + $0x3f0] sm:$0xff]
    %v3326 = vld [vmem:[#allocation7 + $0x3f8] sm:$0xff]
    %v3327 = vld [vmem:[%s8] sm:$0xf]
    %v3329 = vlaneseq
    %v3330 = vshrl.u32 %v3329, 7
    %v3331 = vsub.s32 0, %v3330
    %v3332 = vrot.slane %v3327, %v3331
    %v3333 = vlaneseq
    %v3334 = vshrl.u32 %v3333, 7
    %v3335 = vsub.s32 1, %v3334
    %v3336 = vrot.slane %v3327, %v3335
    %v3337 = vlaneseq
    %v3338 = vshrl.u32 %v3337, 7
    %v3339 = vsub.s32 2, %v3338
    %v3340 = vrot.slane %v3327, %v3339
    %v3341 = vlaneseq
    %v3342 = vshrl.u32 %v3341, 7
    %v3343 = vsub.s32 3, %v3342
    %v3344 = vrot.slane %v3327, %v3343
    %v3477 = vunpack.c.l.b16 %v3199
    %v3478 = vunpack.c.h.b16 %v3199
    %v3479 = vunpack.c.l.b16 %v3200
    %v3480 = vunpack.c.h.b16 %v3200
    %v3481 = vunpack.c.l.b16 %v3201
    %v3482 = vunpack.c.h.b16 %v3201
    %v3483 = vunpack.c.l.b16 %v3202
    %v3484 = vunpack.c.h.b16 %v3202
    %v3485 = vunpack.c.l.b16 %v3203
    %v3486 = vunpack.c.h.b16 %v3203
    %v3487 = vunpack.c.l.b16 %v3204
    %v3488 = vunpack.c.h.b16 %v3204
    %v3489 = vunpack.c.l.b16 %v3205
    %v3490 = vunpack.c.h.b16 %v3205
    %v3491 = vunpack.c.l.b16 %v3206
    %v3492 = vunpack.c.h.b16 %v3206
    %v3493 = vunpack.c.l.b16 %v3207
    %v3494 = vunpack.c.h.b16 %v3207
    %v3495 = vunpack.c.l.b16 %v3208
    %v3496 = vunpack.c.h.b16 %v3208
    %v3497 = vunpack.c.l.b16 %v3209
    %v3498 = vunpack.c.h.b16 %v3209
    %v3499 = vunpack.c.l.b16 %v3210
    %v3500 = vunpack.c.h.b16 %v3210
    %v3501 = vunpack.c.l.b16 %v3211
    %v3502 = vunpack.c.h.b16 %v3211
    %v3503 = vunpack.c.l.b16 %v3212
    %v3504 = vunpack.c.h.b16 %v3212
    %v3505 = vunpack.c.l.b16 %v3213
    %v3506 = vunpack.c.h.b16 %v3213
    %v3507 = vunpack.c.l.b16 %v3214
    %v3508 = vunpack.c.h.b16 %v3214
    %v3509 = vunpack.c.l.b16 %v3215
    %v3510 = vunpack.c.h.b16 %v3215
    %v3511 = vunpack.c.l.b16 %v3216
    %v3512 = vunpack.c.h.b16 %v3216
    %v3513 = vunpack.c.l.b16 %v3217
    %v3514 = vunpack.c.h.b16 %v3217
    %v3515 = vunpack.c.l.b16 %v3218
    %v3516 = vunpack.c.h.b16 %v3218
    %v3517 = vunpack.c.l.b16 %v3219
    %v3518 = vunpack.c.h.b16 %v3219
    %v3519 = vunpack.c.l.b16 %v3220
    %v3520 = vunpack.c.h.b16 %v3220
    %v3521 = vunpack.c.l.b16 %v3221
    %v3522 = vunpack.c.h.b16 %v3221
    %v3523 = vunpack.c.l.b16 %v3222
    %v3524 = vunpack.c.h.b16 %v3222
    %v3525 = vunpack.c.l.b16 %v3223
    %v3526 = vunpack.c.h.b16 %v3223
    %v3527 = vunpack.c.l.b16 %v3224
    %v3528 = vunpack.c.h.b16 %v3224
    %v3529 = vunpack.c.l.b16 %v3225
    %v3530 = vunpack.c.h.b16 %v3225
    %v3531 = vunpack.c.l.b16 %v3226
    %v3532 = vunpack.c.h.b16 %v3226
    %v3533 = vunpack.c.l.b16 %v3227
    %v3534 = vunpack.c.h.b16 %v3227
    %v3535 = vunpack.c.l.b16 %v3228
    %v3536 = vunpack.c.h.b16 %v3228
    %v3537 = vunpack.c.l.b16 %v3229
    %v3538 = vunpack.c.h.b16 %v3229
    %v3539 = vunpack.c.l.b16 %v3230
    %v3540 = vunpack.c.h.b16 %v3230
    %v3541 = vunpack.c.l.b16 %v3231
    %v3542 = vunpack.c.h.b16 %v3231
    %v3543 = vunpack.c.l.b16 %v3232
    %v3544 = vunpack.c.h.b16 %v3232
    %v3545 = vunpack.c.l.b16 %v3233
    %v3546 = vunpack.c.h.b16 %v3233
    %v3547 = vunpack.c.l.b16 %v3234
    %v3548 = vunpack.c.h.b16 %v3234
    %v3549 = vunpack.c.l.b16 %v3235
    %v3550 = vunpack.c.h.b16 %v3235
    %v3551 = vunpack.c.l.b16 %v3236
    %v3552 = vunpack.c.h.b16 %v3236
    %v3553 = vunpack.c.l.b16 %v3237
    %v3554 = vunpack.c.h.b16 %v3237
    %v3555 = vunpack.c.l.b16 %v3238
    %v3556 = vunpack.c.h.b16 %v3238
    %v3557 = vunpack.c.l.b16 %v3239
    %v3558 = vunpack.c.h.b16 %v3239
    %v3559 = vunpack.c.l.b16 %v3240
    %v3560 = vunpack.c.h.b16 %v3240
    %v3561 = vunpack.c.l.b16 %v3241
    %v3562 = vunpack.c.h.b16 %v3241
    %v3563 = vunpack.c.l.b16 %v3242
    %v3564 = vunpack.c.h.b16 %v3242
    %v3565 = vunpack.c.l.b16 %v3243
    %v3566 = vunpack.c.h.b16 %v3243
    %v3567 = vunpack.c.l.b16 %v3244
    %v3568 = vunpack.c.h.b16 %v3244
    %v3569 = vunpack.c.l.b16 %v3245
    %v3570 = vunpack.c.h.b16 %v3245
    %v3571 = vunpack.c.l.b16 %v3246
    %v3572 = vunpack.c.h.b16 %v3246
    %v3573 = vunpack.c.l.b16 %v3247
    %v3574 = vunpack.c.h.b16 %v3247
    %v3575 = vunpack.c.l.b16 %v3248
    %v3576 = vunpack.c.h.b16 %v3248
    %v3577 = vunpack.c.l.b16 %v3249
    %v3578 = vunpack.c.h.b16 %v3249
    %v3579 = vunpack.c.l.b16 %v3250
    %v3580 = vunpack.c.h.b16 %v3250
    %v3581 = vunpack.c.l.b16 %v3251
    %v3582 = vunpack.c.h.b16 %v3251
    %v3583 = vunpack.c.l.b16 %v3252
    %v3584 = vunpack.c.h.b16 %v3252
    %v3585 = vunpack.c.l.b16 %v3253
    %v3586 = vunpack.c.h.b16 %v3253
    %v3587 = vunpack.c.l.b16 %v3254
    %v3588 = vunpack.c.h.b16 %v3254
    %v3589 = vunpack.c.l.b16 %v3255
    %v3590 = vunpack.c.h.b16 %v3255
    %v3591 = vunpack.c.l.b16 %v3256
    %v3592 = vunpack.c.h.b16 %v3256
    %v3593 = vunpack.c.l.b16 %v3257
    %v3594 = vunpack.c.h.b16 %v3257
    %v3595 = vunpack.c.l.b16 %v3258
    %v3596 = vunpack.c.h.b16 %v3258
    %v3597 = vunpack.c.l.b16 %v3259
    %v3598 = vunpack.c.h.b16 %v3259
    %v3599 = vunpack.c.l.b16 %v3260
    %v3600 = vunpack.c.h.b16 %v3260
    %v3601 = vunpack.c.l.b16 %v3261
    %v3602 = vunpack.c.h.b16 %v3261
    %v3603 = vunpack.c.l.b16 %v3262
    %v3604 = vunpack.c.h.b16 %v3262
    %v3605 = vunpack.c.l.b16 %v3263
    %v3606 = vunpack.c.h.b16 %v3263
    %v3607 = vunpack.c.l.b16 %v3264
    %v3608 = vunpack.c.h.b16 %v3264
    %v3609 = vunpack.c.l.b16 %v3265
    %v3610 = vunpack.c.h.b16 %v3265
    %v3611 = vunpack.c.l.b16 %v3266
    %v3612 = vunpack.c.h.b16 %v3266
    %v3613 = vunpack.c.l.b16 %v3267
    %v3614 = vunpack.c.h.b16 %v3267
    %v3615 = vunpack.c.l.b16 %v3268
    %v3616 = vunpack.c.h.b16 %v3268
    %v3617 = vunpack.c.l.b16 %v3269
    %v3618 = vunpack.c.h.b16 %v3269
    %v3619 = vunpack.c.l.b16 %v3270
    %v3620 = vunpack.c.h.b16 %v3270
    %v3621 = vunpack.c.l.b16 %v3271
    %v3622 = vunpack.c.h.b16 %v3271
    %v3623 = vunpack.c.l.b16 %v3272
    %v3624 = vunpack.c.h.b16 %v3272
    %v3625 = vunpack.c.l.b16 %v3273
    %v3626 = vunpack.c.h.b16 %v3273
    %v3627 = vunpack.c.l.b16 %v3274
    %v3628 = vunpack.c.h.b16 %v3274
    %v3629 = vunpack.c.l.b16 %v3275
    %v3630 = vunpack.c.h.b16 %v3275
    %v3631 = vunpack.c.l.b16 %v3276
    %v3632 = vunpack.c.h.b16 %v3276
    %v3633 = vunpack.c.l.b16 %v3277
    %v3634 = vunpack.c.h.b16 %v3277
    %v3635 = vunpack.c.l.b16 %v3278
    %v3636 = vunpack.c.h.b16 %v3278
    %v3637 = vunpack.c.l.b16 %v3279
    %v3638 = vunpack.c.h.b16 %v3279
    %v3639 = vunpack.c.l.b16 %v3280
    %v3640 = vunpack.c.h.b16 %v3280
    %v3641 = vunpack.c.l.b16 %v3281
    %v3642 = vunpack.c.h.b16 %v3281
    %v3643 = vunpack.c.l.b16 %v3282
    %v3644 = vunpack.c.h.b16 %v3282
    %v3645 = vunpack.c.l.b16 %v3283
    %v3646 = vunpack.c.h.b16 %v3283
    %v3647 = vunpack.c.l.b16 %v3284
    %v3648 = vunpack.c.h.b16 %v3284
    %v3649 = vunpack.c.l.b16 %v3285
    %v3650 = vunpack.c.h.b16 %v3285
    %v3651 = vunpack.c.l.b16 %v3286
    %v3652 = vunpack.c.h.b16 %v3286
    %v3653 = vunpack.c.l.b16 %v3287
    %v3654 = vunpack.c.h.b16 %v3287
    %v3655 = vunpack.c.l.b16 %v3288
    %v3656 = vunpack.c.h.b16 %v3288
    %v3657 = vunpack.c.l.b16 %v3289
    %v3658 = vunpack.c.h.b16 %v3289
    %v3659 = vunpack.c.l.b16 %v3290
    %v3660 = vunpack.c.h.b16 %v3290
    %v3661 = vunpack.c.l.b16 %v3291
    %v3662 = vunpack.c.h.b16 %v3291
    %v3663 = vunpack.c.l.b16 %v3292
    %v3664 = vunpack.c.h.b16 %v3292
    %v3665 = vunpack.c.l.b16 %v3293
    %v3666 = vunpack.c.h.b16 %v3293
    %v3667 = vunpack.c.l.b16 %v3294
    %v3668 = vunpack.c.h.b16 %v3294
    %v3669 = vunpack.c.l.b16 %v3295
    %v3670 = vunpack.c.h.b16 %v3295
    %v3671 = vunpack.c.l.b16 %v3296
    %v3672 = vunpack.c.h.b16 %v3296
    %v3673 = vunpack.c.l.b16 %v3297
    %v3674 = vunpack.c.h.b16 %v3297
    %v3675 = vunpack.c.l.b16 %v3298
    %v3676 = vunpack.c.h.b16 %v3298
    %v3677 = vunpack.c.l.b16 %v3299
    %v3678 = vunpack.c.h.b16 %v3299
    %v3679 = vunpack.c.l.b16 %v3300
    %v3680 = vunpack.c.h.b16 %v3300
    %v3681 = vunpack.c.l.b16 %v3301
    %v3682 = vunpack.c.h.b16 %v3301
    %v3683 = vunpack.c.l.b16 %v3302
    %v3684 = vunpack.c.h.b16 %v3302
    %v3685 = vunpack.c.l.b16 %v3303
    %v3686 = vunpack.c.h.b16 %v3303
    %v3687 = vunpack.c.l.b16 %v3304
    %v3688 = vunpack.c.h.b16 %v3304
    %v3689 = vunpack.c.l.b16 %v3305
    %v3690 = vunpack.c.h.b16 %v3305
    %v3691 = vunpack.c.l.b16 %v3306
    %v3692 = vunpack.c.h.b16 %v3306
    %v3693 = vunpack.c.l.b16 %v3307
    %v3694 = vunpack.c.h.b16 %v3307
    %v3695 = vunpack.c.l.b16 %v3308
    %v3696 = vunpack.c.h.b16 %v3308
    %v3697 = vunpack.c.l.b16 %v3309
    %v3698 = vunpack.c.h.b16 %v3309
    %v3699 = vunpack.c.l.b16 %v3310
    %v3700 = vunpack.c.h.b16 %v3310
    %v3701 = vunpack.c.l.b16 %v3311
    %v3702 = vunpack.c.h.b16 %v3311
    %v3703 = vunpack.c.l.b16 %v3312
    %v3704 = vunpack.c.h.b16 %v3312
    %v3705 = vunpack.c.l.b16 %v3313
    %v3706 = vunpack.c.h.b16 %v3313
    %v3707 = vunpack.c.l.b16 %v3314
    %v3708 = vunpack.c.h.b16 %v3314
    %v3709 = vunpack.c.l.b16 %v3315
    %v3710 = vunpack.c.h.b16 %v3315
    %v3711 = vunpack.c.l.b16 %v3316
    %v3712 = vunpack.c.h.b16 %v3316
    %v3713 = vunpack.c.l.b16 %v3317
    %v3714 = vunpack.c.h.b16 %v3317
    %v3715 = vunpack.c.l.b16 %v3318
    %v3716 = vunpack.c.h.b16 %v3318
    %v3717 = vunpack.c.l.b16 %v3319
    %v3718 = vunpack.c.h.b16 %v3319
    %v3719 = vunpack.c.l.b16 %v3320
    %v3720 = vunpack.c.h.b16 %v3320
    %v3721 = vunpack.c.l.b16 %v3321
    %v3722 = vunpack.c.h.b16 %v3321
    %v3723 = vunpack.c.l.b16 %v3322
    %v3724 = vunpack.c.h.b16 %v3322
    %v3725 = vunpack.c.l.b16 %v3323
    %v3726 = vunpack.c.h.b16 %v3323
    %v3727 = vunpack.c.l.b16 %v3324
    %v3728 = vunpack.c.h.b16 %v3324
    %v3729 = vunpack.c.l.b16 %v3325
    %v3730 = vunpack.c.h.b16 %v3325
    %v3731 = vunpack.c.l.b16 %v3326
    %v3732 = vunpack.c.h.b16 %v3326
    %v3733 = vpack.c.b16 %v3481, %v3477
    %v3734 = vpack.c.b16 %v3482, %v3478
    %v3735 = vpack.c.b16 %v3483, %v3479
    %v3736 = vpack.c.b16 %v3484, %v3480
    %v3737 = vpack.c.b16 %v3489, %v3485
    %v3738 = vpack.c.b16 %v3490, %v3486
    %v3739 = vpack.c.b16 %v3491, %v3487
    %v3740 = vpack.c.b16 %v3492, %v3488
    %v3741 = vpack.c.b16 %v3497, %v3493
    %v3742 = vpack.c.b16 %v3498, %v3494
    %v3743 = vpack.c.b16 %v3499, %v3495
    %v3744 = vpack.c.b16 %v3500, %v3496
    %v3745 = vpack.c.b16 %v3505, %v3501
    %v3746 = vpack.c.b16 %v3506, %v3502
    %v3747 = vpack.c.b16 %v3507, %v3503
    %v3748 = vpack.c.b16 %v3508, %v3504
    %v3749 = vpack.c.b16 %v3513, %v3509
    %v3750 = vpack.c.b16 %v3514, %v3510
    %v3751 = vpack.c.b16 %v3515, %v3511
    %v3752 = vpack.c.b16 %v3516, %v3512
    %v3753 = vpack.c.b16 %v3521, %v3517
    %v3754 = vpack.c.b16 %v3522, %v3518
    %v3755 = vpack.c.b16 %v3523, %v3519
    %v3756 = vpack.c.b16 %v3524, %v3520
    %v3757 = vpack.c.b16 %v3529, %v3525
    %v3758 = vpack.c.b16 %v3530, %v3526
    %v3759 = vpack.c.b16 %v3531, %v3527
    %v3760 = vpack.c.b16 %v3532, %v3528
    %v3761 = vpack.c.b16 %v3537, %v3533
    %v3762 = vpack.c.b16 %v3538, %v3534
    %v3763 = vpack.c.b16 %v3539, %v3535
    %v3764 = vpack.c.b16 %v3540, %v3536
    %v3765 = vpack.c.b16 %v3545, %v3541
    %v3766 = vpack.c.b16 %v3546, %v3542
    %v3767 = vpack.c.b16 %v3547, %v3543
    %v3768 = vpack.c.b16 %v3548, %v3544
    %v3769 = vpack.c.b16 %v3553, %v3549
    %v3770 = vpack.c.b16 %v3554, %v3550
    %v3771 = vpack.c.b16 %v3555, %v3551
    %v3772 = vpack.c.b16 %v3556, %v3552
    %v3773 = vpack.c.b16 %v3561, %v3557
    %v3774 = vpack.c.b16 %v3562, %v3558
    %v3775 = vpack.c.b16 %v3563, %v3559
    %v3776 = vpack.c.b16 %v3564, %v3560
    %v3777 = vpack.c.b16 %v3569, %v3565
    %v3778 = vpack.c.b16 %v3570, %v3566
    %v3779 = vpack.c.b16 %v3571, %v3567
    %v3780 = vpack.c.b16 %v3572, %v3568
    %v3781 = vpack.c.b16 %v3577, %v3573
    %v3782 = vpack.c.b16 %v3578, %v3574
    %v3783 = vpack.c.b16 %v3579, %v3575
    %v3784 = vpack.c.b16 %v3580, %v3576
    %v3785 = vpack.c.b16 %v3585, %v3581
    %v3786 = vpack.c.b16 %v3586, %v3582
    %v3787 = vpack.c.b16 %v3587, %v3583
    %v3788 = vpack.c.b16 %v3588, %v3584
    %v3789 = vpack.c.b16 %v3593, %v3589
    %v3790 = vpack.c.b16 %v3594, %v3590
    %v3791 = vpack.c.b16 %v3595, %v3591
    %v3792 = vpack.c.b16 %v3596, %v3592
    %v3793 = vpack.c.b16 %v3601, %v3597
    %v3794 = vpack.c.b16 %v3602, %v3598
    %v3795 = vpack.c.b16 %v3603, %v3599
    %v3796 = vpack.c.b16 %v3604, %v3600
    %v3797 = vpack.c.b16 %v3609, %v3605
    %v3798 = vpack.c.b16 %v3610, %v3606
    %v3799 = vpack.c.b16 %v3611, %v3607
    %v3800 = vpack.c.b16 %v3612, %v3608
    %v3801 = vpack.c.b16 %v3617, %v3613
    %v3802 = vpack.c.b16 %v3618, %v3614
    %v3803 = vpack.c.b16 %v3619, %v3615
    %v3804 = vpack.c.b16 %v3620, %v3616
    %v3805 = vpack.c.b16 %v3625, %v3621
    %v3806 = vpack.c.b16 %v3626, %v3622
    %v3807 = vpack.c.b16 %v3627, %v3623
    %v3808 = vpack.c.b16 %v3628, %v3624
    %v3809 = vpack.c.b16 %v3633, %v3629
    %v3810 = vpack.c.b16 %v3634, %v3630
    %v3811 = vpack.c.b16 %v3635, %v3631
    %v3812 = vpack.c.b16 %v3636, %v3632
    %v3813 = vpack.c.b16 %v3641, %v3637
    %v3814 = vpack.c.b16 %v3642, %v3638
    %v3815 = vpack.c.b16 %v3643, %v3639
    %v3816 = vpack.c.b16 %v3644, %v3640
    %v3817 = vpack.c.b16 %v3649, %v3645
    %v3818 = vpack.c.b16 %v3650, %v3646
    %v3819 = vpack.c.b16 %v3651, %v3647
    %v3820 = vpack.c.b16 %v3652, %v3648
    %v3821 = vpack.c.b16 %v3657, %v3653
    %v3822 = vpack.c.b16 %v3658, %v3654
    %v3823 = vpack.c.b16 %v3659, %v3655
    %v3824 = vpack.c.b16 %v3660, %v3656
    %v3825 = vpack.c.b16 %v3665, %v3661
    %v3826 = vpack.c.b16 %v3666, %v3662
    %v3827 = vpack.c.b16 %v3667, %v3663
    %v3828 = vpack.c.b16 %v3668, %v3664
    %v3829 = vpack.c.b16 %v3673, %v3669
    %v3830 = vpack.c.b16 %v3674, %v3670
    %v3831 = vpack.c.b16 %v3675, %v3671
    %v3832 = vpack.c.b16 %v3676, %v3672
    %v3833 = vpack.c.b16 %v3681, %v3677
    %v3834 = vpack.c.b16 %v3682, %v3678
    %v3835 = vpack.c.b16 %v3683, %v3679
    %v3836 = vpack.c.b16 %v3684, %v3680
    %v3837 = vpack.c.b16 %v3689, %v3685
    %v3838 = vpack.c.b16 %v3690, %v3686
    %v3839 = vpack.c.b16 %v3691, %v3687
    %v3840 = vpack.c.b16 %v3692, %v3688
    %v3841 = vpack.c.b16 %v3697, %v3693
    %v3842 = vpack.c.b16 %v3698, %v3694
    %v3843 = vpack.c.b16 %v3699, %v3695
    %v3844 = vpack.c.b16 %v3700, %v3696
    %v3845 = vpack.c.b16 %v3705, %v3701
    %v3846 = vpack.c.b16 %v3706, %v3702
    %v3847 = vpack.c.b16 %v3707, %v3703
    %v3848 = vpack.c.b16 %v3708, %v3704
    %v3849 = vpack.c.b16 %v3713, %v3709
    %v3850 = vpack.c.b16 %v3714, %v3710
    %v3851 = vpack.c.b16 %v3715, %v3711
    %v3852 = vpack.c.b16 %v3716, %v3712
    %v3853 = vpack.c.b16 %v3721, %v3717
    %v3854 = vpack.c.b16 %v3722, %v3718
    %v3855 = vpack.c.b16 %v3723, %v3719
    %v3856 = vpack.c.b16 %v3724, %v3720
    %v3857 = vpack.c.b16 %v3729, %v3725
    %v3858 = vpack.c.b16 %v3730, %v3726
    %v3859 = vpack.c.b16 %v3731, %v3727
    %v3860 = vpack.c.b16 %v3732, %v3728
    %3989 = vmatprep.subr.bf16.mxu0 %v3762
    %3990 = vmatpush1.bf16.msra.mxu0 %v3761
    %3991 = vmatprep.subr.bf16.mxu0 %v3758
    %3992 = vmatpush1.bf16.msra.mxu0 %v3757
    %3993 = vmatprep.subr.bf16.mxu0 %v3754
    %3994 = vmatpush1.bf16.msra.mxu0 %v3753
    %3995 = vmatprep.subr.bf16.mxu0 %v3750
    %3996 = vmatpush1.bf16.msra.mxu0 %v3749
    %3997 = vmatprep.subr.bf16.mxu0 %v3746
    %3998 = vmatpush1.bf16.msra.mxu0 %v3745
    %3999 = vmatprep.subr.bf16.mxu0 %v3742
    %4000 = vmatpush1.bf16.msra.mxu0 %v3741
    %4001 = vmatprep.subr.bf16.mxu0 %v3738
    %4002 = vmatpush1.bf16.msra.mxu0 %v3737
    %4003 = vmatprep.subr.bf16.mxu0 %v3734
    %4004 = vmatpush1.bf16.msra.mxu0 %v3733
    %4005 = vmatprep.subr.bf16.mxu0 %v3794
    %4006 = vmatpush2.bf16.msra.mxu0 %v3793
    %4007 = vmatprep.subr.bf16.mxu0 %v3790
    %4008 = vmatpush2.bf16.msra.mxu0 %v3789
    %4009 = vmatprep.subr.bf16.mxu0 %v3786
    %4010 = vmatpush2.bf16.msra.mxu0 %v3785
    %4011 = vmatprep.subr.bf16.mxu0 %v3782
    %4012 = vmatpush2.bf16.msra.mxu0 %v3781
    %4013 = vmatprep.subr.bf16.mxu0 %v3778
    %4014 = vmatpush2.bf16.msra.mxu0 %v3777
    %4015 = vmatprep.subr.bf16.mxu0 %v3774
    %4016 = vmatpush2.bf16.msra.mxu0 %v3773
    %4017 = vmatprep.subr.bf16.mxu0 %v3770
    %4018 = vmatpush2.bf16.msra.mxu0 %v3769
    %4019 = vmatprep.subr.bf16.mxu0 %v3766
    %4020 = vmatpush2.bf16.msra.mxu0 %v3765
    %4021 = vmatprep.mubr.bf16.mxu0 %v3168
    %4022 = vmatmul.mubr.bf16.gmra.mxu0 %v3167
    %v4023 = vpop.f32.mrf.mxu0
    %v4024 = vadd.f32 %v3332, %v4023
    %v4025 = vpop.f32.mrf.mxu0
    %v4026 = vadd.f32 %v3336, %v4025
    %v4027 = vpop.f32.mrf.mxu0
    %v4028 = vadd.f32 %v3332, %v4027
    %v4029 = vpop.f32.mrf.mxu0
    %v4030 = vadd.f32 %v3336, %v4029
    %4031 = vmatprep.mubr.bf16.mxu0 %v3172
    %4032 = vmatmul.mubr.bf16.gmra.mxu0 %v3171
    %v4033 = vpop.f32.mrf.mxu0
    %v4034 = vadd.f32 %v3332, %v4033
    %v4035 = vpop.f32.mrf.mxu0
    %v4036 = vadd.f32 %v3336, %v4035
    %v4037 = vpop.f32.mrf.mxu0
    %v4038 = vadd.f32 %v3332, %v4037
    %v4039 = vpop.f32.mrf.mxu0
    %v4040 = vadd.f32 %v3336, %v4039
    %4041 = vmatprep.mubr.bf16.mxu0 %v3176
    %4042 = vmatmul.mubr.bf16.gmra.mxu0 %v3175
    %v4043 = vpop.f32.mrf.mxu0
    %v4044 = vadd.f32 %v3332, %v4043
    %v4045 = vpop.f32.mrf.mxu0
    %v4046 = vadd.f32 %v3336, %v4045
    %v4047 = vpop.f32.mrf.mxu0
    %v4048 = vadd.f32 %v3332, %v4047
    %v4049 = vpop.f32.mrf.mxu0
    %v4050 = vadd.f32 %v3336, %v4049
    %4051 = vmatprep.mubr.bf16.mxu0 %v3180
    %4052 = vmatmul.mubr.bf16.gmra.mxu0 %v3179
    %v4053 = vpop.f32.mrf.mxu0
    %v4054 = vadd.f32 %v3332, %v4053
    %v4055 = vpop.f32.mrf.mxu0
    %v4056 = vadd.f32 %v3336, %v4055
    %v4057 = vpop.f32.mrf.mxu0
    %v4058 = vadd.f32 %v3332, %v4057
    %v4059 = vpop.f32.mrf.mxu0
    %v4060 = vadd.f32 %v3336, %v4059
    %4061 = vmatprep.mubr.bf16.mxu0 %v3184
    %4062 = vmatmul.mubr.bf16.gmra.mxu0 %v3183
    %v4063 = vpop.f32.mrf.mxu0
    %v4064 = vadd.f32 %v3332, %v4063
    %v4065 = vpop.f32.mrf.mxu0
    %v4066 = vadd.f32 %v3336, %v4065
    %v4067 = vpop.f32.mrf.mxu0
    %v4068 = vadd.f32 %v3332, %v4067
    %v4069 = vpop.f32.mrf.mxu0
    %v4070 = vadd.f32 %v3336, %v4069
    %4071 = vmatprep.mubr.bf16.mxu0 %v3188
    %4072 = vmatmul.mubr.bf16.gmra.mxu0 %v3187
    %v4073 = vpop.f32.mrf.mxu0
    %v4074 = vadd.f32 %v3332, %v4073
    %v4075 = vpop.f32.mrf.mxu0
    %v4076 = vadd.f32 %v3336, %v4075
    %v4077 = vpop.f32.mrf.mxu0
    %v4078 = vadd.f32 %v3332, %v4077
    %v4079 = vpop.f32.mrf.mxu0
    %v4080 = vadd.f32 %v3336, %v4079
    %4081 = vmatprep.mubr.bf16.mxu0 %v3192
    %4082 = vmatmul.mubr.bf16.gmra.mxu0 %v3191
    %v4083 = vpop.f32.mrf.mxu0
    %v4084 = vadd.f32 %v3332, %v4083
    %v4085 = vpop.f32.mrf.mxu0
    %v4086 = vadd.f32 %v3336, %v4085
    %v4087 = vpop.f32.mrf.mxu0
    %v4088 = vadd.f32 %v3332, %v4087
    %v4089 = vpop.f32.mrf.mxu0
    %v4090 = vadd.f32 %v3336, %v4089
    %4091 = vmatprep.mubr.bf16.mxu0 %v3196
    %4092 = vmatmul.mubr.bf16.gmra.mxu0 %v3195
    %v4093 = vpop.f32.mrf.mxu0
    %v4094 = vadd.f32 %v3332, %v4093
    %v4095 = vpop.f32.mrf.mxu0
    %v4096 = vadd.f32 %v3336, %v4095
    %v4097 = vpop.f32.mrf.mxu0
    %v4098 = vadd.f32 %v3332, %v4097
    %v4099 = vpop.f32.mrf.mxu0
    %v4100 = vadd.f32 %v3336, %v4099
    %4101 = vdwg.mxu0
    %4102 = vmatprep.subr.bf16.mxu0 %v3826
    %4103 = vmatpush1.bf16.msra.mxu0 %v3825
    %4104 = vmatprep.subr.bf16.mxu0 %v3822
    %4105 = vmatpush1.bf16.msra.mxu0 %v3821
    %4106 = vmatprep.subr.bf16.mxu0 %v3818
    %4107 = vmatpush1.bf16.msra.mxu0 %v3817
    %4108 = vmatprep.subr.bf16.mxu0 %v3814
    %4109 = vmatpush1.bf16.msra.mxu0 %v3813
    %4110 = vmatprep.subr.bf16.mxu0 %v3810
    %4111 = vmatpush1.bf16.msra.mxu0 %v3809
    %4112 = vmatprep.subr.bf16.mxu0 %v3806
    %4113 = vmatpush1.bf16.msra.mxu0 %v3805
    %4114 = vmatprep.subr.bf16.mxu0 %v3802
    %4115 = vmatpush1.bf16.msra.mxu0 %v3801
    %4116 = vmatprep.subr.bf16.mxu0 %v3798
    %4117 = vmatpush1.bf16.msra.mxu0 %v3797
    %4118 = vmatprep.subr.bf16.mxu0 %v3858
    %4119 = vmatpush2.bf16.msra.mxu0 %v3857
    %4120 = vmatprep.subr.bf16.mxu0 %v3854
    %4121 = vmatpush2.bf16.msra.mxu0 %v3853
    %4122 = vmatprep.subr.bf16.mxu0 %v3850
    %4123 = vmatpush2.bf16.msra.mxu0 %v3849
    %4124 = vmatprep.subr.bf16.mxu0 %v3846
    %4125 = vmatpush2.bf16.msra.mxu0 %v3845
    %4126 = vmatprep.subr.bf16.mxu0 %v3842
    %4127 = vmatpush2.bf16.msra.mxu0 %v3841
    %4128 = vmatprep.subr.bf16.mxu0 %v3838
    %4129 = vmatpush2.bf16.msra.mxu0 %v3837
    %4130 = vmatprep.subr.bf16.mxu0 %v3834
    %4131 = vmatpush2.bf16.msra.mxu0 %v3833
    %4132 = vmatprep.subr.bf16.mxu0 %v3830
    %4133 = vmatpush2.bf16.msra.mxu0 %v3829
    %4134 = vmatprep.mubr.bf16.mxu0 %v3170
    %4135 = vmatmul.mubr.bf16.gmra.mxu0 %v3169
    %v4136 = vpop.f32.mrf.mxu0
    %v4137 = vadd.f32 %v4024, %v4136
    %v4138 = vpop.f32.mrf.mxu0
    %v4139 = vadd.f32 %v4026, %v4138
    %v4140 = vpop.f32.mrf.mxu0
    %v4141 = vadd.f32 %v4028, %v4140
    %v4142 = vpop.f32.mrf.mxu0
    %v4143 = vadd.f32 %v4030, %v4142
    %4144 = vmatprep.mubr.bf16.mxu0 %v3174
    %4145 = vmatmul.mubr.bf16.gmra.mxu0 %v3173
    %v4146 = vpop.f32.mrf.mxu0
    %v4147 = vadd.f32 %v4034, %v4146
    %v4148 = vpop.f32.mrf.mxu0
    %v4149 = vadd.f32 %v4036, %v4148
    %v4150 = vpop.f32.mrf.mxu0
    %v4151 = vadd.f32 %v4038, %v4150
    %v4152 = vpop.f32.mrf.mxu0
    %v4153 = vadd.f32 %v4040, %v4152
    %4154 = vmatprep.mubr.bf16.mxu0 %v3178
    %4155 = vmatmul.mubr.bf16.gmra.mxu0 %v3177
    %v4156 = vpop.f32.mrf.mxu0
    %v4157 = vadd.f32 %v4044, %v4156
    %v4158 = vpop.f32.mrf.mxu0
    %v4159 = vadd.f32 %v4046, %v4158
    %v4160 = vpop.f32.mrf.mxu0
    %v4161 = vadd.f32 %v4048, %v4160
    %v4162 = vpop.f32.mrf.mxu0
    %v4163 = vadd.f32 %v4050, %v4162
    %4164 = vmatprep.mubr.bf16.mxu0 %v3182
    %4165 = vmatmul.mubr.bf16.gmra.mxu0 %v3181
    %v4166 = vpop.f32.mrf.mxu0
    %v4167 = vadd.f32 %v4054, %v4166
    %v4168 = vpop.f32.mrf.mxu0
    %v4169 = vadd.f32 %v4056, %v4168
    %v4170 = vpop.f32.mrf.mxu0
    %v4171 = vadd.f32 %v4058, %v4170
    %v4172 = vpop.f32.mrf.mxu0
    %v4173 = vadd.f32 %v4060, %v4172
    %4174 = vmatprep.mubr.bf16.mxu0 %v3186
    %4175 = vmatmul.mubr.bf16.gmra.mxu0 %v3185
    %v4176 = vpop.f32.mrf.mxu0
    %v4177 = vadd.f32 %v4064, %v4176
    %v4178 = vpop.f32.mrf.mxu0
    %v4179 = vadd.f32 %v4066, %v4178
    %v4180 = vpop.f32.mrf.mxu0
    %v4181 = vadd.f32 %v4068, %v4180
    %v4182 = vpop.f32.mrf.mxu0
    %v4183 = vadd.f32 %v4070, %v4182
    %4184 = vmatprep.mubr.bf16.mxu0 %v3190
    %4185 = vmatmul.mubr.bf16.gmra.mxu0 %v3189
    %v4186 = vpop.f32.mrf.mxu0
    %v4187 = vadd.f32 %v4074, %v4186
    %v4188 = vpop.f32.mrf.mxu0
    %v4189 = vadd.f32 %v4076, %v4188
    %v4190 = vpop.f32.mrf.mxu0
    %v4191 = vadd.f32 %v4078, %v4190
    %v4192 = vpop.f32.mrf.mxu0
    %v4193 = vadd.f32 %v4080, %v4192
    %4194 = vmatprep.mubr.bf16.mxu0 %v3194
    %4195 = vmatmul.mubr.bf16.gmra.mxu0 %v3193
    %v4196 = vpop.f32.mrf.mxu0
    %v4197 = vadd.f32 %v4084, %v4196
    %v4198 = vpop.f32.mrf.mxu0
    %v4199 = vadd.f32 %v4086, %v4198
    %v4200 = vpop.f32.mrf.mxu0
    %v4201 = vadd.f32 %v4088, %v4200
    %v4202 = vpop.f32.mrf.mxu0
    %v4203 = vadd.f32 %v4090, %v4202
    %4204 = vmatprep.mubr.bf16.mxu0 %v3198
    %4205 = vmatmul.mubr.bf16.gmra.mxu0 %v3197
    %v4206 = vpop.f32.mrf.mxu0
    %v4207 = vadd.f32 %v4094, %v4206
    %v4208 = vpop.f32.mrf.mxu0
    %v4209 = vadd.f32 %v4096, %v4208
    %v4210 = vpop.f32.mrf.mxu0
    %v4211 = vadd.f32 %v4098, %v4210
    %v4212 = vpop.f32.mrf.mxu0
    %v4213 = vadd.f32 %v4100, %v4212
    %4214 = vdwg.mxu0
    %4215 = vmatprep.subr.bf16.mxu0 %v3764
    %4216 = vmatpush1.bf16.msra.mxu0 %v3763
    %4217 = vmatprep.subr.bf16.mxu0 %v3760
    %4218 = vmatpush1.bf16.msra.mxu0 %v3759
    %4219 = vmatprep.subr.bf16.mxu0 %v3756
    %4220 = vmatpush1.bf16.msra.mxu0 %v3755
    %4221 = vmatprep.subr.bf16.mxu0 %v3752
    %4222 = vmatpush1.bf16.msra.mxu0 %v3751
    %4223 = vmatprep.subr.bf16.mxu0 %v3748
    %4224 = vmatpush1.bf16.msra.mxu0 %v3747
    %4225 = vmatprep.subr.bf16.mxu0 %v3744
    %4226 = vmatpush1.bf16.msra.mxu0 %v3743
    %4227 = vmatprep.subr.bf16.mxu0 %v3740
    %4228 = vmatpush1.bf16.msra.mxu0 %v3739
    %4229 = vmatprep.subr.bf16.mxu0 %v3736
    %4230 = vmatpush1.bf16.msra.mxu0 %v3735
    %4231 = vmatprep.subr.bf16.mxu0 %v3796
    %4232 = vmatpush2.bf16.msra.mxu0 %v3795
    %4233 = vmatprep.subr.bf16.mxu0 %v3792
    %4234 = vmatpush2.bf16.msra.mxu0 %v3791
    %4235 = vmatprep.subr.bf16.mxu0 %v3788
    %4236 = vmatpush2.bf16.msra.mxu0 %v3787
    %4237 = vmatprep.subr.bf16.mxu0 %v3784
    %4238 = vmatpush2.bf16.msra.mxu0 %v3783
    %4239 = vmatprep.subr.bf16.mxu0 %v3780
    %4240 = vmatpush2.bf16.msra.mxu0 %v3779
    %4241 = vmatprep.subr.bf16.mxu0 %v3776
    %4242 = vmatpush2.bf16.msra.mxu0 %v3775
    %4243 = vmatprep.subr.bf16.mxu0 %v3772
    %4244 = vmatpush2.bf16.msra.mxu0 %v3771
    %4245 = vmatprep.subr.bf16.mxu0 %v3768
    %4246 = vmatpush2.bf16.msra.mxu0 %v3767
    %4247 = vmatprep.mubr.bf16.mxu0 %v3168
    %4248 = vmatmul.mubr.bf16.gmra.mxu0 %v3167
    %v4249 = vpop.f32.mrf.mxu0
    %v4250 = vadd.f32 %v3340, %v4249
    %v4251 = vpop.f32.mrf.mxu0
    %v4252 = vadd.f32 %v3344, %v4251
    %v4253 = vpop.f32.mrf.mxu0
    %v4254 = vadd.f32 %v3340, %v4253
    %v4255 = vpop.f32.mrf.mxu0
    %v4256 = vadd.f32 %v3344, %v4255
    %4257 = vmatprep.mubr.bf16.mxu0 %v3172
    %4258 = vmatmul.mubr.bf16.gmra.mxu0 %v3171
    %v4259 = vpop.f32.mrf.mxu0
    %v4260 = vadd.f32 %v3340, %v4259
    %v4261 = vpop.f32.mrf.mxu0
    %v4262 = vadd.f32 %v3344, %v4261
    %v4263 = vpop.f32.mrf.mxu0
    %v4264 = vadd.f32 %v3340, %v4263
    %v4265 = vpop.f32.mrf.mxu0
    %v4266 = vadd.f32 %v3344, %v4265
    %4267 = vmatprep.mubr.bf16.mxu0 %v3176
    %4268 = vmatmul.mubr.bf16.gmra.mxu0 %v3175
    %v4269 = vpop.f32.mrf.mxu0
    %v4270 = vadd.f32 %v3340, %v4269
    %v4271 = vpop.f32.mrf.mxu0
    %v4272 = vadd.f32 %v3344, %v4271
    %v4273 = vpop.f32.mrf.mxu0
    %v4274 = vadd.f32 %v3340, %v4273
    %v4275 = vpop.f32.mrf.mxu0
    %v4276 = vadd.f32 %v3344, %v4275
    %4277 = vmatprep.mubr.bf16.mxu0 %v3180
    %4278 = vmatmul.mubr.bf16.gmra.mxu0 %v3179
    %v4279 = vpop.f32.mrf.mxu0
    %v4280 = vadd.f32 %v3340, %v4279
    %v4281 = vpop.f32.mrf.mxu0
    %v4282 = vadd.f32 %v3344, %v4281
    %v4283 = vpop.f32.mrf.mxu0
    %v4284 = vadd.f32 %v3340, %v4283
    %v4285 = vpop.f32.mrf.mxu0
    %v4286 = vadd.f32 %v3344, %v4285
    %4287 = vmatprep.mubr.bf16.mxu0 %v3184
    %4288 = vmatmul.mubr.bf16.gmra.mxu0 %v3183
    %v4289 = vpop.f32.mrf.mxu0
    %v4290 = vadd.f32 %v3340, %v4289
    %v4291 = vpop.f32.mrf.mxu0
    %v4292 = vadd.f32 %v3344, %v4291
    %v4293 = vpop.f32.mrf.mxu0
    %v4294 = vadd.f32 %v3340, %v4293
    %v4295 = vpop.f32.mrf.mxu0
    %v4296 = vadd.f32 %v3344, %v4295
    %4297 = vmatprep.mubr.bf16.mxu0 %v3188
    %4298 = vmatmul.mubr.bf16.gmra.mxu0 %v3187
    %v4299 = vpop.f32.mrf.mxu0
    %v4300 = vadd.f32 %v3340, %v4299
    %v4301 = vpop.f32.mrf.mxu0
    %v4302 = vadd.f32 %v3344, %v4301
    %v4303 = vpop.f32.mrf.mxu0
    %v4304 = vadd.f32 %v3340, %v4303
    %v4305 = vpop.f32.mrf.mxu0
    %v4306 = vadd.f32 %v3344, %v4305
    %4307 = vmatprep.mubr.bf16.mxu0 %v3192
    %4308 = vmatmul.mubr.bf16.gmra.mxu0 %v3191
    %v4309 = vpop.f32.mrf.mxu0
    %v4310 = vadd.f32 %v3340, %v4309
    %v4311 = vpop.f32.mrf.mxu0
    %v4312 = vadd.f32 %v3344, %v4311
    %v4313 = vpop.f32.mrf.mxu0
    %v4314 = vadd.f32 %v3340, %v4313
    %v4315 = vpop.f32.mrf.mxu0
    %v4316 = vadd.f32 %v3344, %v4315
    %4317 = vmatprep.mubr.bf16.mxu0 %v3196
    %4318 = vmatmul.mubr.bf16.gmra.mxu0 %v3195
    %v4319 = vpop.f32.mrf.mxu0
    %v4320 = vadd.f32 %v3340, %v4319
    %v4321 = vpop.f32.mrf.mxu0
    %v4322 = vadd.f32 %v3344, %v4321
    %v4323 = vpop.f32.mrf.mxu0
    %v4324 = vadd.f32 %v3340, %v4323
    %v4325 = vpop.f32.mrf.mxu0
    %v4326 = vadd.f32 %v3344, %v4325
    %4327 = vdwg.mxu0
    %4328 = vmatprep.subr.bf16.mxu0 %v3828
    %4329 = vmatpush1.bf16.msra.mxu0 %v3827
    %4330 = vmatprep.subr.bf16.mxu0 %v3824
    %4331 = vmatpush1.bf16.msra.mxu0 %v3823
    %4332 = vmatprep.subr.bf16.mxu0 %v3820
    %4333 = vmatpush1.bf16.msra.mxu0 %v3819
    %4334 = vmatprep.subr.bf16.mxu0 %v3816
    %4335 = vmatpush1.bf16.msra.mxu0 %v3815
    %4336 = vmatprep.subr.bf16.mxu0 %v3812
    %4337 = vmatpush1.bf16.msra.mxu0 %v3811
    %4338 = vmatprep.subr.bf16.mxu0 %v3808
    %4339 = vmatpush1.bf16.msra.mxu0 %v3807
    %4340 = vmatprep.subr.bf16.mxu0 %v3804
    %4341 = vmatpush1.bf16.msra.mxu0 %v3803
    %4342 = vmatprep.subr.bf16.mxu0 %v3800
    %4343 = vmatpush1.bf16.msra.mxu0 %v3799
    %4344 = vmatprep.subr.bf16.mxu0 %v3860
    %4345 = vmatpush2.bf16.msra.mxu0 %v3859
    %4346 = vmatprep.subr.bf16.mxu0 %v3856
    %4347 = vmatpush2.bf16.msra.mxu0 %v3855
    %4348 = vmatprep.subr.bf16.mxu0 %v3852
    %4349 = vmatpush2.bf16.msra.mxu0 %v3851
    %4350 = vmatprep.subr.bf16.mxu0 %v3848
    %4351 = vmatpush2.bf16.msra.mxu0 %v3847
    %4352 = vmatprep.subr.bf16.mxu0 %v3844
    %4353 = vmatpush2.bf16.msra.mxu0 %v3843
    %4354 = vmatprep.subr.bf16.mxu0 %v3840
    %4355 = vmatpush2.bf16.msra.mxu0 %v3839
    %4356 = vmatprep.subr.bf16.mxu0 %v3836
    %4357 = vmatpush2.bf16.msra.mxu0 %v3835
    %4358 = vmatprep.subr.bf16.mxu0 %v3832
    %4359 = vmatpush2.bf16.msra.mxu0 %v3831
    %4360 = vmatprep.mubr.bf16.mxu0 %v3170
    %4361 = vmatmul.mubr.bf16.gmra.mxu0 %v3169
    %v4362 = vpop.f32.mrf.mxu0
    %v4363 = vadd.f32 %v4250, %v4362
    %v4364 = vpop.f32.mrf.mxu0
    %v4365 = vadd.f32 %v4252, %v4364
    %v4366 = vpop.f32.mrf.mxu0
    %v4367 = vadd.f32 %v4254, %v4366
    %v4368 = vpop.f32.mrf.mxu0
    %v4369 = vadd.f32 %v4256, %v4368
    %4370 = vmatprep.mubr.bf16.mxu0 %v3174
    %4371 = vmatmul.mubr.bf16.gmra.mxu0 %v3173
    %v4372 = vpop.f32.mrf.mxu0
    %v4373 = vadd.f32 %v4260, %v4372
    %v4374 = vpop.f32.mrf.mxu0
    %v4375 = vadd.f32 %v4262, %v4374
    %v4376 = vpop.f32.mrf.mxu0
    %v4377 = vadd.f32 %v4264, %v4376
    %v4378 = vpop.f32.mrf.mxu0
    %v4379 = vadd.f32 %v4266, %v4378
    %4380 = vmatprep.mubr.bf16.mxu0 %v3178
    %4381 = vmatmul.mubr.bf16.gmra.mxu0 %v3177
    %v4382 = vpop.f32.mrf.mxu0
    %v4383 = vadd.f32 %v4270, %v4382
    %v4384 = vpop.f32.mrf.mxu0
    %v4385 = vadd.f32 %v4272, %v4384
    %v4386 = vpop.f32.mrf.mxu0
    %v4387 = vadd.f32 %v4274, %v4386
    %v4388 = vpop.f32.mrf.mxu0
    %v4389 = vadd.f32 %v4276, %v4388
    %4390 = vmatprep.mubr.bf16.mxu0 %v3182
    %4391 = vmatmul.mubr.bf16.gmra.mxu0 %v3181
    %v4392 = vpop.f32.mrf.mxu0
    %v4393 = vadd.f32 %v4280, %v4392
    %v4394 = vpop.f32.mrf.mxu0
    %v4395 = vadd.f32 %v4282, %v4394
    %v4396 = vpop.f32.mrf.mxu0
    %v4397 = vadd.f32 %v4284, %v4396
    %v4398 = vpop.f32.mrf.mxu0
    %v4399 = vadd.f32 %v4286, %v4398
    %4400 = vmatprep.mubr.bf16.mxu0 %v3186
    %4401 = vmatmul.mubr.bf16.gmra.mxu0 %v3185
    %v4402 = vpop.f32.mrf.mxu0
    %v4403 = vadd.f32 %v4290, %v4402
    %v4404 = vpop.f32.mrf.mxu0
    %v4405 = vadd.f32 %v4292, %v4404
    %v4406 = vpop.f32.mrf.mxu0
    %v4407 = vadd.f32 %v4294, %v4406
    %v4408 = vpop.f32.mrf.mxu0
    %v4409 = vadd.f32 %v4296, %v4408
    %4410 = vmatprep.mubr.bf16.mxu0 %v3190
    %4411 = vmatmul.mubr.bf16.gmra.mxu0 %v3189
    %v4412 = vpop.f32.mrf.mxu0
    %v4413 = vadd.f32 %v4300, %v4412
    %v4414 = vpop.f32.mrf.mxu0
    %v4415 = vadd.f32 %v4302, %v4414
    %v4416 = vpop.f32.mrf.mxu0
    %v4417 = vadd.f32 %v4304, %v4416
    %v4418 = vpop.f32.mrf.mxu0
    %v4419 = vadd.f32 %v4306, %v4418
    %4420 = vmatprep.mubr.bf16.mxu0 %v3194
    %4421 = vmatmul.mubr.bf16.gmra.mxu0 %v3193
    %v4422 = vpop.f32.mrf.mxu0
    %v4423 = vadd.f32 %v4310, %v4422
    %v4424 = vpop.f32.mrf.mxu0
    %v4425 = vadd.f32 %v4312, %v4424
    %v4426 = vpop.f32.mrf.mxu0
    %v4427 = vadd.f32 %v4314, %v4426
    %v4428 = vpop.f32.mrf.mxu0
    %v4429 = vadd.f32 %v4316, %v4428
    %4430 = vmatprep.mubr.bf16.mxu0 %v3198
    %4431 = vmatmul.mubr.bf16.gmra.mxu0 %v3197
    %v4432 = vpop.f32.mrf.mxu0
    %v4433 = vadd.f32 %v4320, %v4432
    %v4434 = vpop.f32.mrf.mxu0
    %v4435 = vadd.f32 %v4322, %v4434
    %v4436 = vpop.f32.mrf.mxu0
    %v4437 = vadd.f32 %v4324, %v4436
    %v4438 = vpop.f32.mrf.mxu0
    %v4439 = vadd.f32 %v4326, %v4438
    %4440 = vdwg.mxu0
    %v4441 = vmax.f32 %v4137, 0.0
    %v4442 = vmax.f32 %v4139, 0.0
    %v4443 = vmax.f32 %v4363, 0.0
    %v4444 = vmax.f32 %v4365, 0.0
    %v4445 = vmax.f32 %v4141, 0.0
    %v4446 = vmax.f32 %v4143, 0.0
    %v4447 = vmax.f32 %v4367, 0.0
    %v4448 = vmax.f32 %v4369, 0.0
    %v4449 = vmax.f32 %v4147, 0.0
    %v4450 = vmax.f32 %v4149, 0.0
    %v4451 = vmax.f32 %v4373, 0.0
    %v4452 = vmax.f32 %v4375, 0.0
    %v4453 = vmax.f32 %v4151, 0.0
    %v4454 = vmax.f32 %v4153, 0.0
    %v4455 = vmax.f32 %v4377, 0.0
    %v4456 = vmax.f32 %v4379, 0.0
    %v4457 = vmax.f32 %v4157, 0.0
    %v4458 = vmax.f32 %v4159, 0.0
    %v4459 = vmax.f32 %v4383, 0.0
    %v4460 = vmax.f32 %v4385, 0.0
    %v4461 = vmax.f32 %v4161, 0.0
    %v4462 = vmax.f32 %v4163, 0.0
    %v4463 = vmax.f32 %v4387, 0.0
    %v4464 = vmax.f32 %v4389, 0.0
    %v4465 = vmax.f32 %v4167, 0.0
    %v4466 = vmax.f32 %v4169, 0.0
    %v4467 = vmax.f32 %v4393, 0.0
    %v4468 = vmax.f32 %v4395, 0.0
    %v4469 = vmax.f32 %v4171, 0.0
    %v4470 = vmax.f32 %v4173, 0.0
    %v4471 = vmax.f32 %v4397, 0.0
    %v4472 = vmax.f32 %v4399, 0.0
    %v4473 = vmax.f32 %v4177, 0.0
    %v4474 = vmax.f32 %v4179, 0.0
    %v4475 = vmax.f32 %v4403, 0.0
    %v4476 = vmax.f32 %v4405, 0.0
    %v4477 = vmax.f32 %v4181, 0.0
    %v4478 = vmax.f32 %v4183, 0.0
    %v4479 = vmax.f32 %v4407, 0.0
    %v4480 = vmax.f32 %v4409, 0.0
    %v4481 = vmax.f32 %v4187, 0.0
    %v4482 = vmax.f32 %v4189, 0.0
    %v4483 = vmax.f32 %v4413, 0.0
    %v4484 = vmax.f32 %v4415, 0.0
    %v4485 = vmax.f32 %v4191, 0.0
    %v4486 = vmax.f32 %v4193, 0.0
    %v4487 = vmax.f32 %v4417, 0.0
    %v4488 = vmax.f32 %v4419, 0.0
    %v4489 = vmax.f32 %v4197, 0.0
    %v4490 = vmax.f32 %v4199, 0.0
    %v4491 = vmax.f32 %v4423, 0.0
    %v4492 = vmax.f32 %v4425, 0.0
    %v4493 = vmax.f32 %v4201, 0.0
    %v4494 = vmax.f32 %v4203, 0.0
    %v4495 = vmax.f32 %v4427, 0.0
    %v4496 = vmax.f32 %v4429, 0.0
    %v4497 = vmax.f32 %v4207, 0.0
    %v4498 = vmax.f32 %v4209, 0.0
    %v4499 = vmax.f32 %v4433, 0.0
    %v4500 = vmax.f32 %v4435, 0.0
    %v4501 = vmax.f32 %v4211, 0.0
    %v4502 = vmax.f32 %v4213, 0.0
    %v4503 = vmax.f32 %v4437, 0.0
    %v4504 = vmax.f32 %v4439, 0.0
    %v4505 = vpack.c.bf16 %v4445, %v4441
    %v4506 = vpack.c.bf16 %v4446, %v4442
    %v4507 = vpack.c.bf16 %v4447, %v4443
    %v4508 = vpack.c.bf16 %v4448, %v4444
    %v4509 = vpack.c.bf16 %v4453, %v4449
    %v4510 = vpack.c.bf16 %v4454, %v4450
    %v4511 = vpack.c.bf16 %v4455, %v4451
    %v4512 = vpack.c.bf16 %v4456, %v4452
    %v4513 = vpack.c.bf16 %v4461, %v4457
    %v4514 = vpack.c.bf16 %v4462, %v4458
    %v4515 = vpack.c.bf16 %v4463, %v4459
    %v4516 = vpack.c.bf16 %v4464, %v4460
    %v4517 = vpack.c.bf16 %v4469, %v4465
    %v4518 = vpack.c.bf16 %v4470, %v4466
    %v4519 = vpack.c.bf16 %v4471, %v4467
    %v4520 = vpack.c.bf16 %v4472, %v4468
    %v4521 = vpack.c.bf16 %v4477, %v4473
    %v4522 = vpack.c.bf16 %v4478, %v4474
    %v4523 = vpack.c.bf16 %v4479, %v4475
    %v4524 = vpack.c.bf16 %v4480, %v4476
    %v4525 = vpack.c.bf16 %v4485, %v4481
    %v4526 = vpack.c.bf16 %v4486, %v4482
    %v4527 = vpack.c.bf16 %v4487, %v4483
    %v4528 = vpack.c.bf16 %v4488, %v4484
    %v4529 = vpack.c.bf16 %v4493, %v4489
    %v4530 = vpack.c.bf16 %v4494, %v4490
    %v4531 = vpack.c.bf16 %v4495, %v4491
    %v4532 = vpack.c.bf16 %v4496, %v4492
    %v4533 = vpack.c.bf16 %v4501, %v4497
    %v4534 = vpack.c.bf16 %v4502, %v4498
    %v4535 = vpack.c.bf16 %v4503, %v4499
    %v4536 = vpack.c.bf16 %v4504, %v4500
    %v4537 = vld [vmem:[%s9] sm:$0xf]
    %v4538 = vld [vmem:[%s9 + $0x4] sm:$0xf]
    %v4539 = vld [vmem:[%s9 + $0x8] sm:$0xf]
    %v4540 = vld [vmem:[%s9 + $0xc] sm:$0xf]
    %v4541 = vld [vmem:[%s9 + $0x10] sm:$0xf]
    %v4542 = vld [vmem:[%s9 + $0x14] sm:$0xf]
    %v4543 = vld [vmem:[%s9 + $0x18] sm:$0xf]
    %v4544 = vld [vmem:[%s9 + $0x1c] sm:$0xf]
    %v4545 = vld [vmem:[%s9 + $0x20] sm:$0xf]
    %v4546 = vld [vmem:[%s9 + $0x24] sm:$0xf]
    %v4547 = vld [vmem:[%s9 + $0x28] sm:$0xf]
    %v4548 = vld [vmem:[%s9 + $0x2c] sm:$0xf]
    %v4549 = vld [vmem:[%s9 + $0x30] sm:$0xf]
    %v4550 = vld [vmem:[%s9 + $0x34] sm:$0xf]
    %v4551 = vld [vmem:[%s9 + $0x38] sm:$0xf]
    %v4552 = vld [vmem:[%s9 + $0x3c] sm:$0xf]
    %v4553 = vld [vmem:[%s9 + $0x40] sm:$0xf]
    %v4554 = vld [vmem:[%s9 + $0x44] sm:$0xf]
    %v4555 = vld [vmem:[%s9 + $0x48] sm:$0xf]
    %v4556 = vld [vmem:[%s9 + $0x4c] sm:$0xf]
    %v4557 = vld [vmem:[%s9 + $0x50] sm:$0xf]
    %v4558 = vld [vmem:[%s9 + $0x54] sm:$0xf]
    %v4559 = vld [vmem:[%s9 + $0x58] sm:$0xf]
    %v4560 = vld [vmem:[%s9 + $0x5c] sm:$0xf]
    %v4561 = vld [vmem:[%s9 + $0x60] sm:$0xf]
    %v4562 = vld [vmem:[%s9 + $0x64] sm:$0xf]
    %v4563 = vld [vmem:[%s9 + $0x68] sm:$0xf]
    %v4564 = vld [vmem:[%s9 + $0x6c] sm:$0xf]
    %v4565 = vld [vmem:[%s9 + $0x70] sm:$0xf]
    %v4566 = vld [vmem:[%s9 + $0x74] sm:$0xf]
    %v4567 = vld [vmem:[%s9 + $0x78] sm:$0xf]
    %v4568 = vld [vmem:[%s9 + $0x7c] sm:$0xf]
    %v4569 = vld [vmem:[%s9 + $0x80] sm:$0xf]
    %v4570 = vld [vmem:[%s9 + $0x84] sm:$0xf]
    %v4571 = vld [vmem:[%s9 + $0x88] sm:$0xf]
    %v4572 = vld [vmem:[%s9 + $0x8c] sm:$0xf]
    %v4573 = vld [vmem:[%s9 + $0x90] sm:$0xf]
    %v4574 = vld [vmem:[%s9 + $0x94] sm:$0xf]
    %v4575 = vld [vmem:[%s9 + $0x98] sm:$0xf]
    %v4576 = vld [vmem:[%s9 + $0x9c] sm:$0xf]
    %v4577 = vld [vmem:[%s9 + $0xa0] sm:$0xf]
    %v4578 = vld [vmem:[%s9 + $0xa4] sm:$0xf]
    %v4579 = vld [vmem:[%s9 + $0xa8] sm:$0xf]
    %v4580 = vld [vmem:[%s9 + $0xac] sm:$0xf]
    %v4581 = vld [vmem:[%s9 + $0xb0] sm:$0xf]
    %v4582 = vld [vmem:[%s9 + $0xb4] sm:$0xf]
    %v4583 = vld [vmem:[%s9 + $0xb8] sm:$0xf]
    %v4584 = vld [vmem:[%s9 + $0xbc] sm:$0xf]
    %v4585 = vld [vmem:[%s9 + $0xc0] sm:$0xf]
    %v4586 = vld [vmem:[%s9 + $0xc4] sm:$0xf]
    %v4587 = vld [vmem:[%s9 + $0xc8] sm:$0xf]
    %v4588 = vld [vmem:[%s9 + $0xcc] sm:$0xf]
    %v4589 = vld [vmem:[%s9 + $0xd0] sm:$0xf]
    %v4590 = vld [vmem:[%s9 + $0xd4] sm:$0xf]
    %v4591 = vld [vmem:[%s9 + $0xd8] sm:$0xf]
    %v4592 = vld [vmem:[%s9 + $0xdc] sm:$0xf]
    %v4593 = vld [vmem:[%s9 + $0xe0] sm:$0xf]
    %v4594 = vld [vmem:[%s9 + $0xe4] sm:$0xf]
    %v4595 = vld [vmem:[%s9 + $0xe8] sm:$0xf]
    %v4596 = vld [vmem:[%s9 + $0xec] sm:$0xf]
    %v4597 = vld [vmem:[%s9 + $0xf0] sm:$0xf]
    %v4598 = vld [vmem:[%s9 + $0xf4] sm:$0xf]
    %v4599 = vld [vmem:[%s9 + $0xf8] sm:$0xf]
    %v4600 = vld [vmem:[%s9 + $0xfc] sm:$0xf]
    %v4601 = vld [vmem:[#allocation2] sm:$0x1]
    %v4603 = vlaneseq
    %v4604 = vshrl.u32 %v4603, 7
    %v4605 = vsub.s32 0, %v4604
    %v4606 = vrot.slane %v4601, %v4605
    %v4672 = vunpack.c.l.b16 %v4537
    %v4673 = vunpack.c.l.b16 %v4538
    %v4674 = vunpack.c.l.b16 %v4539
    %v4675 = vunpack.c.l.b16 %v4540
    %v4676 = vunpack.c.l.b16 %v4541
    %v4677 = vunpack.c.l.b16 %v4542
    %v4678 = vunpack.c.l.b16 %v4543
    %v4679 = vunpack.c.l.b16 %v4544
    %v4680 = vunpack.c.l.b16 %v4545
    %v4681 = vunpack.c.l.b16 %v4546
    %v4682 = vunpack.c.l.b16 %v4547
    %v4683 = vunpack.c.l.b16 %v4548
    %v4684 = vunpack.c.l.b16 %v4549
    %v4685 = vunpack.c.l.b16 %v4550
    %v4686 = vunpack.c.l.b16 %v4551
    %v4687 = vunpack.c.l.b16 %v4552
    %v4688 = vunpack.c.l.b16 %v4553
    %v4689 = vunpack.c.l.b16 %v4554
    %v4690 = vunpack.c.l.b16 %v4555
    %v4691 = vunpack.c.l.b16 %v4556
    %v4692 = vunpack.c.l.b16 %v4557
    %v4693 = vunpack.c.l.b16 %v4558
    %v4694 = vunpack.c.l.b16 %v4559
    %v4695 = vunpack.c.l.b16 %v4560
    %v4696 = vunpack.c.l.b16 %v4561
    %v4697 = vunpack.c.l.b16 %v4562
    %v4698 = vunpack.c.l.b16 %v4563
    %v4699 = vunpack.c.l.b16 %v4564
    %v4700 = vunpack.c.l.b16 %v4565
    %v4701 = vunpack.c.l.b16 %v4566
    %v4702 = vunpack.c.l.b16 %v4567
    %v4703 = vunpack.c.l.b16 %v4568
    %v4704 = vunpack.c.l.b16 %v4569
    %v4705 = vunpack.c.l.b16 %v4570
    %v4706 = vunpack.c.l.b16 %v4571
    %v4707 = vunpack.c.l.b16 %v4572
    %v4708 = vunpack.c.l.b16 %v4573
    %v4709 = vunpack.c.l.b16 %v4574
    %v4710 = vunpack.c.l.b16 %v4575
    %v4711 = vunpack.c.l.b16 %v4576
    %v4712 = vunpack.c.l.b16 %v4577
    %v4713 = vunpack.c.l.b16 %v4578
    %v4714 = vunpack.c.l.b16 %v4579
    %v4715 = vunpack.c.l.b16 %v4580
    %v4716 = vunpack.c.l.b16 %v4581
    %v4717 = vunpack.c.l.b16 %v4582
    %v4718 = vunpack.c.l.b16 %v4583
    %v4719 = vunpack.c.l.b16 %v4584
    %v4720 = vunpack.c.l.b16 %v4585
    %v4721 = vunpack.c.l.b16 %v4586
    %v4722 = vunpack.c.l.b16 %v4587
    %v4723 = vunpack.c.l.b16 %v4588
    %v4724 = vunpack.c.l.b16 %v4589
    %v4725 = vunpack.c.l.b16 %v4590
    %v4726 = vunpack.c.l.b16 %v4591
    %v4727 = vunpack.c.l.b16 %v4592
    %v4728 = vunpack.c.l.b16 %v4593
    %v4729 = vunpack.c.l.b16 %v4594
    %v4730 = vunpack.c.l.b16 %v4595
    %v4731 = vunpack.c.l.b16 %v4596
    %v4732 = vunpack.c.l.b16 %v4597
    %v4733 = vunpack.c.l.b16 %v4598
    %v4734 = vunpack.c.l.b16 %v4599
    %v4735 = vunpack.c.l.b16 %v4600
    %v4736 = vpack.c.b16 %v4673, %v4672
    %v4737 = vpack.c.b16 %v4675, %v4674
    %v4738 = vpack.c.b16 %v4677, %v4676
    %v4739 = vpack.c.b16 %v4679, %v4678
    %v4740 = vpack.c.b16 %v4681, %v4680
    %v4741 = vpack.c.b16 %v4683, %v4682
    %v4742 = vpack.c.b16 %v4685, %v4684
    %v4743 = vpack.c.b16 %v4687, %v4686
    %v4744 = vpack.c.b16 %v4689, %v4688
    %v4745 = vpack.c.b16 %v4691, %v4690
    %v4746 = vpack.c.b16 %v4693, %v4692
    %v4747 = vpack.c.b16 %v4695, %v4694
    %v4748 = vpack.c.b16 %v4697, %v4696
    %v4749 = vpack.c.b16 %v4699, %v4698
    %v4750 = vpack.c.b16 %v4701, %v4700
    %v4751 = vpack.c.b16 %v4703, %v4702
    %v4752 = vpack.c.b16 %v4705, %v4704
    %v4753 = vpack.c.b16 %v4707, %v4706
    %v4754 = vpack.c.b16 %v4709, %v4708
    %v4755 = vpack.c.b16 %v4711, %v4710
    %v4756 = vpack.c.b16 %v4713, %v4712
    %v4757 = vpack.c.b16 %v4715, %v4714
    %v4758 = vpack.c.b16 %v4717, %v4716
    %v4759 = vpack.c.b16 %v4719, %v4718
    %v4760 = vpack.c.b16 %v4721, %v4720
    %v4761 = vpack.c.b16 %v4723, %v4722
    %v4762 = vpack.c.b16 %v4725, %v4724
    %v4763 = vpack.c.b16 %v4727, %v4726
    %v4764 = vpack.c.b16 %v4729, %v4728
    %v4765 = vpack.c.b16 %v4731, %v4730
    %v4766 = vpack.c.b16 %v4733, %v4732
    %v4767 = vpack.c.b16 %v4735, %v4734
    %4800 = vmatprep.subr.bf16.mxu0 0
    %4801 = vmatpush1.bf16.msra.mxu0 %v4743
    %4802 = vmatprep.subr.bf16.mxu0 0
    %4803 = vmatpush1.bf16.msra.mxu0 %v4742
    %4804 = vmatprep.subr.bf16.mxu0 0
    %4805 = vmatpush1.bf16.msra.mxu0 %v4741
    %4806 = vmatprep.subr.bf16.mxu0 0
    %4807 = vmatpush1.bf16.msra.mxu0 %v4740
    %4808 = vmatprep.subr.bf16.mxu0 0
    %4809 = vmatpush1.bf16.msra.mxu0 %v4739
    %4810 = vmatprep.subr.bf16.mxu0 0
    %4811 = vmatpush1.bf16.msra.mxu0 %v4738
    %4812 = vmatprep.subr.bf16.mxu0 0
    %4813 = vmatpush1.bf16.msra.mxu0 %v4737
    %4814 = vmatprep.subr.bf16.mxu0 0
    %4815 = vmatpush1.bf16.msra.mxu0 %v4736
    %4816 = vmatprep.subr.bf16.mxu0 0
    %4817 = vmatpush2.bf16.msra.mxu0 %v4751
    %4818 = vmatprep.subr.bf16.mxu0 0
    %4819 = vmatpush2.bf16.msra.mxu0 %v4750
    %4820 = vmatprep.subr.bf16.mxu0 0
    %4821 = vmatpush2.bf16.msra.mxu0 %v4749
    %4822 = vmatprep.subr.bf16.mxu0 0
    %4823 = vmatpush2.bf16.msra.mxu0 %v4748
    %4824 = vmatprep.subr.bf16.mxu0 0
    %4825 = vmatpush2.bf16.msra.mxu0 %v4747
    %4826 = vmatprep.subr.bf16.mxu0 0
    %4827 = vmatpush2.bf16.msra.mxu0 %v4746
    %4828 = vmatprep.subr.bf16.mxu0 0
    %4829 = vmatpush2.bf16.msra.mxu0 %v4745
    %4830 = vmatprep.subr.bf16.mxu0 0
    %4831 = vmatpush2.bf16.msra.mxu0 %v4744
    %4832 = vmatprep.mubr.bf16.mxu0 %v4506
    %4833 = vmatmul.mubr.bf16.gmra.mxu0 %v4505
    %v4834 = vpop.f32.mrf.mxu0
    %v4835 = vadd.f32 %v4606, %v4834
    %v4836 = vpop.f32.mrf.mxu0
    %v4837 = vpop.f32.mrf.mxu0
    %v4838 = vadd.f32 %v4606, %v4837
    %v4839 = vpop.f32.mrf.mxu0
    %4840 = vmatprep.mubr.bf16.mxu0 %v4510
    %4841 = vmatmul.mubr.bf16.gmra.mxu0 %v4509
    %v4842 = vpop.f32.mrf.mxu0
    %v4843 = vadd.f32 %v4606, %v4842
    %v4844 = vpop.f32.mrf.mxu0
    %v4845 = vpop.f32.mrf.mxu0
    %v4846 = vadd.f32 %v4606, %v4845
    %v4847 = vpop.f32.mrf.mxu0
    %4848 = vmatprep.mubr.bf16.mxu0 %v4514
    %4849 = vmatmul.mubr.bf16.gmra.mxu0 %v4513
    %v4850 = vpop.f32.mrf.mxu0
    %v4851 = vadd.f32 %v4606, %v4850
    %v4852 = vpop.f32.mrf.mxu0
    %v4853 = vpop.f32.mrf.mxu0
    %v4854 = vadd.f32 %v4606, %v4853
    %v4855 = vpop.f32.mrf.mxu0
    %4856 = vmatprep.mubr.bf16.mxu0 %v4518
    %4857 = vmatmul.mubr.bf16.gmra.mxu0 %v4517
    %v4858 = vpop.f32.mrf.mxu0
    %v4859 = vadd.f32 %v4606, %v4858
    %v4860 = vpop.f32.mrf.mxu0
    %v4861 = vpop.f32.mrf.mxu0
    %v4862 = vadd.f32 %v4606, %v4861
    %v4863 = vpop.f32.mrf.mxu0
    %4864 = vmatprep.mubr.bf16.mxu0 %v4522
    %4865 = vmatmul.mubr.bf16.gmra.mxu0 %v4521
    %v4866 = vpop.f32.mrf.mxu0
    %v4867 = vadd.f32 %v4606, %v4866
    %v4868 = vpop.f32.mrf.mxu0
    %v4869 = vpop.f32.mrf.mxu0
    %v4870 = vadd.f32 %v4606, %v4869
    %v4871 = vpop.f32.mrf.mxu0
    %4872 = vmatprep.mubr.bf16.mxu0 %v4526
    %4873 = vmatmul.mubr.bf16.gmra.mxu0 %v4525
    %v4874 = vpop.f32.mrf.mxu0
    %v4875 = vadd.f32 %v4606, %v4874
    %v4876 = vpop.f32.mrf.mxu0
    %v4877 = vpop.f32.mrf.mxu0
    %v4878 = vadd.f32 %v4606, %v4877
    %v4879 = vpop.f32.mrf.mxu0
    %4880 = vmatprep.mubr.bf16.mxu0 %v4530
    %4881 = vmatmul.mubr.bf16.gmra.mxu0 %v4529
    %v4882 = vpop.f32.mrf.mxu0
    %v4883 = vadd.f32 %v4606, %v4882
    %v4884 = vpop.f32.mrf.mxu0
    %v4885 = vpop.f32.mrf.mxu0
    %v4886 = vadd.f32 %v4606, %v4885
    %v4887 = vpop.f32.mrf.mxu0
    %4888 = vmatprep.mubr.bf16.mxu0 %v4534
    %4889 = vmatmul.mubr.bf16.gmra.mxu0 %v4533
    %v4890 = vpop.f32.mrf.mxu0
    %v4891 = vadd.f32 %v4606, %v4890
    %v4892 = vpop.f32.mrf.mxu0
    %v4893 = vpop.f32.mrf.mxu0
    %v4894 = vadd.f32 %v4606, %v4893
    %v4895 = vpop.f32.mrf.mxu0
    %4896 = vdwg.mxu0
    %4897 = vmatprep.subr.bf16.mxu0 0
    %4898 = vmatpush1.bf16.msra.mxu0 %v4759
    %4899 = vmatprep.subr.bf16.mxu0 0
    %4900 = vmatpush1.bf16.msra.mxu0 %v4758
    %4901 = vmatprep.subr.bf16.mxu0 0
    %4902 = vmatpush1.bf16.msra.mxu0 %v4757
    %4903 = vmatprep.subr.bf16.mxu0 0
    %4904 = vmatpush1.bf16.msra.mxu0 %v4756
    %4905 = vmatprep.subr.bf16.mxu0 0
    %4906 = vmatpush1.bf16.msra.mxu0 %v4755
    %4907 = vmatprep.subr.bf16.mxu0 0
    %4908 = vmatpush1.bf16.msra.mxu0 %v4754
    %4909 = vmatprep.subr.bf16.mxu0 0
    %4910 = vmatpush1.bf16.msra.mxu0 %v4753
    %4911 = vmatprep.subr.bf16.mxu0 0
    %4912 = vmatpush1.bf16.msra.mxu0 %v4752
    %4913 = vmatprep.subr.bf16.mxu0 0
    %4914 = vmatpush2.bf16.msra.mxu0 %v4767
    %4915 = vmatprep.subr.bf16.mxu0 0
    %4916 = vmatpush2.bf16.msra.mxu0 %v4766
    %4917 = vmatprep.subr.bf16.mxu0 0
    %4918 = vmatpush2.bf16.msra.mxu0 %v4765
    %4919 = vmatprep.subr.bf16.mxu0 0
    %4920 = vmatpush2.bf16.msra.mxu0 %v4764
    %4921 = vmatprep.subr.bf16.mxu0 0
    %4922 = vmatpush2.bf16.msra.mxu0 %v4763
    %4923 = vmatprep.subr.bf16.mxu0 0
    %4924 = vmatpush2.bf16.msra.mxu0 %v4762
    %4925 = vmatprep.subr.bf16.mxu0 0
    %4926 = vmatpush2.bf16.msra.mxu0 %v4761
    %4927 = vmatprep.subr.bf16.mxu0 0
    %4928 = vmatpush2.bf16.msra.mxu0 %v4760
    %4929 = vmatprep.mubr.bf16.mxu0 %v4508
    %4930 = vmatmul.mubr.bf16.gmra.mxu0 %v4507
    %v4931 = vpop.f32.mrf.mxu0
    %v4932 = vadd.f32 %v4835, %v4931
    %v4933 = vpop.f32.mrf.mxu0
    %v4934 = vpop.f32.mrf.mxu0
    %v4935 = vadd.f32 %v4838, %v4934
    %v4936 = vpop.f32.mrf.mxu0
    %4937 = vmatprep.mubr.bf16.mxu0 %v4512
    %4938 = vmatmul.mubr.bf16.gmra.mxu0 %v4511
    %v4939 = vpop.f32.mrf.mxu0
    %v4940 = vadd.f32 %v4843, %v4939
    %v4941 = vpop.f32.mrf.mxu0
    %v4942 = vpop.f32.mrf.mxu0
    %v4943 = vadd.f32 %v4846, %v4942
    %v4944 = vpop.f32.mrf.mxu0
    %4945 = vmatprep.mubr.bf16.mxu0 %v4516
    %4946 = vmatmul.mubr.bf16.gmra.mxu0 %v4515
    %v4947 = vpop.f32.mrf.mxu0
    %v4948 = vadd.f32 %v4851, %v4947
    %v4949 = vpop.f32.mrf.mxu0
    %v4950 = vpop.f32.mrf.mxu0
    %v4951 = vadd.f32 %v4854, %v4950
    %v4952 = vpop.f32.mrf.mxu0
    %4953 = vmatprep.mubr.bf16.mxu0 %v4520
    %4954 = vmatmul.mubr.bf16.gmra.mxu0 %v4519
    %v4955 = vpop.f32.mrf.mxu0
    %v4956 = vadd.f32 %v4859, %v4955
    %v4957 = vpop.f32.mrf.mxu0
    %v4958 = vpop.f32.mrf.mxu0
    %v4959 = vadd.f32 %v4862, %v4958
    %v4960 = vpop.f32.mrf.mxu0
    %4961 = vmatprep.mubr.bf16.mxu0 %v4524
    %4962 = vmatmul.mubr.bf16.gmra.mxu0 %v4523
    %v4963 = vpop.f32.mrf.mxu0
    %v4964 = vadd.f32 %v4867, %v4963
    %v4965 = vpop.f32.mrf.mxu0
    %v4966 = vpop.f32.mrf.mxu0
    %v4967 = vadd.f32 %v4870, %v4966
    %v4968 = vpop.f32.mrf.mxu0
    %4969 = vmatprep.mubr.bf16.mxu0 %v4528
    %4970 = vmatmul.mubr.bf16.gmra.mxu0 %v4527
    %v4971 = vpop.f32.mrf.mxu0
    %v4972 = vadd.f32 %v4875, %v4971
    %v4973 = vpop.f32.mrf.mxu0
    %v4974 = vpop.f32.mrf.mxu0
    %v4975 = vadd.f32 %v4878, %v4974
    %v4976 = vpop.f32.mrf.mxu0
    %4977 = vmatprep.mubr.bf16.mxu0 %v4532
    %4978 = vmatmul.mubr.bf16.gmra.mxu0 %v4531
    %v4979 = vpop.f32.mrf.mxu0
    %v4980 = vadd.f32 %v4883, %v4979
    %v4981 = vpop.f32.mrf.mxu0
    %v4982 = vpop.f32.mrf.mxu0
    %v4983 = vadd.f32 %v4886, %v4982
    %v4984 = vpop.f32.mrf.mxu0
    %4985 = vmatprep.mubr.bf16.mxu0 %v4536
    %4986 = vmatmul.mubr.bf16.gmra.mxu0 %v4535
    %v4987 = vpop.f32.mrf.mxu0
    %v4988 = vadd.f32 %v4891, %v4987
    %v4989 = vpop.f32.mrf.mxu0
    %v4990 = vpop.f32.mrf.mxu0
    %v4991 = vadd.f32 %v4894, %v4990
    %v4992 = vpop.f32.mrf.mxu0
    %4993 = vdwg.mxu0
    %v4994 = vsub.f32 0.0, %v4932
    %v4995 = vsub.f32 0.0, %v4935
    %v4996 = vsub.f32 0.0, %v4940
    %v4997 = vsub.f32 0.0, %v4943
    %v4998 = vsub.f32 0.0, %v4948
    %v4999 = vsub.f32 0.0, %v4951
    %v5000 = vsub.f32 0.0, %v4956
    %v5001 = vsub.f32 0.0, %v4959
    %v5002 = vsub.f32 0.0, %v4964
    %v5003 = vsub.f32 0.0, %v4967
    %v5004 = vsub.f32 0.0, %v4972
    %v5005 = vsub.f32 0.0, %v4975
    %v5006 = vsub.f32 0.0, %v4980
    %v5007 = vsub.f32 0.0, %v4983
    %v5008 = vsub.f32 0.0, %v4988
    %v5009 = vsub.f32 0.0, %v4991
    %v5010 = vmul.f32 %v4994, 1.442695
    %v5011 = vpow.pop %v5010
    %v5012 = vmul.f32 %v4995, 1.442695
    %v5013 = vpow.pop %v5012
    %v5014 = vmul.f32 %v4996, 1.442695
    %v5015 = vpow.pop %v5014
    %v5016 = vmul.f32 %v4997, 1.442695
    %v5017 = vpow.pop %v5016
    %v5018 = vmul.f32 %v4998, 1.442695
    %v5019 = vpow.pop %v5018
    %v5020 = vmul.f32 %v4999, 1.442695
    %v5021 = vpow.pop %v5020
    %v5022 = vmul.f32 %v5000, 1.442695
    %v5023 = vpow.pop %v5022
    %v5024 = vmul.f32 %v5001, 1.442695
    %v5025 = vpow.pop %v5024
    %v5026 = vmul.f32 %v5002, 1.442695
    %v5027 = vpow.pop %v5026
    %v5028 = vmul.f32 %v5003, 1.442695
    %v5029 = vpow.pop %v5028
    %v5030 = vmul.f32 %v5004, 1.442695
    %v5031 = vpow.pop %v5030
    %v5032 = vmul.f32 %v5005, 1.442695
    %v5033 = vpow.pop %v5032
    %v5034 = vmul.f32 %v5006, 1.442695
    %v5035 = vpow.pop %v5034
    %v5036 = vmul.f32 %v5007, 1.442695
    %v5037 = vpow.pop %v5036
    %v5038 = vmul.f32 %v5008, 1.442695
    %v5039 = vpow.pop %v5038
    %v5040 = vmul.f32 %v5009, 1.442695
    %v5041 = vpow.pop %v5040
    %v5042 = vadd.f32 %v5011, 1.0
    %v5043 = vadd.f32 %v5013, 1.0
    %v5044 = vadd.f32 %v5015, 1.0
    %v5045 = vadd.f32 %v5017, 1.0
    %v5046 = vadd.f32 %v5019, 1.0
    %v5047 = vadd.f32 %v5021, 1.0
    %v5048 = vadd.f32 %v5023, 1.0
    %v5049 = vadd.f32 %v5025, 1.0
    %v5050 = vadd.f32 %v5027, 1.0
    %v5051 = vadd.f32 %v5029, 1.0
    %v5052 = vadd.f32 %v5031, 1.0
    %v5053 = vadd.f32 %v5033, 1.0
    %v5054 = vadd.f32 %v5035, 1.0
    %v5055 = vadd.f32 %v5037, 1.0
    %v5056 = vadd.f32 %v5039, 1.0
    %v5057 = vadd.f32 %v5041, 1.0
    %v5058 = vrcp.pop %v5042
    %v5059 = vmul.f32 1.0, %v5058
    %v5060 = vrcp.pop %v5043
    %v5061 = vmul.f32 1.0, %v5060
    %v5062 = vrcp.pop %v5044
    %v5063 = vmul.f32 1.0, %v5062
    %v5064 = vrcp.pop %v5045
    %v5065 = vmul.f32 1.0, %v5064
    %v5066 = vrcp.pop %v5046
    %v5067 = vmul.f32 1.0, %v5066
    %v5068 = vrcp.pop %v5047
    %v5069 = vmul.f32 1.0, %v5068
    %v5070 = vrcp.pop %v5048
    %v5071 = vmul.f32 1.0, %v5070
    %v5072 = vrcp.pop %v5049
    %v5073 = vmul.f32 1.0, %v5072
    %v5074 = vrcp.pop %v5050
    %v5075 = vmul.f32 1.0, %v5074
    %v5076 = vrcp.pop %v5051
    %v5077 = vmul.f32 1.0, %v5076
    %v5078 = vrcp.pop %v5052
    %v5079 = vmul.f32 1.0, %v5078
    %v5080 = vrcp.pop %v5053
    %v5081 = vmul.f32 1.0, %v5080
    %v5082 = vrcp.pop %v5054
    %v5083 = vmul.f32 1.0, %v5082
    %v5084 = vrcp.pop %v5055
    %v5085 = vmul.f32 1.0, %v5084
    %v5086 = vrcp.pop %v5056
    %v5087 = vmul.f32 1.0, %v5086
    %v5088 = vrcp.pop %v5057
    %v5089 = vmul.f32 1.0, %v5088
    %vm5090 = vcmask 7168
    %5091 = vst.msk [vmem:[%s11] sm:$0xff] %vm5090, %v5059
    %5092 = vst.msk [vmem:[%s11 + $0x8] sm:$0xff] %vm5090, %v5061
    %5093 = vst.msk [vmem:[%s11 + $0x10] sm:$0xff] %vm5090, %v5063
    %5094 = vst.msk [vmem:[%s11 + $0x18] sm:$0xff] %vm5090, %v5065
    %5095 = vst.msk [vmem:[%s11 + $0x20] sm:$0xff] %vm5090, %v5067
    %5096 = vst.msk [vmem:[%s11 + $0x28] sm:$0xff] %vm5090, %v5069
    %5097 = vst.msk [vmem:[%s11 + $0x30] sm:$0xff] %vm5090, %v5071
    %5098 = vst.msk [vmem:[%s11 + $0x38] sm:$0xff] %vm5090, %v5073
    %5099 = vst.msk [vmem:[%s11 + $0x40] sm:$0xff] %vm5090, %v5075
    %5100 = vst.msk [vmem:[%s11 + $0x48] sm:$0xff] %vm5090, %v5077
    %5101 = vst.msk [vmem:[%s11 + $0x50] sm:$0xff] %vm5090, %v5079
    %5102 = vst.msk [vmem:[%s11 + $0x58] sm:$0xff] %vm5090, %v5081
    %5103 = vst.msk [vmem:[%s11 + $0x60] sm:$0xff] %vm5090, %v5083
    %5104 = vst.msk [vmem:[%s11 + $0x68] sm:$0xff] %vm5090, %v5085
    %5105 = vst.msk [vmem:[%s11 + $0x70] sm:$0xff] %vm5090, %v5087
    %5106 = vst.msk [vmem:[%s11 + $0x78] sm:$0xff] %vm5090, %v5089
    // Predicated region
    $region58: #{tpu_custom_call.1} parent=1 // pred_check
      _
    $region59: #{tpu_custom_call.1} parent=1 // pred_check_branch
      %5108 = sbr.rel (0) target = $region61
    $region60: #{tpu_custom_call.1} parent=1 // pred_region
      _
    $region61: #{tpu_custom_call.1} parent=1 // pred_fallthru
      _
    // Predicated region
    $region62: #{tpu_custom_call.1} parent=1 // pred_check
      _
    $region63: #{tpu_custom_call.1} parent=1 // pred_check_branch
      %5110 = sbr.rel (0) target = $region65
    $region64: #{tpu_custom_call.1} parent=1 // pred_region
      _
    $region65: #{tpu_custom_call.1} parent=1 // pred_fallthru
      _
    %5111 = vsyncpa [#allocation4], 1
    %5112 = vsyncpa [#allocation6], 1

</llo_original>
